<compile_context>
chip_gen: v7x
topology: tpu7x:2x2x1
jax: 0.10.0
libtpu: 0.0.40
codegen_flags: <defaults>
</compile_context>

<pallas_src>
import functools

import jax
import jax.numpy as jnp
from jax.experimental import pallas as pl
from jax.experimental.pallas import tpu as pltpu

INPUT_SIZE = 100
K_PAD = 128            # padded input feature dim (lane/MXU aligned)
HID1, HID2, HID3 = 256, 512, 1024
OUT_SIZE = 28 * 28     # 784
OUT_PAD = 896          # 7 * 128, lane-dense output stores
BN_EPS = 1e-5
LRELU_SLOPE = 0.2

# Packed small-parameter layout: one [P_ROWS, P_COLS] f32 array, one DMA.
P_ROWS, P_COLS = 16, 1024
ROW_B1, ROW_G1, ROW_BE1 = 0, 1, 2
ROW_B2, ROW_G2, ROW_BE2 = 3, 4, 5
ROW_B3, ROW_G3, ROW_BE3 = 6, 7, 8
ROW_B4 = 9


def _leaky_relu(x):
    return jnp.where(x >= 0, x, LRELU_SLOPE * x)


def generator_kernel(
    x_ref,        # [B_pad, K_PAD]   f32   VMEM (auto-DMA)
    w1_ref,       # [K_PAD, HID1]    bf16  VMEM (auto-DMA, needed first, 64 KiB)
    p_ref,        # [P_ROWS, P_COLS] f32   VMEM (packed biases / BN params)
    w2_hbm,       # [HID1, HID2]     bf16  HBM (pl.ANY, manual DMA)
    w3_hbm,       # [HID2, HID3]     bf16  HBM (pl.ANY, manual DMA)
    w4_hbm,       # [HID3, OUT_PAD]  bf16  HBM (pl.ANY, manual DMA)
    out_ref,      # [B_pad, OUT_PAD] f32   VMEM
    w2_buf, w3_buf, w4_buf,   # VMEM scratch (bf16)
    sem,          # DMA semaphores (3,)
    *,
    n_valid,
):
    # Kick off the large-weight DMAs immediately so they overlap with the
    # earlier layers' compute; wait on each only right before it is needed.
    cp2 = pltpu.make_async_copy(w2_hbm, w2_buf, sem.at[0])
    cp3 = pltpu.make_async_copy(w3_hbm, w3_buf, sem.at[1])
    cp4 = pltpu.make_async_copy(w4_hbm, w4_buf, sem.at[2])
    cp2.start()
    cp3.start()
    cp4.start()

    b_pad = x_ref.shape[0]
    # Row-validity mask: padded batch rows must not pollute BN statistics.
    row_ids = jax.lax.broadcasted_iota(jnp.int32, (b_pad, 1), 0)
    valid = (row_ids < n_valid).astype(jnp.float32)
    inv_n = 1.0 / float(n_valid)

    def linear(h_f32, w_bf16, bias):
        # bf16 x bf16 on the MXU, f32 accumulation; no full-matrix up-cast.
        acc = jnp.dot(h_f32.astype(jnp.bfloat16), w_bf16,
                      preferred_element_type=jnp.float32)
        return acc + bias

    def batchnorm(h, gamma, beta):
        # Training-mode BatchNorm1d over the *valid* rows (biased variance).
        mean = jnp.sum(h * valid, axis=0, keepdims=True) * inv_n
        diff = h - mean
        var = jnp.sum(diff * diff * valid, axis=0, keepdims=True) * inv_n
        inv = jax.lax.rsqrt(var + BN_EPS)
        return diff * inv * gamma + beta

    x = x_ref[...]

    # Layer 1 (w1 already resident via auto-DMA prologue).
    h = linear(x, w1_ref[...], p_ref[ROW_B1:ROW_B1 + 1, :HID1])
    h = batchnorm(_leaky_relu(h),
                  p_ref[ROW_G1:ROW_G1 + 1, :HID1],
                  p_ref[ROW_BE1:ROW_BE1 + 1, :HID1])

    # Layer 2.
    cp2.wait()
    h = linear(h, w2_buf[...], p_ref[ROW_B2:ROW_B2 + 1, :HID2])
    h = batchnorm(_leaky_relu(h),
                  p_ref[ROW_G2:ROW_G2 + 1, :HID2],
                  p_ref[ROW_BE2:ROW_BE2 + 1, :HID2])

    # Layer 3.
    cp3.wait()
    h = linear(h, w3_buf[...], p_ref[ROW_B3:ROW_B3 + 1, :HID3])
    h = batchnorm(_leaky_relu(h),
                  p_ref[ROW_G3:ROW_G3 + 1, :HID3],
                  p_ref[ROW_BE3:ROW_BE3 + 1, :HID3])

    # Layer 4 + tanh (lane-dense 896-wide store; wrapper slices back to 784).
    cp4.wait()
    out_ref[...] = jnp.tanh(
        linear(h, w4_buf[...], p_ref[ROW_B4:ROW_B4 + 1, :OUT_PAD]))


@jax.jit
def generator_forward(x, params):
    """x: [B, 100] (or anything reshapeable to [-1, 100]) -> [B, 28, 28]."""
    x = x.reshape(-1, INPUT_SIZE).astype(jnp.float32)
    B = x.shape[0]
    B_pad = max(8, -(-B // 8) * 8)  # pad batch to f32 sublane multiple

    # Zero-pad batch rows and feature columns (100 -> 128); zero columns pair
    # with zero-padded rows of w1 so results are unchanged.
    x_p = jnp.zeros((B_pad, K_PAD), jnp.float32).at[:B, :INPUT_SIZE].set(x)

    flat_args = (x_p, params["w1"], params["packed"],
                 params["w2"], params["w3"], params["w4"])

    k_sum = K_PAD * HID1 + HID1 * HID2 + HID2 * HID3 + HID3 * OUT_PAD
    weight_bytes = 2 * k_sum                                   # bf16 weights
    io_bytes = B_pad * (K_PAD + OUT_PAD) * 4 + P_ROWS * P_COLS * 4
    cost = pl.CostEstimate(
        flops=2 * B_pad * k_sum,
        transcendentals=B_pad * OUT_PAD,        # tanh (rsqrt negligible)
        bytes_accessed=weight_bytes + io_bytes,
    )

    vmem = pl.BlockSpec(memory_space=pltpu.MemorySpace.VMEM)
    hbm = pl.BlockSpec(memory_space=pl.ANY)

    out = pl.pallas_call(
        functools.partial(generator_kernel, n_valid=B),
        out_shape=jax.ShapeDtypeStruct((B_pad, OUT_PAD), jnp.float32),
        in_specs=[vmem, vmem, vmem, hbm, hbm, hbm],
        out_specs=vmem,
        scratch_shapes=[
            pltpu.VMEM((HID1, HID2), jnp.bfloat16),
            pltpu.VMEM((HID2, HID3), jnp.bfloat16),
            pltpu.VMEM((HID3, OUT_PAD), jnp.bfloat16),
            pltpu.SemaphoreType.DMA((3,)),
        ],
        compiler_params=pltpu.CompilerParams(vmem_limit_bytes=16 << 20),
        cost_estimate=cost,
    )(*flat_args)

    return out[:B, :OUT_SIZE].reshape(-1, 28, 28)


def init_params(key):
    """Mimics PyTorch nn.Linear default init (uniform +/- 1/sqrt(fan_in)).

    Weights stored transposed as [in, out] in bf16; w1 row-padded 100->128 and
    w4 column-padded 784->896 with zeros.  All biases and BatchNorm affine
    params (gamma=1, beta=0 per PyTorch default) are packed into a single
    [16, 1024] f32 array so the kernel issues one small-param DMA.
    """
    dims = [(INPUT_SIZE, HID1), (HID1, HID2), (HID2, HID3), (HID3, OUT_SIZE)]
    keys = jax.random.split(key, 2 * len(dims))
    raw_w, raw_b = [], []
    for idx, (fan_in, fan_out) in enumerate(dims):
        bound = 1.0 / (fan_in ** 0.5)
        raw_w.append(jax.random.uniform(keys[2 * idx], (fan_in, fan_out),
                                        jnp.float32, -bound, bound))
        raw_b.append(jax.random.uniform(keys[2 * idx + 1], (fan_out,),
                                        jnp.float32, -bound, bound))

    params = {}
    w1 = jnp.zeros((K_PAD, HID1), jnp.float32).at[:INPUT_SIZE, :].set(raw_w[0])
    w4 = jnp.zeros((HID3, OUT_PAD), jnp.float32).at[:, :OUT_SIZE].set(raw_w[3])
    params["w1"] = w1.astype(jnp.bfloat16)
    params["w2"] = raw_w[1].astype(jnp.bfloat16)
    params["w3"] = raw_w[2].astype(jnp.bfloat16)
    params["w4"] = w4.astype(jnp.bfloat16)

    packed = jnp.zeros((P_ROWS, P_COLS), jnp.float32)
    packed = packed.at[ROW_B1, :HID1].set(raw_b[0])
    packed = packed.at[ROW_B2, :HID2].set(raw_b[1])
    packed = packed.at[ROW_B3, :HID3].set(raw_b[2])
    packed = packed.at[ROW_B4, :OUT_SIZE].set(raw_b[3])
    packed = packed.at[ROW_G1, :HID1].set(1.0)
    packed = packed.at[ROW_G2, :HID2].set(1.0)
    packed = packed.at[ROW_G3, :HID3].set(1.0)
    # beta rows (ROW_BE*) stay zero — PyTorch BatchNorm default init.
    params["packed"] = packed
    return params


def _reference_forward(x, params):
    """Pure-JAX reference using the same bf16 weights / bf16 matmul inputs."""
    x = x.reshape(-1, INPUT_SIZE).astype(jnp.float32)
    p = params["packed"]
    w1 = params["w1"][:INPUT_SIZE, :]
    w2, w3 = params["w2"], params["w3"]
    w4 = params["w4"][:, :OUT_SIZE]
    b1, g1, be1 = p[ROW_B1, :HID1], p[ROW_G1, :HID1], p[ROW_BE1, :HID1]
    b2, g2, be2 = p[ROW_B2, :HID2], p[ROW_G2, :HID2], p[ROW_BE2, :HID2]
    b3, g3, be3 = p[ROW_B3, :HID3], p[ROW_G3, :HID3], p[ROW_BE3, :HID3]
    b4 = p[ROW_B4, :OUT_SIZE]

    def lin(h, w, b):
        return jnp.dot(h.astype(jnp.bfloat16), w,
                       preferred_element_type=jnp.float32) + b

    def bn(h, g, be):
        m = jnp.mean(h, axis=0, keepdims=True)
        v = jnp.mean((h - m) ** 2, axis=0, keepdims=True)
        return (h - m) * jax.lax.rsqrt(v + BN_EPS) * g + be

    h = bn(_leaky_relu(lin(x, w1, b1)), g1, be1)
    h = bn(_leaky_relu(lin(h, w2, b2)), g2, be2)
    h = bn(_leaky_relu(lin(h, w3, b3)), g3, be3)
    return jnp.tanh(lin(h, w4, b4)).reshape(-1, 28, 28)


if __name__ == "__main__":
    key = jax.random.PRNGKey(0)
    pkey, xkey = jax.random.split(key)
    params = init_params(pkey)

    batch = 4  # matches Generator(batch_size=4) default
    x = jax.random.normal(xkey, (batch, INPUT_SIZE), jnp.float32)

    out = generator_forward(x, params)
    out = jax.block_until_ready(out)

    assert out.shape == (batch, 28, 28), out.shape

    ref = jax.block_until_ready(_reference_forward(x, params))
    assert jnp.allclose(out, ref, atol=2e-3, rtol=2e-3), "mismatch vs JAX reference"

    print("KERNEL_OK")
</pallas_src>

<mosaic_0001>
module attributes {stable_mosaic.version = 11 : i64} {
  func.func @generator_kernel(%arg0: memref<8x128xf32, #tpu.memory_space<vmem>>, %arg1: memref<128x256xbf16, #tpu.memory_space<vmem>>, %arg2: memref<16x1024xf32, #tpu.memory_space<vmem>>, %arg3: memref<256x512xbf16, #tpu.memory_space<any>>, %arg4: memref<512x1024xbf16, #tpu.memory_space<any>>, %arg5: memref<1024x896xbf16, #tpu.memory_space<any>>, %arg6: memref<8x896xf32, #tpu.memory_space<vmem>>, %arg7: memref<256x512xbf16, #tpu.memory_space<vmem>>, %arg8: memref<512x1024xbf16, #tpu.memory_space<vmem>>, %arg9: memref<1024x896xbf16, #tpu.memory_space<vmem>>, %arg10: memref<3x!tpu.dma_semaphore, #tpu.memory_space<semaphore_mem>>) attributes {dimension_semantics = [], scalar_prefetch = 0 : i64, scratch_operands = 4 : i64, tpu.core_type = #tpu.core_type<tc>} {
    %c0_i32 = arith.constant 0 : i32
    %0 = tpu.memref_slice %arg10[%c0_i32] : memref<3x!tpu.dma_semaphore, #tpu.memory_space<semaphore_mem>> -> memref<1x!tpu.dma_semaphore, #tpu.memory_space<semaphore_mem>>
    %1 = tpu.memref_squeeze %0 : memref<1x!tpu.dma_semaphore, #tpu.memory_space<semaphore_mem>> -> memref<!tpu.dma_semaphore, #tpu.memory_space<semaphore_mem>>
    tpu.enqueue_dma source(%arg3 : memref<256x512xbf16, #tpu.memory_space<any>>) target(%arg7 : memref<256x512xbf16, #tpu.memory_space<vmem>>) target_semaphore(%1 : memref<!tpu.dma_semaphore, #tpu.memory_space<semaphore_mem>>)
    %c1_i32 = arith.constant 1 : i32
    %2 = tpu.memref_slice %arg10[%c1_i32] : memref<3x!tpu.dma_semaphore, #tpu.memory_space<semaphore_mem>> -> memref<1x!tpu.dma_semaphore, #tpu.memory_space<semaphore_mem>>
    %3 = tpu.memref_squeeze %2 : memref<1x!tpu.dma_semaphore, #tpu.memory_space<semaphore_mem>> -> memref<!tpu.dma_semaphore, #tpu.memory_space<semaphore_mem>>
    tpu.enqueue_dma source(%arg4 : memref<512x1024xbf16, #tpu.memory_space<any>>) target(%arg8 : memref<512x1024xbf16, #tpu.memory_space<vmem>>) target_semaphore(%3 : memref<!tpu.dma_semaphore, #tpu.memory_space<semaphore_mem>>)
    %c2_i32 = arith.constant 2 : i32
    %4 = tpu.memref_slice %arg10[%c2_i32] : memref<3x!tpu.dma_semaphore, #tpu.memory_space<semaphore_mem>> -> memref<1x!tpu.dma_semaphore, #tpu.memory_space<semaphore_mem>>
    %5 = tpu.memref_squeeze %4 : memref<1x!tpu.dma_semaphore, #tpu.memory_space<semaphore_mem>> -> memref<!tpu.dma_semaphore, #tpu.memory_space<semaphore_mem>>
    tpu.enqueue_dma source(%arg5 : memref<1024x896xbf16, #tpu.memory_space<any>>) target(%arg9 : memref<1024x896xbf16, #tpu.memory_space<vmem>>) target_semaphore(%5 : memref<!tpu.dma_semaphore, #tpu.memory_space<semaphore_mem>>)
    %6 = tpu.iota {dimensions = array<i32: 0>} : vector<8x1xi32>
    %c4_i32 = arith.constant 4 : i32
    %7 = vector.broadcast %c4_i32 : i32 to vector<8x1xi32>
    %8 = arith.cmpi slt, %6, %7 : vector<8x1xi32>
    %9 = arith.extui %8 : vector<8x1xi1> to vector<8x1xi32>
    %10 = arith.sitofp %9 : vector<8x1xi32> to vector<8x1xf32>
    %c0 = arith.constant 0 : index
    %c0_0 = arith.constant 0 : index
    %11 = vector.load %arg0[%c0, %c0_0] : memref<8x128xf32, #tpu.memory_space<vmem>>, vector<8x128xf32>
    %c0_1 = arith.constant 0 : index
    %c0_2 = arith.constant 0 : index
    %12 = vector.load %arg1[%c0_1, %c0_2] : memref<128x256xbf16, #tpu.memory_space<vmem>>, vector<128x256xbf16>
    %c0_3 = arith.constant 0 : index
    %c0_4 = arith.constant 0 : index
    %13 = vector.load %arg2[%c0_3, %c0_4] : memref<16x1024xf32, #tpu.memory_space<vmem>>, vector<1x256xf32>
    %14 = arith.truncf %11 : vector<8x128xf32> to vector<8x128xbf16>
    %cst = arith.constant dense<0.000000e+00> : vector<8x256xf32>
    %15 = tpu.matmul %14, %12, %cst {dimension_numbers = #tpu.dot_dimension_numbers<[1], [0], [0], [1], [0, 0, 1, 1], [], []>} : vector<8x128xbf16>, vector<128x256xbf16>, vector<8x256xf32> -> vector<8x256xf32>
    %16 = vector.broadcast %13 : vector<1x256xf32> to vector<8x256xf32>
    %17 = arith.addf %15, %16 : vector<8x256xf32>
    %cst_5 = arith.constant 0.000000e+00 : f32
    %18 = vector.broadcast %cst_5 : f32 to vector<8x256xf32>
    %19 = arith.cmpf oge, %17, %18 : vector<8x256xf32>
    %cst_6 = arith.constant 2.000000e-01 : f32
    %20 = vector.broadcast %cst_6 : f32 to vector<8x256xf32>
    %21 = arith.mulf %20, %17 : vector<8x256xf32>
    %22 = arith.select %19, %17, %21 : vector<8x256xi1>, vector<8x256xf32>
    %c1 = arith.constant 1 : index
    %c0_7 = arith.constant 0 : index
    %23 = vector.load %arg2[%c1, %c0_7] : memref<16x1024xf32, #tpu.memory_space<vmem>>, vector<1x256xf32>
    %c2 = arith.constant 2 : index
    %c0_8 = arith.constant 0 : index
    %24 = vector.load %arg2[%c2, %c0_8] : memref<16x1024xf32, #tpu.memory_space<vmem>>, vector<1x256xf32>
    %25 = vector.broadcast %10 : vector<8x1xf32> to vector<8x256xf32>
    %26 = arith.mulf %22, %25 : vector<8x256xf32>
    %cst_9 = arith.constant dense<0.000000e+00> : vector<256xf32>
    %27 = vector.multi_reduction <add>, %26, %cst_9 [0] : vector<8x256xf32> to vector<256xf32>
    %28 = vector.shape_cast %27 : vector<256xf32> to vector<1x256xf32>
    %cst_10 = arith.constant 2.500000e-01 : f32
    %29 = vector.broadcast %cst_10 : f32 to vector<1x256xf32>
    %30 = arith.mulf %28, %29 : vector<1x256xf32>
    %31 = vector.broadcast %30 : vector<1x256xf32> to vector<8x256xf32>
    %32 = arith.subf %22, %31 : vector<8x256xf32>
    %33 = arith.mulf %32, %32 : vector<8x256xf32>
    %34 = vector.broadcast %10 : vector<8x1xf32> to vector<8x256xf32>
    %35 = arith.mulf %33, %34 : vector<8x256xf32>
    %cst_11 = arith.constant dense<0.000000e+00> : vector<256xf32>
    %36 = vector.multi_reduction <add>, %35, %cst_11 [0] : vector<8x256xf32> to vector<256xf32>
    %37 = vector.shape_cast %36 : vector<256xf32> to vector<1x256xf32>
    %cst_12 = arith.constant 2.500000e-01 : f32
    %38 = vector.broadcast %cst_12 : f32 to vector<1x256xf32>
    %39 = arith.mulf %37, %38 : vector<1x256xf32>
    %cst_13 = arith.constant 9.99999974E-6 : f32
    %40 = vector.broadcast %cst_13 : f32 to vector<1x256xf32>
    %41 = arith.addf %39, %40 : vector<1x256xf32>
    %42 = math.rsqrt %41 : vector<1x256xf32>
    %43 = vector.broadcast %42 : vector<1x256xf32> to vector<8x256xf32>
    %44 = arith.mulf %32, %43 : vector<8x256xf32>
    %45 = vector.broadcast %23 : vector<1x256xf32> to vector<8x256xf32>
    %46 = arith.mulf %44, %45 : vector<8x256xf32>
    %47 = vector.broadcast %24 : vector<1x256xf32> to vector<8x256xf32>
    %48 = arith.addf %46, %47 : vector<8x256xf32>
    %c0_i32_14 = arith.constant 0 : i32
    %49 = tpu.memref_slice %arg10[%c0_i32_14] : memref<3x!tpu.dma_semaphore, #tpu.memory_space<semaphore_mem>> -> memref<1x!tpu.dma_semaphore, #tpu.memory_space<semaphore_mem>>
    %50 = tpu.memref_squeeze %49 : memref<1x!tpu.dma_semaphore, #tpu.memory_space<semaphore_mem>> -> memref<!tpu.dma_semaphore, #tpu.memory_space<semaphore_mem>>
    tpu.wait_dma2 semaphore(%50 : memref<!tpu.dma_semaphore, #tpu.memory_space<semaphore_mem>>) src(%arg3 : memref<256x512xbf16, #tpu.memory_space<any>>) dst(%arg7 : memref<256x512xbf16, #tpu.memory_space<vmem>>)
    %c0_15 = arith.constant 0 : index
    %c0_16 = arith.constant 0 : index
    %51 = vector.load %arg7[%c0_15, %c0_16] : memref<256x512xbf16, #tpu.memory_space<vmem>>, vector<256x512xbf16>
    %c3 = arith.constant 3 : index
    %c0_17 = arith.constant 0 : index
    %52 = vector.load %arg2[%c3, %c0_17] : memref<16x1024xf32, #tpu.memory_space<vmem>>, vector<1x512xf32>
    %53 = arith.truncf %48 : vector<8x256xf32> to vector<8x256xbf16>
    %cst_18 = arith.constant dense<0.000000e+00> : vector<8x512xf32>
    %54 = tpu.matmul %53, %51, %cst_18 {dimension_numbers = #tpu.dot_dimension_numbers<[1], [0], [0], [1], [0, 0, 1, 1], [], []>} : vector<8x256xbf16>, vector<256x512xbf16>, vector<8x512xf32> -> vector<8x512xf32>
    %55 = vector.broadcast %52 : vector<1x512xf32> to vector<8x512xf32>
    %56 = arith.addf %54, %55 : vector<8x512xf32>
    %cst_19 = arith.constant 0.000000e+00 : f32
    %57 = vector.broadcast %cst_19 : f32 to vector<8x512xf32>
    %58 = arith.cmpf oge, %56, %57 : vector<8x512xf32>
    %cst_20 = arith.constant 2.000000e-01 : f32
    %59 = vector.broadcast %cst_20 : f32 to vector<8x512xf32>
    %60 = arith.mulf %59, %56 : vector<8x512xf32>
    %61 = arith.select %58, %56, %60 : vector<8x512xi1>, vector<8x512xf32>
    %c4 = arith.constant 4 : index
    %c0_21 = arith.constant 0 : index
    %62 = vector.load %arg2[%c4, %c0_21] : memref<16x1024xf32, #tpu.memory_space<vmem>>, vector<1x512xf32>
    %c5 = arith.constant 5 : index
    %c0_22 = arith.constant 0 : index
    %63 = vector.load %arg2[%c5, %c0_22] : memref<16x1024xf32, #tpu.memory_space<vmem>>, vector<1x512xf32>
    %64 = vector.broadcast %10 : vector<8x1xf32> to vector<8x512xf32>
    %65 = arith.mulf %61, %64 : vector<8x512xf32>
    %cst_23 = arith.constant dense<0.000000e+00> : vector<512xf32>
    %66 = vector.multi_reduction <add>, %65, %cst_23 [0] : vector<8x512xf32> to vector<512xf32>
    %67 = vector.shape_cast %66 : vector<512xf32> to vector<1x512xf32>
    %cst_24 = arith.constant 2.500000e-01 : f32
    %68 = vector.broadcast %cst_24 : f32 to vector<1x512xf32>
    %69 = arith.mulf %67, %68 : vector<1x512xf32>
    %70 = vector.broadcast %69 : vector<1x512xf32> to vector<8x512xf32>
    %71 = arith.subf %61, %70 : vector<8x512xf32>
    %72 = arith.mulf %71, %71 : vector<8x512xf32>
    %73 = vector.broadcast %10 : vector<8x1xf32> to vector<8x512xf32>
    %74 = arith.mulf %72, %73 : vector<8x512xf32>
    %cst_25 = arith.constant dense<0.000000e+00> : vector<512xf32>
    %75 = vector.multi_reduction <add>, %74, %cst_25 [0] : vector<8x512xf32> to vector<512xf32>
    %76 = vector.shape_cast %75 : vector<512xf32> to vector<1x512xf32>
    %cst_26 = arith.constant 2.500000e-01 : f32
    %77 = vector.broadcast %cst_26 : f32 to vector<1x512xf32>
    %78 = arith.mulf %76, %77 : vector<1x512xf32>
    %cst_27 = arith.constant 9.99999974E-6 : f32
    %79 = vector.broadcast %cst_27 : f32 to vector<1x512xf32>
    %80 = arith.addf %78, %79 : vector<1x512xf32>
    %81 = math.rsqrt %80 : vector<1x512xf32>
    %82 = vector.broadcast %81 : vector<1x512xf32> to vector<8x512xf32>
    %83 = arith.mulf %71, %82 : vector<8x512xf32>
    %84 = vector.broadcast %62 : vector<1x512xf32> to vector<8x512xf32>
    %85 = arith.mulf %83, %84 : vector<8x512xf32>
    %86 = vector.broadcast %63 : vector<1x512xf32> to vector<8x512xf32>
    %87 = arith.addf %85, %86 : vector<8x512xf32>
    %c1_i32_28 = arith.constant 1 : i32
    %88 = tpu.memref_slice %arg10[%c1_i32_28] : memref<3x!tpu.dma_semaphore, #tpu.memory_space<semaphore_mem>> -> memref<1x!tpu.dma_semaphore, #tpu.memory_space<semaphore_mem>>
    %89 = tpu.memref_squeeze %88 : memref<1x!tpu.dma_semaphore, #tpu.memory_space<semaphore_mem>> -> memref<!tpu.dma_semaphore, #tpu.memory_space<semaphore_mem>>
    tpu.wait_dma2 semaphore(%89 : memref<!tpu.dma_semaphore, #tpu.memory_space<semaphore_mem>>) src(%arg4 : memref<512x1024xbf16, #tpu.memory_space<any>>) dst(%arg8 : memref<512x1024xbf16, #tpu.memory_space<vmem>>)
    %c0_29 = arith.constant 0 : index
    %c0_30 = arith.constant 0 : index
    %90 = vector.load %arg8[%c0_29, %c0_30] : memref<512x1024xbf16, #tpu.memory_space<vmem>>, vector<512x1024xbf16>
    %c6 = arith.constant 6 : index
    %c0_31 = arith.constant 0 : index
    %91 = vector.load %arg2[%c6, %c0_31] : memref<16x1024xf32, #tpu.memory_space<vmem>>, vector<1x1024xf32>
    %92 = arith.truncf %87 : vector<8x512xf32> to vector<8x512xbf16>
    %cst_32 = arith.constant dense<0.000000e+00> : vector<8x1024xf32>
    %93 = tpu.matmul %92, %90, %cst_32 {dimension_numbers = #tpu.dot_dimension_numbers<[1], [0], [0], [1], [0, 0, 1, 1], [], []>} : vector<8x512xbf16>, vector<512x1024xbf16>, vector<8x1024xf32> -> vector<8x1024xf32>
    %94 = vector.broadcast %91 : vector<1x1024xf32> to vector<8x1024xf32>
    %95 = arith.addf %93, %94 : vector<8x1024xf32>
    %cst_33 = arith.constant 0.000000e+00 : f32
    %96 = vector.broadcast %cst_33 : f32 to vector<8x1024xf32>
    %97 = arith.cmpf oge, %95, %96 : vector<8x1024xf32>
    %cst_34 = arith.constant 2.000000e-01 : f32
    %98 = vector.broadcast %cst_34 : f32 to vector<8x1024xf32>
    %99 = arith.mulf %98, %95 : vector<8x1024xf32>
    %100 = arith.select %97, %95, %99 : vector<8x1024xi1>, vector<8x1024xf32>
    %c7 = arith.constant 7 : index
    %c0_35 = arith.constant 0 : index
    %101 = vector.load %arg2[%c7, %c0_35] : memref<16x1024xf32, #tpu.memory_space<vmem>>, vector<1x1024xf32>
    %c8 = arith.constant 8 : index
    %c0_36 = arith.constant 0 : index
    %102 = vector.load %arg2[%c8, %c0_36] : memref<16x1024xf32, #tpu.memory_space<vmem>>, vector<1x1024xf32>
    %103 = vector.broadcast %10 : vector<8x1xf32> to vector<8x1024xf32>
    %104 = arith.mulf %100, %103 : vector<8x1024xf32>
    %cst_37 = arith.constant dense<0.000000e+00> : vector<1024xf32>
    %105 = vector.multi_reduction <add>, %104, %cst_37 [0] : vector<8x1024xf32> to vector<1024xf32>
    %106 = vector.shape_cast %105 : vector<1024xf32> to vector<1x1024xf32>
    %cst_38 = arith.constant 2.500000e-01 : f32
    %107 = vector.broadcast %cst_38 : f32 to vector<1x1024xf32>
    %108 = arith.mulf %106, %107 : vector<1x1024xf32>
    %109 = vector.broadcast %108 : vector<1x1024xf32> to vector<8x1024xf32>
    %110 = arith.subf %100, %109 : vector<8x1024xf32>
    %111 = arith.mulf %110, %110 : vector<8x1024xf32>
    %112 = vector.broadcast %10 : vector<8x1xf32> to vector<8x1024xf32>
    %113 = arith.mulf %111, %112 : vector<8x1024xf32>
    %cst_39 = arith.constant dense<0.000000e+00> : vector<1024xf32>
    %114 = vector.multi_reduction <add>, %113, %cst_39 [0] : vector<8x1024xf32> to vector<1024xf32>
    %115 = vector.shape_cast %114 : vector<1024xf32> to vector<1x1024xf32>
    %cst_40 = arith.constant 2.500000e-01 : f32
    %116 = vector.broadcast %cst_40 : f32 to vector<1x1024xf32>
    %117 = arith.mulf %115, %116 : vector<1x1024xf32>
    %cst_41 = arith.constant 9.99999974E-6 : f32
    %118 = vector.broadcast %cst_41 : f32 to vector<1x1024xf32>
    %119 = arith.addf %117, %118 : vector<1x1024xf32>
    %120 = math.rsqrt %119 : vector<1x1024xf32>
    %121 = vector.broadcast %120 : vector<1x1024xf32> to vector<8x1024xf32>
    %122 = arith.mulf %110, %121 : vector<8x1024xf32>
    %123 = vector.broadcast %101 : vector<1x1024xf32> to vector<8x1024xf32>
    %124 = arith.mulf %122, %123 : vector<8x1024xf32>
    %125 = vector.broadcast %102 : vector<1x1024xf32> to vector<8x1024xf32>
    %126 = arith.addf %124, %125 : vector<8x1024xf32>
    %c2_i32_42 = arith.constant 2 : i32
    %127 = tpu.memref_slice %arg10[%c2_i32_42] : memref<3x!tpu.dma_semaphore, #tpu.memory_space<semaphore_mem>> -> memref<1x!tpu.dma_semaphore, #tpu.memory_space<semaphore_mem>>
    %128 = tpu.memref_squeeze %127 : memref<1x!tpu.dma_semaphore, #tpu.memory_space<semaphore_mem>> -> memref<!tpu.dma_semaphore, #tpu.memory_space<semaphore_mem>>
    tpu.wait_dma2 semaphore(%128 : memref<!tpu.dma_semaphore, #tpu.memory_space<semaphore_mem>>) src(%arg5 : memref<1024x896xbf16, #tpu.memory_space<any>>) dst(%arg9 : memref<1024x896xbf16, #tpu.memory_space<vmem>>)
    %c0_43 = arith.constant 0 : index
    %c0_44 = arith.constant 0 : index
    %129 = vector.load %arg9[%c0_43, %c0_44] : memref<1024x896xbf16, #tpu.memory_space<vmem>>, vector<1024x896xbf16>
    %c9 = arith.constant 9 : index
    %c0_45 = arith.constant 0 : index
    %130 = vector.load %arg2[%c9, %c0_45] : memref<16x1024xf32, #tpu.memory_space<vmem>>, vector<1x896xf32>
    %131 = arith.truncf %126 : vector<8x1024xf32> to vector<8x1024xbf16>
    %cst_46 = arith.constant dense<0.000000e+00> : vector<8x896xf32>
    %132 = tpu.matmul %131, %129, %cst_46 {dimension_numbers = #tpu.dot_dimension_numbers<[1], [0], [0], [1], [0, 0, 1, 1], [], []>} : vector<8x1024xbf16>, vector<1024x896xbf16>, vector<8x896xf32> -> vector<8x896xf32>
    %133 = vector.broadcast %130 : vector<1x896xf32> to vector<8x896xf32>
    %134 = arith.addf %132, %133 : vector<8x896xf32>
    %135 = math.tanh %134 : vector<8x896xf32>
    %c0_47 = arith.constant 0 : index
    %c0_48 = arith.constant 0 : index
    %136 = vector.load %arg6[%c0_47, %c0_48] : memref<8x896xf32, #tpu.memory_space<vmem>>, vector<8x896xf32>
    tpu.vector_store %arg6[%c0_47, %c0_48], %135 {strides = array<i32>} : memref<8x896xf32, #tpu.memory_space<vmem>>, vector<8x896xf32>,
    return
  }
}

</mosaic_0001>

<llo_original>
// kernel: generator_forward.1
$region0: #{generator_forward.1}
  #allocation0 [shape = 'u32[]', space=smem, size = 0x4, offset = 0x4, fixed_abs, tag = 'smem constant byte address 0x4 - core index']
  #allocation1 [shape = 'u32[144,128]{1,0:T(1,128)}', space=vmem, size = 0x12000, scoped, tag = 'internal scratch']
  #allocation2 [shape = 'bf16[256,512]{1,0:T(16,128)(2,1)}', space=vmem, size = 0x40000, scoped, tag = 'scratch operand']
  #allocation3 [shape = 'bf16[512,1024]{1,0:T(16,128)(2,1)}', space=vmem, size = 0x100000, scoped, tag = 'scratch operand']
  #allocation4 [shape = 'bf16[1024,896]{1,0:T(16,128)(2,1)}', space=vmem, size = 0x1c0000, scoped, tag = 'scratch operand']
  #allocation5 [shape = 's32[3]{0}', space=sflag, size = 0xc, scoped, tag = 'scratch operand']
  #allocation10 [shape = 's32[]', space=sflag, size = 0x4, offset = 0, fixed_abs, tag = 'sflag constant byte address 0x0 - dummy sync flag']
  #allocation12 [shape = 's32[]', space=sflag, size = 0x4, offset = 0, fixed_abs, tag = 'sflag constant byte address 0x0 - dummy sync flag']
  #allocation14 [shape = 's32[]', space=sflag, size = 0x4, offset = 0, fixed_abs, tag = 'sflag constant byte address 0x0 - dummy sync flag']
  %s0 = inlined_call_operand.vmem [shape: f32[8,128], index: 0, kind: input, shape index: {}]
  %s1 = inlined_call_operand.hbm [shape: bf16[128,256], index: 1, kind: input, shape index: {}]
  %s2 = inlined_call_operand.hbm [shape: f32[16,1024], index: 2, kind: input, shape index: {}]
  %s3 = inlined_call_operand.hbm [shape: bf16[256,512], index: 3, kind: input, shape index: {}]
  %s4 = inlined_call_operand.hbm [shape: bf16[512,1024], index: 4, kind: input, shape index: {}]
  %s5 = inlined_call_operand.hbm [shape: bf16[1024,896], index: 5, kind: input, shape index: {}]
  %s6 = inlined_call_operand.vmem [shape: f32[8,896], index: 6, kind: output, shape index: {}]
  %s7 = sld [smem:[#allocation0]]
  $region30: #{generator_forward.1} parent=0
    _
  %s9 = ssub.s32 1, %s7
  %s10 = scalar_select 0, %s9, %s7
  $region1: #{generator_forward.1} parent=0
    #allocation6 [shape = 'u8[65536]{0}', space=vmem, size = 0x10000, scoped, tag = 'input window, operand 1, single buffered']
    #allocation7 [shape = 's32[1]{0}', space=sflag, size = 0x4, scoped, tag = 'scoped memory for generator_forward.1']
    #allocation8 [shape = 'u8[65536]{0}', space=vmem, size = 0x10000, scoped, tag = 'input window, operand 2, single buffered']
    #allocation9 [shape = 's32[1]{0}', space=sflag, size = 0x4, scoped, tag = 'scoped memory for generator_forward.1']
    #allocation11 [shape = 'u32[9]{0}', space=smem, size = 0x24, scoped, tag = 'DMA stride descriptor']
    #allocation13 [shape = 'u32[9]{0}', space=smem, size = 0x24, scoped, tag = 'DMA stride descriptor']
    #allocation15 [shape = 'u32[9]{0}', space=smem, size = 0x24, scoped, tag = 'DMA stride descriptor']
    %11 = vsyncpa [#allocation7], 0
    %12 = vsyncpa [#allocation9], 0
    // Predicated region
    $region2: #{generator_forward.1} parent=1 // pred_check
      _
    $region3: #{generator_forward.1} parent=1 // pred_check_branch
      %14 = sbr.rel (0) target = $region5
    $region4: #{generator_forward.1} parent=1 // pred_region
      _
    $region5: #{generator_forward.1} parent=1 // pred_fallthru
      _
    // Predicated region
    $region6: #{generator_forward.1} parent=1 // pred_check
      _
    $region7: #{generator_forward.1} parent=1 // pred_check_branch
      %16 = sbr.rel (0) target = $region9
    $region8: #{generator_forward.1} parent=1 // pred_region
      %s18 = ssub.s32 2048, 2048
      %19 = vsyncadd [#allocation7], %s18
      %s20 = sshll.u32 [#allocation6], 4
      %s21 = int_to_ptr.vmem [resolvable:$true] %s20
      %26 = dma.hbm_to_vmem [thread:$0]  %s1, 2048, %s21, [#allocation7], 128, 128, 8
    $region9: #{generator_forward.1} parent=1 // pred_fallthru
      _
    // Predicated region
    $region10: #{generator_forward.1} parent=1 // pred_check
      _
    $region11: #{generator_forward.1} parent=1 // pred_check_branch
      %28 = sbr.rel (0) target = $region13
    $region12: #{generator_forward.1} parent=1 // pred_region
      %s30 = ssub.s32 2048, 2048
      %31 = vsyncadd [#allocation9], %s30
      %s32 = sshll.u32 [#allocation8], 4
      %s33 = int_to_ptr.vmem [resolvable:$true] %s32
      %38 = dma.hbm_to_vmem [thread:$0]  %s2, 2048, %s33, [#allocation9], 1024, 1024, 64
    $region13: #{generator_forward.1} parent=1 // pred_fallthru
      _
    // Predicated region
    $region14: #{generator_forward.1} parent=1 // pred_check
      _
    $region15: #{generator_forward.1} parent=1 // pred_check_branch
      %40 = sbr.rel (0) target = $region17
    $region16: #{generator_forward.1} parent=1 // pred_region
      %41 = dma.done [#allocation7], 2048
    $region17: #{generator_forward.1} parent=1 // pred_fallthru
      _
    // Predicated region
    $region18: #{generator_forward.1} parent=1 // pred_check
      _
    $region19: #{generator_forward.1} parent=1 // pred_check_branch
      %43 = sbr.rel (0) target = $region21
    $region20: #{generator_forward.1} parent=1 // pred_region
      %44 = dma.done [#allocation9], 2048
    $region21: #{generator_forward.1} parent=1 // pred_fallthru
      _
    %s47 = sshll.u32 1, 14
    %s48 = sxor.u32 4294967295, %s47
    %s50 = sld [smem:[#allocation0]]
    %s51 = sadd.s32 2, %s50
    %s53 = sshll.u32 7, 26
    %s54 = sxor.u32 4294967295, %s53
    %s55 = sand.u32 0, %s54
    %s56 = sshll.u32 %s51, 26
    %s57 = sor.u32 %s55, %s56
    %s58 = sshll.u32 [#allocation2], 4
    %s59 = int_to_ptr.vmem [resolvable:$true] %s58
    %62 = sst [smem:[#allocation11]] 512
    %s63 = scalar_lea.smem [#allocation11], 1
    %64 = sst [smem:[%s63]] 512
    %s65 = scalar_lea.smem [#allocation11], 2
    %66 = sst [smem:[%s65]] 4
    %s67 = scalar_lea.smem [#allocation11], 3
    %68 = sst [smem:[%s67]] 64
    %s69 = scalar_lea.smem [#allocation11], 4
    %70 = sst [smem:[%s69]] 128
    %s71 = scalar_lea.smem [#allocation11], 5
    %72 = sst [smem:[%s71]] 2
    %s73 = scalar_lea.smem [#allocation11], 6
    %74 = sst [smem:[%s73]] 256
    %s75 = scalar_lea.smem [#allocation11], 7
    %76 = sst [smem:[%s75]] 64
    %s77 = scalar_lea.smem [#allocation11], 8
    %78 = sst [smem:[%s77]] 4
    %80 = dma.general %s3, 8192, %s59, [#allocation5], [#allocation10], [#allocation11], %s57, 0
    %s81 = scalar_lea.sflag [#allocation5], 1
    %s83 = sshll.u32 1, 14
    %s84 = sxor.u32 4294967295, %s83
    %s86 = sadd.s32 2, %s50
    %s88 = sshll.u32 7, 26
    %s89 = sxor.u32 4294967295, %s88
    %s90 = sand.u32 0, %s89
    %s91 = sshll.u32 %s86, 26
    %s92 = sor.u32 %s90, %s91
    %s93 = sshll.u32 [#allocation3], 4
    %s94 = int_to_ptr.vmem [resolvable:$true] %s93
    %97 = sst [smem:[#allocation13]] 1024
    %s98 = scalar_lea.smem [#allocation13], 1
    %99 = sst [smem:[%s98]] 1024
    %s100 = scalar_lea.smem [#allocation13], 2
    %101 = sst [smem:[%s100]] 8
    %s102 = scalar_lea.smem [#allocation13], 3
    %103 = sst [smem:[%s102]] 64
    %s104 = scalar_lea.smem [#allocation13], 4
    %105 = sst [smem:[%s104]] 128
    %s106 = scalar_lea.smem [#allocation13], 5
    %107 = sst [smem:[%s106]] 2
    %s108 = scalar_lea.smem [#allocation13], 6
    %109 = sst [smem:[%s108]] 512
    %s110 = scalar_lea.smem [#allocation13], 7
    %111 = sst [smem:[%s110]] 64
    %s112 = scalar_lea.smem [#allocation13], 8
    %113 = sst [smem:[%s112]] 4
    %115 = dma.general %s4, 32768, %s94, %s81, [#allocation12], [#allocation13], %s92, 0
    %s116 = scalar_lea.sflag [#allocation5], 2
    %s118 = sshll.u32 1, 14
    %s119 = sxor.u32 4294967295, %s118
    %s121 = sadd.s32 2, %s50
    %s123 = sshll.u32 7, 26
    %s124 = sxor.u32 4294967295, %s123
    %s125 = sand.u32 0, %s124
    %s126 = sshll.u32 %s121, 26
    %s127 = sor.u32 %s125, %s126
    %s128 = sshll.u32 [#allocation4], 4
    %s129 = int_to_ptr.vmem [resolvable:$true] %s128
    %132 = sst [smem:[#allocation15]] 896
    %s133 = scalar_lea.smem [#allocation15], 1
    %134 = sst [smem:[%s133]] 896
    %s135 = scalar_lea.smem [#allocation15], 2
    %136 = sst [smem:[%s135]] 7
    %s137 = scalar_lea.smem [#allocation15], 3
    %138 = sst [smem:[%s137]] 64
    %s139 = scalar_lea.smem [#allocation15], 4
    %140 = sst [smem:[%s139]] 128
    %s141 = scalar_lea.smem [#allocation15], 5
    %142 = sst [smem:[%s141]] 2
    %s143 = scalar_lea.smem [#allocation15], 6
    %144 = sst [smem:[%s143]] 448
    %s145 = scalar_lea.smem [#allocation15], 7
    %146 = sst [smem:[%s145]] 64
    %s147 = scalar_lea.smem [#allocation15], 8
    %148 = sst [smem:[%s147]] 4
    %150 = dma.general %s5, 57344, %s129, %s116, [#allocation14], [#allocation15], %s127, 0
    %v151 = vlaneseq
    %v152 = vshrl.u32 %v151, 7
    %vm153 = vcmp.lt.s32.totalorder %v152, 4
    %v154 = vsel %vm153, 1, 0
    %v155 = vcvt.s32.f32 %v154
    %v156 = vld [vmem:[%s0] sm:$0xff]
    %v157 = vld [vmem:[#allocation6] sm:$0xff]
    %v158 = vld [vmem:[#allocation6 + $0x8] sm:$0xff]
    %v159 = vld [vmem:[#allocation6 + $0x10] sm:$0xff]
    %v160 = vld [vmem:[#allocation6 + $0x18] sm:$0xff]
    %v161 = vld [vmem:[#allocation6 + $0x20] sm:$0xff]
    %v162 = vld [vmem:[#allocation6 + $0x28] sm:$0xff]
    %v163 = vld [vmem:[#allocation6 + $0x30] sm:$0xff]
    %v164 = vld [vmem:[#allocation6 + $0x38] sm:$0xff]
    %v165 = vld [vmem:[#allocation6 + $0x40] sm:$0xff]
    %v166 = vld [vmem:[#allocation6 + $0x48] sm:$0xff]
    %v167 = vld [vmem:[#allocation6 + $0x50] sm:$0xff]
    %v168 = vld [vmem:[#allocation6 + $0x58] sm:$0xff]
    %v169 = vld [vmem:[#allocation6 + $0x60] sm:$0xff]
    %v170 = vld [vmem:[#allocation6 + $0x68] sm:$0xff]
    %v171 = vld [vmem:[#allocation6 + $0x70] sm:$0xff]
    %v172 = vld [vmem:[#allocation6 + $0x78] sm:$0xff]
    %v173 = vld [vmem:[#allocation8] ss:$8 sm:$0x3]
    %v174 = vpack.c.bf16 %v156, %v156
    %v176 = vlaneseq
    %v177 = vshrl.u32 %v176, 7
    %v178 = vsub.s32 0, %v177
    %v179 = vrot.slane %v173, %v178
    %v180 = vlaneseq
    %v181 = vshrl.u32 %v180, 7
    %v182 = vsub.s32 1, %v181
    %v183 = vrot.slane %v173, %v182
    %v202 = vunpack.c.l.b16 %v157
    %v203 = vunpack.c.h.b16 %v157
    %v204 = vunpack.c.l.b16 %v158
    %v205 = vunpack.c.h.b16 %v158
    %v206 = vunpack.c.l.b16 %v159
    %v207 = vunpack.c.h.b16 %v159
    %v208 = vunpack.c.l.b16 %v160
    %v209 = vunpack.c.h.b16 %v160
    %v210 = vunpack.c.l.b16 %v161
    %v211 = vunpack.c.h.b16 %v161
    %v212 = vunpack.c.l.b16 %v162
    %v213 = vunpack.c.h.b16 %v162
    %v214 = vunpack.c.l.b16 %v163
    %v215 = vunpack.c.h.b16 %v163
    %v216 = vunpack.c.l.b16 %v164
    %v217 = vunpack.c.h.b16 %v164
    %v218 = vunpack.c.l.b16 %v165
    %v219 = vunpack.c.h.b16 %v165
    %v220 = vunpack.c.l.b16 %v166
    %v221 = vunpack.c.h.b16 %v166
    %v222 = vunpack.c.l.b16 %v167
    %v223 = vunpack.c.h.b16 %v167
    %v224 = vunpack.c.l.b16 %v168
    %v225 = vunpack.c.h.b16 %v168
    %v226 = vunpack.c.l.b16 %v169
    %v227 = vunpack.c.h.b16 %v169
    %v228 = vunpack.c.l.b16 %v170
    %v229 = vunpack.c.h.b16 %v170
    %v230 = vunpack.c.l.b16 %v171
    %v231 = vunpack.c.h.b16 %v171
    %v232 = vunpack.c.l.b16 %v172
    %v233 = vunpack.c.h.b16 %v172
    %v234 = vpack.c.b16 %v204, %v202
    %v235 = vpack.c.b16 %v205, %v203
    %v236 = vpack.c.b16 %v208, %v206
    %v237 = vpack.c.b16 %v209, %v207
    %v238 = vpack.c.b16 %v212, %v210
    %v239 = vpack.c.b16 %v213, %v211
    %v240 = vpack.c.b16 %v216, %v214
    %v241 = vpack.c.b16 %v217, %v215
    %v242 = vpack.c.b16 %v220, %v218
    %v243 = vpack.c.b16 %v221, %v219
    %v244 = vpack.c.b16 %v224, %v222
    %v245 = vpack.c.b16 %v225, %v223
    %v246 = vpack.c.b16 %v228, %v226
    %v247 = vpack.c.b16 %v229, %v227
    %v248 = vpack.c.b16 %v232, %v230
    %v249 = vpack.c.b16 %v233, %v231
    %266 = vmatprep.subr.bf16.mxu0 %v235
    %267 = vmatpush1.bf16.msra.mxu0 %v234
    %268 = vmatprep.subr.bf16.mxu0 %v237
    %269 = vmatpush1.bf16.msra.mxu0 %v236
    %270 = vmatprep.subr.bf16.mxu0 %v239
    %271 = vmatpush1.bf16.msra.mxu0 %v238
    %272 = vmatprep.subr.bf16.mxu0 %v241
    %273 = vmatpush1.bf16.msra.mxu0 %v240
    %274 = vmatprep.subr.bf16.mxu0 %v243
    %275 = vmatpush1.bf16.msra.mxu0 %v242
    %276 = vmatprep.subr.bf16.mxu0 %v245
    %277 = vmatpush1.bf16.msra.mxu0 %v244
    %278 = vmatprep.subr.bf16.mxu0 %v247
    %279 = vmatpush1.bf16.msra.mxu0 %v246
    %280 = vmatprep.subr.bf16.mxu0 %v249
    %281 = vmatpush1.bf16.msra.mxu0 %v248
    %282 = vmatprep.subr.bf16.mxu0 0
    %283 = vmatpush1.bf16.msra.mxu0 0
    %284 = vmatprep.subr.bf16.mxu0 0
    %285 = vmatpush1.bf16.msra.mxu0 0
    %286 = vmatprep.subr.bf16.mxu0 0
    %287 = vmatpush1.bf16.msra.mxu0 0
    %288 = vmatprep.subr.bf16.mxu0 0
    %289 = vmatpush1.bf16.msra.mxu0 0
    %290 = vmatprep.subr.bf16.mxu0 0
    %291 = vmatpush1.bf16.msra.mxu0 0
    %292 = vmatprep.subr.bf16.mxu0 0
    %293 = vmatpush1.bf16.msra.mxu0 0
    %294 = vmatprep.subr.bf16.mxu0 0
    %295 = vmatpush1.bf16.msra.mxu0 0
    %296 = vmatprep.subr.bf16.mxu0 0
    %297 = vmatpush1.bf16.msra.mxu0 0
    %298 = vmatprep.mubr.bf16.mxu0 0
    %299 = vmatmul.mubr.bf16.gmra.mrb[0].mxu0 %v174
    %v300 = vpop.f32.mrb[0].mxu0
    %v301 = vadd.f32 %v179, %v300
    %v302 = vpop.f32.mrb[0].mxu0
    %v303 = vadd.f32 %v183, %v302
    %v304 = vpop.f32.mrb[0].mxu0
    %v305 = vpop.f32.mrb[0].mxu0
    %306 = vdwg.mxu0
    %vm307 = vcmp.ge.f32.partialorder %v301, 0.0
    %vm308 = vcmp.ge.f32.partialorder %v303, 0.0
    %v309 = vmul.f32 %v301, 0.2
    %v310 = vmul.f32 %v303, 0.2
    %v311 = vsel %vm307, %v301, %v309
    %v312 = vsel %vm308, %v303, %v310
    %s313 = scalar_lea.vmem [#allocation8], 1
    %v314 = vld [vmem:[%s313] ss:$8 sm:$0x3]
    %s315 = scalar_lea.vmem [#allocation8], 2
    %v316 = vld [vmem:[%s315] ss:$8 sm:$0x3]
    %v317 = vmul.f32 %v311, %v155
    %v318 = vmul.f32 %v312, %v155
    %v319 = vrot.slane %v317, 4
    %v320 = vadd.f32 %v317, %v319
    %v321 = vrot.slane %v320, 2
    %v322 = vadd.f32 %v320, %v321
    %v323 = vrot.slane %v322, 1
    %v324 = vadd.f32 %v322, %v323
    %v325 = vrot.slane %v318, 4
    %v326 = vadd.f32 %v318, %v325
    %v327 = vrot.slane %v326, 2
    %v328 = vadd.f32 %v326, %v327
    %v329 = vrot.slane %v328, 1
    %v330 = vadd.f32 %v328, %v329
    %v331 = vmul.f32 %v324, 0.25
    %v332 = vmul.f32 %v330, 0.25
    %v333 = vsub.f32 %v311, %v331
    %v334 = vsub.f32 %v312, %v332
    %v335 = vmul.f32 %v333, %v333
    %v336 = vmul.f32 %v334, %v334
    %v337 = vmul.f32 %v335, %v155
    %v338 = vmul.f32 %v336, %v155
    %v339 = vrot.slane %v337, 4
    %v340 = vadd.f32 %v337, %v339
    %v341 = vrot.slane %v340, 2
    %v342 = vadd.f32 %v340, %v341
    %v343 = vrot.slane %v342, 1
    %v344 = vadd.f32 %v342, %v343
    %v345 = vrot.slane %v338, 4
    %v346 = vadd.f32 %v338, %v345
    %v347 = vrot.slane %v346, 2
    %v348 = vadd.f32 %v346, %v347
    %v349 = vrot.slane %v348, 1
    %v350 = vadd.f32 %v348, %v349
    %v351 = vmul.f32 %v344, 0.25
    %v352 = vmul.f32 %v350, 0.25
    %v353 = vadd.f32 %v351, 1e-05
    %v354 = vadd.f32 %v352, 1e-05
    %v355 = vrsqrt.pop %v353
    %v356 = vrsqrt.pop %v354
    %v357 = vmul.f32 %v333, %v355
    %v358 = vmul.f32 %v334, %v356
    %v360 = vlaneseq
    %v361 = vshrl.u32 %v360, 7
    %v362 = vsub.s32 0, %v361
    %v363 = vrot.slane %v314, %v362
    %v364 = vlaneseq
    %v365 = vshrl.u32 %v364, 7
    %v366 = vsub.s32 1, %v365
    %v367 = vrot.slane %v314, %v366
    %v370 = vmul.f32 %v357, %v363
    %v371 = vmul.f32 %v358, %v367
    %v373 = vlaneseq
    %v374 = vshrl.u32 %v373, 7
    %v375 = vsub.s32 0, %v374
    %v376 = vrot.slane %v316, %v375
    %v377 = vlaneseq
    %v378 = vshrl.u32 %v377, 7
    %v379 = vsub.s32 1, %v378
    %v380 = vrot.slane %v316, %v379
    %v383 = vadd.f32 %v370, %v376
    %v384 = vadd.f32 %v371, %v380
    %s385 = smul.u32 4, 32
    %s386 = smul.u32 %s385, 4
    %s387 = sshll.u32 %s386, 4
    %388 = dma.done [#allocation5], %s387
    %v389 = vld [vmem:[#allocation2] sm:$0xff]
    %v390 = vld [vmem:[#allocation2 + $0x8] sm:$0xff]
    %v391 = vld [vmem:[#allocation2 + $0x10] sm:$0xff]
    %v392 = vld [vmem:[#allocation2 + $0x18] sm:$0xff]
    %v393 = vld [vmem:[#allocation2 + $0x20] sm:$0xff]
    %v394 = vld [vmem:[#allocation2 + $0x28] sm:$0xff]
    %v395 = vld [vmem:[#allocation2 + $0x30] sm:$0xff]
    %v396 = vld [vmem:[#allocation2 + $0x38] sm:$0xff]
    %v397 = vld [vmem:[#allocation2 + $0x40] sm:$0xff]
    %v398 = vld [vmem:[#allocation2 + $0x48] sm:$0xff]
    %v399 = vld [vmem:[#allocation2 + $0x50] sm:$0xff]
    %v400 = vld [vmem:[#allocation2 + $0x58] sm:$0xff]
    %v401 = vld [vmem:[#allocation2 + $0x60] sm:$0xff]
    %v402 = vld [vmem:[#allocation2 + $0x68] sm:$0xff]
    %v403 = vld [vmem:[#allocation2 + $0x70] sm:$0xff]
    %v404 = vld [vmem:[#allocation2 + $0x78] sm:$0xff]
    %v405 = vld [vmem:[#allocation2 + $0x80] sm:$0xff]
    %v406 = vld [vmem:[#allocation2 + $0x88] sm:$0xff]
    %v407 = vld [vmem:[#allocation2 + $0x90] sm:$0xff]
    %v408 = vld [vmem:[#allocation2 + $0x98] sm:$0xff]
    %v409 = vld [vmem:[#allocation2 + $0xa0] sm:$0xff]
    %v410 = vld [vmem:[#allocation2 + $0xa8] sm:$0xff]
    %v411 = vld [vmem:[#allocation2 + $0xb0] sm:$0xff]
    %v412 = vld [vmem:[#allocation2 + $0xb8] sm:$0xff]
    %v413 = vld [vmem:[#allocation2 + $0xc0] sm:$0xff]
    %v414 = vld [vmem:[#allocation2 + $0xc8] sm:$0xff]
    %v415 = vld [vmem:[#allocation2 + $0xd0] sm:$0xff]
    %v416 = vld [vmem:[#allocation2 + $0xd8] sm:$0xff]
    %v417 = vld [vmem:[#allocation2 + $0xe0] sm:$0xff]
    %v418 = vld [vmem:[#allocation2 + $0xe8] sm:$0xff]
    %v419 = vld [vmem:[#allocation2 + $0xf0] sm:$0xff]
    %v420 = vld [vmem:[#allocation2 + $0xf8] sm:$0xff]
    %v421 = vld [vmem:[#allocation2 + $0x100] sm:$0xff]
    %v422 = vld [vmem:[#allocation2 + $0x108] sm:$0xff]
    %v423 = vld [vmem:[#allocation2 + $0x110] sm:$0xff]
    %v424 = vld [vmem:[#allocation2 + $0x118] sm:$0xff]
    %v425 = vld [vmem:[#allocation2 + $0x120] sm:$0xff]
    %v426 = vld [vmem:[#allocation2 + $0x128] sm:$0xff]
    %v427 = vld [vmem:[#allocation2 + $0x130] sm:$0xff]
    %v428 = vld [vmem:[#allocation2 + $0x138] sm:$0xff]
    %v429 = vld [vmem:[#allocation2 + $0x140] sm:$0xff]
    %v430 = vld [vmem:[#allocation2 + $0x148] sm:$0xff]
    %v431 = vld [vmem:[#allocation2 + $0x150] sm:$0xff]
    %v432 = vld [vmem:[#allocation2 + $0x158] sm:$0xff]
    %v433 = vld [vmem:[#allocation2 + $0x160] sm:$0xff]
    %v434 = vld [vmem:[#allocation2 + $0x168] sm:$0xff]
    %v435 = vld [vmem:[#allocation2 + $0x170] sm:$0xff]
    %v436 = vld [vmem:[#allocation2 + $0x178] sm:$0xff]
    %v437 = vld [vmem:[#allocation2 + $0x180] sm:$0xff]
    %v438 = vld [vmem:[#allocation2 + $0x188] sm:$0xff]
    %v439 = vld [vmem:[#allocation2 + $0x190] sm:$0xff]
    %v440 = vld [vmem:[#allocation2 + $0x198] sm:$0xff]
    %v441 = vld [vmem:[#allocation2 + $0x1a0] sm:$0xff]
    %v442 = vld [vmem:[#allocation2 + $0x1a8] sm:$0xff]
    %v443 = vld [vmem:[#allocation2 + $0x1b0] sm:$0xff]
    %v444 = vld [vmem:[#allocation2 + $0x1b8] sm:$0xff]
    %v445 = vld [vmem:[#allocation2 + $0x1c0] sm:$0xff]
    %v446 = vld [vmem:[#allocation2 + $0x1c8] sm:$0xff]
    %v447 = vld [vmem:[#allocation2 + $0x1d0] sm:$0xff]
    %v448 = vld [vmem:[#allocation2 + $0x1d8] sm:$0xff]
    %v449 = vld [vmem:[#allocation2 + $0x1e0] sm:$0xff]
    %v450 = vld [vmem:[#allocation2 + $0x1e8] sm:$0xff]
    %v451 = vld [vmem:[#allocation2 + $0x1f0] sm:$0xff]
    %v452 = vld [vmem:[#allocation2 + $0x1f8] sm:$0xff]
    %s453 = scalar_lea.vmem [#allocation8], 3
    %v454 = vld [vmem:[%s453] ss:$8 sm:$0xf]
    %v455 = vpack.c.bf16 %v383, %v383
    %v456 = vpack.c.bf16 %v384, %v384
    %v458 = vlaneseq
    %v459 = vshrl.u32 %v458, 7
    %v460 = vsub.s32 0, %v459
    %v461 = vrot.slane %v454, %v460
    %v462 = vlaneseq
    %v463 = vshrl.u32 %v462, 7
    %v464 = vsub.s32 1, %v463
    %v465 = vrot.slane %v454, %v464
    %v466 = vlaneseq
    %v467 = vshrl.u32 %v466, 7
    %v468 = vsub.s32 2, %v467
    %v469 = vrot.slane %v454, %v468
    %v470 = vlaneseq
    %v471 = vshrl.u32 %v470, 7
    %v472 = vsub.s32 3, %v471
    %v473 = vrot.slane %v454, %v472
    %478 = vmatprep.subr.bf16.mxu0 %v390
    %479 = vmatpush1.bf16.msra.mxu0 %v389
    %480 = vmatprep.subr.bf16.mxu0 %v394
    %481 = vmatpush1.bf16.msra.mxu0 %v393
    %482 = vmatprep.subr.bf16.mxu0 %v398
    %483 = vmatpush1.bf16.msra.mxu0 %v397
    %484 = vmatprep.subr.bf16.mxu0 %v402
    %485 = vmatpush1.bf16.msra.mxu0 %v401
    %486 = vmatprep.subr.bf16.mxu0 %v406
    %487 = vmatpush1.bf16.msra.mxu0 %v405
    %488 = vmatprep.subr.bf16.mxu0 %v410
    %489 = vmatpush1.bf16.msra.mxu0 %v409
    %490 = vmatprep.subr.bf16.mxu0 %v414
    %491 = vmatpush1.bf16.msra.mxu0 %v413
    %492 = vmatprep.subr.bf16.mxu0 %v418
    %493 = vmatpush1.bf16.msra.mxu0 %v417
    %494 = vmatprep.subr.bf16.mxu0 %v422
    %495 = vmatpush1.bf16.msra.mxu0 %v421
    %496 = vmatprep.subr.bf16.mxu0 %v426
    %497 = vmatpush1.bf16.msra.mxu0 %v425
    %498 = vmatprep.subr.bf16.mxu0 %v430
    %499 = vmatpush1.bf16.msra.mxu0 %v429
    %500 = vmatprep.subr.bf16.mxu0 %v434
    %501 = vmatpush1.bf16.msra.mxu0 %v433
    %502 = vmatprep.subr.bf16.mxu0 %v438
    %503 = vmatpush1.bf16.msra.mxu0 %v437
    %504 = vmatprep.subr.bf16.mxu0 %v442
    %505 = vmatpush1.bf16.msra.mxu0 %v441
    %506 = vmatprep.subr.bf16.mxu0 %v446
    %507 = vmatpush1.bf16.msra.mxu0 %v445
    %508 = vmatprep.subr.bf16.mxu0 %v450
    %509 = vmatpush1.bf16.msra.mxu0 %v449
    %510 = vmatprep.mubr.bf16.mxu0 %v456
    %511 = vmatmul.mubr.bf16.gmra.mrb[0].mxu0 %v455
    %v512 = vpop.f32.mrb[0].mxu0
    %v513 = vadd.f32 %v461, %v512
    %v514 = vpop.f32.mrb[0].mxu0
    %v515 = vadd.f32 %v465, %v514
    %v516 = vpop.f32.mrb[0].mxu0
    %v517 = vpop.f32.mrb[0].mxu0
    %518 = vdwg.mxu0
    %519 = vmatprep.subr.bf16.mxu0 %v392
    %520 = vmatpush1.bf16.msra.mxu0 %v391
    %521 = vmatprep.subr.bf16.mxu0 %v396
    %522 = vmatpush1.bf16.msra.mxu0 %v395
    %523 = vmatprep.subr.bf16.mxu0 %v400
    %524 = vmatpush1.bf16.msra.mxu0 %v399
    %525 = vmatprep.subr.bf16.mxu0 %v404
    %526 = vmatpush1.bf16.msra.mxu0 %v403
    %527 = vmatprep.subr.bf16.mxu0 %v408
    %528 = vmatpush1.bf16.msra.mxu0 %v407
    %529 = vmatprep.subr.bf16.mxu0 %v412
    %530 = vmatpush1.bf16.msra.mxu0 %v411
    %531 = vmatprep.subr.bf16.mxu0 %v416
    %532 = vmatpush1.bf16.msra.mxu0 %v415
    %533 = vmatprep.subr.bf16.mxu0 %v420
    %534 = vmatpush1.bf16.msra.mxu0 %v419
    %535 = vmatprep.subr.bf16.mxu0 %v424
    %536 = vmatpush1.bf16.msra.mxu0 %v423
    %537 = vmatprep.subr.bf16.mxu0 %v428
    %538 = vmatpush1.bf16.msra.mxu0 %v427
    %539 = vmatprep.subr.bf16.mxu0 %v432
    %540 = vmatpush1.bf16.msra.mxu0 %v431
    %541 = vmatprep.subr.bf16.mxu0 %v436
    %542 = vmatpush1.bf16.msra.mxu0 %v435
    %543 = vmatprep.subr.bf16.mxu0 %v440
    %544 = vmatpush1.bf16.msra.mxu0 %v439
    %545 = vmatprep.subr.bf16.mxu0 %v444
    %546 = vmatpush1.bf16.msra.mxu0 %v443
    %547 = vmatprep.subr.bf16.mxu0 %v448
    %548 = vmatpush1.bf16.msra.mxu0 %v447
    %549 = vmatprep.subr.bf16.mxu0 %v452
    %550 = vmatpush1.bf16.msra.mxu0 %v451
    %551 = vmatprep.mubr.bf16.mxu0 %v456
    %552 = vmatmul.mubr.bf16.gmra.mrb[0].mxu0 %v455
    %v553 = vpop.f32.mrb[0].mxu0
    %v554 = vadd.f32 %v469, %v553
    %v555 = vpop.f32.mrb[0].mxu0
    %v556 = vadd.f32 %v473, %v555
    %v557 = vpop.f32.mrb[0].mxu0
    %v558 = vpop.f32.mrb[0].mxu0
    %559 = vdwg.mxu0
    %vm560 = vcmp.ge.f32.partialorder %v513, 0.0
    %vm561 = vcmp.ge.f32.partialorder %v515, 0.0
    %vm562 = vcmp.ge.f32.partialorder %v554, 0.0
    %vm563 = vcmp.ge.f32.partialorder %v556, 0.0
    %v564 = vmul.f32 %v513, 0.2
    %v565 = vmul.f32 %v515, 0.2
    %v566 = vmul.f32 %v554, 0.2
    %v567 = vmul.f32 %v556, 0.2
    %v568 = vsel %vm560, %v513, %v564
    %v569 = vsel %vm561, %v515, %v565
    %v570 = vsel %vm562, %v554, %v566
    %v571 = vsel %vm563, %v556, %v567
    %s572 = scalar_lea.vmem [#allocation8], 4
    %v573 = vld [vmem:[%s572] ss:$8 sm:$0xf]
    %s574 = scalar_lea.vmem [#allocation8], 5
    %v575 = vld [vmem:[%s574] ss:$8 sm:$0xf]
    %v576 = vmul.f32 %v568, %v155
    %v577 = vmul.f32 %v569, %v155
    %v578 = vmul.f32 %v570, %v155
    %v579 = vmul.f32 %v571, %v155
    %v580 = vrot.slane %v576, 4
    %v581 = vadd.f32 %v576, %v580
    %v582 = vrot.slane %v581, 2
    %v583 = vadd.f32 %v581, %v582
    %v584 = vrot.slane %v583, 1
    %v585 = vadd.f32 %v583, %v584
    %v586 = vrot.slane %v577, 4
    %v587 = vadd.f32 %v577, %v586
    %v588 = vrot.slane %v587, 2
    %v589 = vadd.f32 %v587, %v588
    %v590 = vrot.slane %v589, 1
    %v591 = vadd.f32 %v589, %v590
    %v592 = vrot.slane %v578, 4
    %v593 = vadd.f32 %v578, %v592
    %v594 = vrot.slane %v593, 2
    %v595 = vadd.f32 %v593, %v594
    %v596 = vrot.slane %v595, 1
    %v597 = vadd.f32 %v595, %v596
    %v598 = vrot.slane %v579, 4
    %v599 = vadd.f32 %v579, %v598
    %v600 = vrot.slane %v599, 2
    %v601 = vadd.f32 %v599, %v600
    %v602 = vrot.slane %v601, 1
    %v603 = vadd.f32 %v601, %v602
    %v604 = vmul.f32 %v585, 0.25
    %v605 = vmul.f32 %v591, 0.25
    %v606 = vmul.f32 %v597, 0.25
    %v607 = vmul.f32 %v603, 0.25
    %v608 = vsub.f32 %v568, %v604
    %v609 = vsub.f32 %v569, %v605
    %v610 = vsub.f32 %v570, %v606
    %v611 = vsub.f32 %v571, %v607
    %v612 = vmul.f32 %v608, %v608
    %v613 = vmul.f32 %v609, %v609
    %v614 = vmul.f32 %v610, %v610
    %v615 = vmul.f32 %v611, %v611
    %v616 = vmul.f32 %v612, %v155
    %v617 = vmul.f32 %v613, %v155
    %v618 = vmul.f32 %v614, %v155
    %v619 = vmul.f32 %v615, %v155
    %v620 = vrot.slane %v616, 4
    %v621 = vadd.f32 %v616, %v620
    %v622 = vrot.slane %v621, 2
    %v623 = vadd.f32 %v621, %v622
    %v624 = vrot.slane %v623, 1
    %v625 = vadd.f32 %v623, %v624
    %v626 = vrot.slane %v617, 4
    %v627 = vadd.f32 %v617, %v626
    %v628 = vrot.slane %v627, 2
    %v629 = vadd.f32 %v627, %v628
    %v630 = vrot.slane %v629, 1
    %v631 = vadd.f32 %v629, %v630
    %v632 = vrot.slane %v618, 4
    %v633 = vadd.f32 %v618, %v632
    %v634 = vrot.slane %v633, 2
    %v635 = vadd.f32 %v633, %v634
    %v636 = vrot.slane %v635, 1
    %v637 = vadd.f32 %v635, %v636
    %v638 = vrot.slane %v619, 4
    %v639 = vadd.f32 %v619, %v638
    %v640 = vrot.slane %v639, 2
    %v641 = vadd.f32 %v639, %v640
    %v642 = vrot.slane %v641, 1
    %v643 = vadd.f32 %v641, %v642
    %v644 = vmul.f32 %v625, 0.25
    %v645 = vmul.f32 %v631, 0.25
    %v646 = vmul.f32 %v637, 0.25
    %v647 = vmul.f32 %v643, 0.25
    %v648 = vadd.f32 %v644, 1e-05
    %v649 = vadd.f32 %v645, 1e-05
    %v650 = vadd.f32 %v646, 1e-05
    %v651 = vadd.f32 %v647, 1e-05
    %v652 = vrsqrt.pop %v648
    %v653 = vrsqrt.pop %v649
    %v654 = vrsqrt.pop %v650
    %v655 = vrsqrt.pop %v651
    %v656 = vmul.f32 %v608, %v652
    %v657 = vmul.f32 %v609, %v653
    %v658 = vmul.f32 %v610, %v654
    %v659 = vmul.f32 %v611, %v655
    %v661 = vlaneseq
    %v662 = vshrl.u32 %v661, 7
    %v663 = vsub.s32 0, %v662
    %v664 = vrot.slane %v573, %v663
    %v665 = vlaneseq
    %v666 = vshrl.u32 %v665, 7
    %v667 = vsub.s32 1, %v666
    %v668 = vrot.slane %v573, %v667
    %v669 = vlaneseq
    %v670 = vshrl.u32 %v669, 7
    %v671 = vsub.s32 2, %v670
    %v672 = vrot.slane %v573, %v671
    %v673 = vlaneseq
    %v674 = vshrl.u32 %v673, 7
    %v675 = vsub.s32 3, %v674
    %v676 = vrot.slane %v573, %v675
    %v681 = vmul.f32 %v656, %v664
    %v682 = vmul.f32 %v657, %v668
    %v683 = vmul.f32 %v658, %v672
    %v684 = vmul.f32 %v659, %v676
    %v686 = vlaneseq
    %v687 = vshrl.u32 %v686, 7
    %v688 = vsub.s32 0, %v687
    %v689 = vrot.slane %v575, %v688
    %v690 = vlaneseq
    %v691 = vshrl.u32 %v690, 7
    %v692 = vsub.s32 1, %v691
    %v693 = vrot.slane %v575, %v692
    %v694 = vlaneseq
    %v695 = vshrl.u32 %v694, 7
    %v696 = vsub.s32 2, %v695
    %v697 = vrot.slane %v575, %v696
    %v698 = vlaneseq
    %v699 = vshrl.u32 %v698, 7
    %v700 = vsub.s32 3, %v699
    %v701 = vrot.slane %v575, %v700
    %v706 = vadd.f32 %v681, %v689
    %v707 = vadd.f32 %v682, %v693
    %v708 = vadd.f32 %v683, %v697
    %v709 = vadd.f32 %v684, %v701
    %s710 = smul.u32 4, 64
    %s711 = smul.u32 %s710, 8
    %s712 = sshll.u32 %s711, 4
    %713 = dma.done %s81, %s712
    %v714 = vld [vmem:[#allocation3] sm:$0xff]
    %v715 = vld [vmem:[#allocation3 + $0x8] sm:$0xff]
    %v716 = vld [vmem:[#allocation3 + $0x10] sm:$0xff]
    %v717 = vld [vmem:[#allocation3 + $0x18] sm:$0xff]
    %v718 = vld [vmem:[#allocation3 + $0x20] sm:$0xff]
    %v719 = vld [vmem:[#allocation3 + $0x28] sm:$0xff]
    %v720 = vld [vmem:[#allocation3 + $0x30] sm:$0xff]
    %v721 = vld [vmem:[#allocation3 + $0x38] sm:$0xff]
    %v722 = vld [vmem:[#allocation3 + $0x40] sm:$0xff]
    %v723 = vld [vmem:[#allocation3 + $0x48] sm:$0xff]
    %v724 = vld [vmem:[#allocation3 + $0x50] sm:$0xff]
    %v725 = vld [vmem:[#allocation3 + $0x58] sm:$0xff]
    %v726 = vld [vmem:[#allocation3 + $0x60] sm:$0xff]
    %v727 = vld [vmem:[#allocation3 + $0x68] sm:$0xff]
    %v728 = vld [vmem:[#allocation3 + $0x70] sm:$0xff]
    %v729 = vld [vmem:[#allocation3 + $0x78] sm:$0xff]
    %v730 = vld [vmem:[#allocation3 + $0x80] sm:$0xff]
    %v731 = vld [vmem:[#allocation3 + $0x88] sm:$0xff]
    %v732 = vld [vmem:[#allocation3 + $0x90] sm:$0xff]
    %v733 = vld [vmem:[#allocation3 + $0x98] sm:$0xff]
    %v734 = vld [vmem:[#allocation3 + $0xa0] sm:$0xff]
    %v735 = vld [vmem:[#allocation3 + $0xa8] sm:$0xff]
    %v736 = vld [vmem:[#allocation3 + $0xb0] sm:$0xff]
    %v737 = vld [vmem:[#allocation3 + $0xb8] sm:$0xff]
    %v738 = vld [vmem:[#allocation3 + $0xc0] sm:$0xff]
    %v739 = vld [vmem:[#allocation3 + $0xc8] sm:$0xff]
    %v740 = vld [vmem:[#allocation3 + $0xd0] sm:$0xff]
    %v741 = vld [vmem:[#allocation3 + $0xd8] sm:$0xff]
    %v742 = vld [vmem:[#allocation3 + $0xe0] sm:$0xff]
    %v743 = vld [vmem:[#allocation3 + $0xe8] sm:$0xff]
    %v744 = vld [vmem:[#allocation3 + $0xf0] sm:$0xff]
    %v745 = vld [vmem:[#allocation3 + $0xf8] sm:$0xff]
    %v746 = vld [vmem:[#allocation3 + $0x100] sm:$0xff]
    %v747 = vld [vmem:[#allocation3 + $0x108] sm:$0xff]
    %v748 = vld [vmem:[#allocation3 + $0x110] sm:$0xff]
    %v749 = vld [vmem:[#allocation3 + $0x118] sm:$0xff]
    %v750 = vld [vmem:[#allocation3 + $0x120] sm:$0xff]
    %v751 = vld [vmem:[#allocation3 + $0x128] sm:$0xff]
    %v752 = vld [vmem:[#allocation3 + $0x130] sm:$0xff]
    %v753 = vld [vmem:[#allocation3 + $0x138] sm:$0xff]
    %v754 = vld [vmem:[#allocation3 + $0x140] sm:$0xff]
    %v755 = vld [vmem:[#allocation3 + $0x148] sm:$0xff]
    %v756 = vld [vmem:[#allocation3 + $0x150] sm:$0xff]
    %v757 = vld [vmem:[#allocation3 + $0x158] sm:$0xff]
    %v758 = vld [vmem:[#allocation3 + $0x160] sm:$0xff]
    %v759 = vld [vmem:[#allocation3 + $0x168] sm:$0xff]
    %v760 = vld [vmem:[#allocation3 + $0x170] sm:$0xff]
    %v761 = vld [vmem:[#allocation3 + $0x178] sm:$0xff]
    %v762 = vld [vmem:[#allocation3 + $0x180] sm:$0xff]
    %v763 = vld [vmem:[#allocation3 + $0x188] sm:$0xff]
    %v764 = vld [vmem:[#allocation3 + $0x190] sm:$0xff]
    %v765 = vld [vmem:[#allocation3 + $0x198] sm:$0xff]
    %v766 = vld [vmem:[#allocation3 + $0x1a0] sm:$0xff]
    %v767 = vld [vmem:[#allocation3 + $0x1a8] sm:$0xff]
    %v768 = vld [vmem:[#allocation3 + $0x1b0] sm:$0xff]
    %v769 = vld [vmem:[#allocation3 + $0x1b8] sm:$0xff]
    %v770 = vld [vmem:[#allocation3 + $0x1c0] sm:$0xff]
    %v771 = vld [vmem:[#allocation3 + $0x1c8] sm:$0xff]
    %v772 = vld [vmem:[#allocation3 + $0x1d0] sm:$0xff]
    %v773 = vld [vmem:[#allocation3 + $0x1d8] sm:$0xff]
    %v774 = vld [vmem:[#allocation3 + $0x1e0] sm:$0xff]
    %v775 = vld [vmem:[#allocation3 + $0x1e8] sm:$0xff]
    %v776 = vld [vmem:[#allocation3 + $0x1f0] sm:$0xff]
    %v777 = vld [vmem:[#allocation3 + $0x1f8] sm:$0xff]
    %v778 = vld [vmem:[#allocation3 + $0x200] sm:$0xff]
    %v779 = vld [vmem:[#allocation3 + $0x208] sm:$0xff]
    %v780 = vld [vmem:[#allocation3 + $0x210] sm:$0xff]
    %v781 = vld [vmem:[#allocation3 + $0x218] sm:$0xff]
    %v782 = vld [vmem:[#allocation3 + $0x220] sm:$0xff]
    %v783 = vld [vmem:[#allocation3 + $0x228] sm:$0xff]
    %v784 = vld [vmem:[#allocation3 + $0x230] sm:$0xff]
    %v785 = vld [vmem:[#allocation3 + $0x238] sm:$0xff]
    %v786 = vld [vmem:[#allocation3 + $0x240] sm:$0xff]
    %v787 = vld [vmem:[#allocation3 + $0x248] sm:$0xff]
    %v788 = vld [vmem:[#allocation3 + $0x250] sm:$0xff]
    %v789 = vld [vmem:[#allocation3 + $0x258] sm:$0xff]
    %v790 = vld [vmem:[#allocation3 + $0x260] sm:$0xff]
    %v791 = vld [vmem:[#allocation3 + $0x268] sm:$0xff]
    %v792 = vld [vmem:[#allocation3 + $0x270] sm:$0xff]
    %v793 = vld [vmem:[#allocation3 + $0x278] sm:$0xff]
    %v794 = vld [vmem:[#allocation3 + $0x280] sm:$0xff]
    %v795 = vld [vmem:[#allocation3 + $0x288] sm:$0xff]
    %v796 = vld [vmem:[#allocation3 + $0x290] sm:$0xff]
    %v797 = vld [vmem:[#allocation3 + $0x298] sm:$0xff]
    %v798 = vld [vmem:[#allocation3 + $0x2a0] sm:$0xff]
    %v799 = vld [vmem:[#allocation3 + $0x2a8] sm:$0xff]
    %v800 = vld [vmem:[#allocation3 + $0x2b0] sm:$0xff]
    %v801 = vld [vmem:[#allocation3 + $0x2b8] sm:$0xff]
    %v802 = vld [vmem:[#allocation3 + $0x2c0] sm:$0xff]
    %v803 = vld [vmem:[#allocation3 + $0x2c8] sm:$0xff]
    %v804 = vld [vmem:[#allocation3 + $0x2d0] sm:$0xff]
    %v805 = vld [vmem:[#allocation3 + $0x2d8] sm:$0xff]
    %v806 = vld [vmem:[#allocation3 + $0x2e0] sm:$0xff]
    %v807 = vld [vmem:[#allocation3 + $0x2e8] sm:$0xff]
    %v808 = vld [vmem:[#allocation3 + $0x2f0] sm:$0xff]
    %v809 = vld [vmem:[#allocation3 + $0x2f8] sm:$0xff]
    %v810 = vld [vmem:[#allocation3 + $0x300] sm:$0xff]
    %v811 = vld [vmem:[#allocation3 + $0x308] sm:$0xff]
    %v812 = vld [vmem:[#allocation3 + $0x310] sm:$0xff]
    %v813 = vld [vmem:[#allocation3 + $0x318] sm:$0xff]
    %v814 = vld [vmem:[#allocation3 + $0x320] sm:$0xff]
    %v815 = vld [vmem:[#allocation3 + $0x328] sm:$0xff]
    %v816 = vld [vmem:[#allocation3 + $0x330] sm:$0xff]
    %v817 = vld [vmem:[#allocation3 + $0x338] sm:$0xff]
    %v818 = vld [vmem:[#allocation3 + $0x340] sm:$0xff]
    %v819 = vld [vmem:[#allocation3 + $0x348] sm:$0xff]
    %v820 = vld [vmem:[#allocation3 + $0x350] sm:$0xff]
    %v821 = vld [vmem:[#allocation3 + $0x358] sm:$0xff]
    %v822 = vld [vmem:[#allocation3 + $0x360] sm:$0xff]
    %v823 = vld [vmem:[#allocation3 + $0x368] sm:$0xff]
    %v824 = vld [vmem:[#allocation3 + $0x370] sm:$0xff]
    %v825 = vld [vmem:[#allocation3 + $0x378] sm:$0xff]
    %v826 = vld [vmem:[#allocation3 + $0x380] sm:$0xff]
    %v827 = vld [vmem:[#allocation3 + $0x388] sm:$0xff]
    %v828 = vld [vmem:[#allocation3 + $0x390] sm:$0xff]
    %v829 = vld [vmem:[#allocation3 + $0x398] sm:$0xff]
    %v830 = vld [vmem:[#allocation3 + $0x3a0] sm:$0xff]
    %v831 = vld [vmem:[#allocation3 + $0x3a8] sm:$0xff]
    %v832 = vld [vmem:[#allocation3 + $0x3b0] sm:$0xff]
    %v833 = vld [vmem:[#allocation3 + $0x3b8] sm:$0xff]
    %v834 = vld [vmem:[#allocation3 + $0x3c0] sm:$0xff]
    %v835 = vld [vmem:[#allocation3 + $0x3c8] sm:$0xff]
    %v836 = vld [vmem:[#allocation3 + $0x3d0] sm:$0xff]
    %v837 = vld [vmem:[#allocation3 + $0x3d8] sm:$0xff]
    %v838 = vld [vmem:[#allocation3 + $0x3e0] sm:$0xff]
    %v839 = vld [vmem:[#allocation3 + $0x3e8] sm:$0xff]
    %v840 = vld [vmem:[#allocation3 + $0x3f0] sm:$0xff]
    %v841 = vld [vmem:[#allocation3 + $0x3f8] sm:$0xff]
    %v842 = vld [vmem:[#allocation3 + $0x400] sm:$0xff]
    %v843 = vld [vmem:[#allocation3 + $0x408] sm:$0xff]
    %v844 = vld [vmem:[#allocation3 + $0x410] sm:$0xff]
    %v845 = vld [vmem:[#allocation3 + $0x418] sm:$0xff]
    %v846 = vld [vmem:[#allocation3 + $0x420] sm:$0xff]
    %v847 = vld [vmem:[#allocation3 + $0x428] sm:$0xff]
    %v848 = vld [vmem:[#allocation3 + $0x430] sm:$0xff]
    %v849 = vld [vmem:[#allocation3 + $0x438] sm:$0xff]
    %v850 = vld [vmem:[#allocation3 + $0x440] sm:$0xff]
    %v851 = vld [vmem:[#allocation3 + $0x448] sm:$0xff]
    %v852 = vld [vmem:[#allocation3 + $0x450] sm:$0xff]
    %v853 = vld [vmem:[#allocation3 + $0x458] sm:$0xff]
    %v854 = vld [vmem:[#allocation3 + $0x460] sm:$0xff]
    %v855 = vld [vmem:[#allocation3 + $0x468] sm:$0xff]
    %v856 = vld [vmem:[#allocation3 + $0x470] sm:$0xff]
    %v857 = vld [vmem:[#allocation3 + $0x478] sm:$0xff]
    %v858 = vld [vmem:[#allocation3 + $0x480] sm:$0xff]
    %v859 = vld [vmem:[#allocation3 + $0x488] sm:$0xff]
    %v860 = vld [vmem:[#allocation3 + $0x490] sm:$0xff]
    %v861 = vld [vmem:[#allocation3 + $0x498] sm:$0xff]
    %v862 = vld [vmem:[#allocation3 + $0x4a0] sm:$0xff]
    %v863 = vld [vmem:[#allocation3 + $0x4a8] sm:$0xff]
    %v864 = vld [vmem:[#allocation3 + $0x4b0] sm:$0xff]
    %v865 = vld [vmem:[#allocation3 + $0x4b8] sm:$0xff]
    %v866 = vld [vmem:[#allocation3 + $0x4c0] sm:$0xff]
    %v867 = vld [vmem:[#allocation3 + $0x4c8] sm:$0xff]
    %v868 = vld [vmem:[#allocation3 + $0x4d0] sm:$0xff]
    %v869 = vld [vmem:[#allocation3 + $0x4d8] sm:$0xff]
    %v870 = vld [vmem:[#allocation3 + $0x4e0] sm:$0xff]
    %v871 = vld [vmem:[#allocation3 + $0x4e8] sm:$0xff]
    %v872 = vld [vmem:[#allocation3 + $0x4f0] sm:$0xff]
    %v873 = vld [vmem:[#allocation3 + $0x4f8] sm:$0xff]
    %v874 = vld [vmem:[#allocation3 + $0x500] sm:$0xff]
    %v875 = vld [vmem:[#allocation3 + $0x508] sm:$0xff]
    %v876 = vld [vmem:[#allocation3 + $0x510] sm:$0xff]
    %v877 = vld [vmem:[#allocation3 + $0x518] sm:$0xff]
    %v878 = vld [vmem:[#allocation3 + $0x520] sm:$0xff]
    %v879 = vld [vmem:[#allocation3 + $0x528] sm:$0xff]
    %v880 = vld [vmem:[#allocation3 + $0x530] sm:$0xff]
    %v881 = vld [vmem:[#allocation3 + $0x538] sm:$0xff]
    %v882 = vld [vmem:[#allocation3 + $0x540] sm:$0xff]
    %v883 = vld [vmem:[#allocation3 + $0x548] sm:$0xff]
    %v884 = vld [vmem:[#allocation3 + $0x550] sm:$0xff]
    %v885 = vld [vmem:[#allocation3 + $0x558] sm:$0xff]
    %v886 = vld [vmem:[#allocation3 + $0x560] sm:$0xff]
    %v887 = vld [vmem:[#allocation3 + $0x568] sm:$0xff]
    %v888 = vld [vmem:[#allocation3 + $0x570] sm:$0xff]
    %v889 = vld [vmem:[#allocation3 + $0x578] sm:$0xff]
    %v890 = vld [vmem:[#allocation3 + $0x580] sm:$0xff]
    %v891 = vld [vmem:[#allocation3 + $0x588] sm:$0xff]
    %v892 = vld [vmem:[#allocation3 + $0x590] sm:$0xff]
    %v893 = vld [vmem:[#allocation3 + $0x598] sm:$0xff]
    %v894 = vld [vmem:[#allocation3 + $0x5a0] sm:$0xff]
    %v895 = vld [vmem:[#allocation3 + $0x5a8] sm:$0xff]
    %v896 = vld [vmem:[#allocation3 + $0x5b0] sm:$0xff]
    %v897 = vld [vmem:[#allocation3 + $0x5b8] sm:$0xff]
    %v898 = vld [vmem:[#allocation3 + $0x5c0] sm:$0xff]
    %v899 = vld [vmem:[#allocation3 + $0x5c8] sm:$0xff]
    %v900 = vld [vmem:[#allocation3 + $0x5d0] sm:$0xff]
    %v901 = vld [vmem:[#allocation3 + $0x5d8] sm:$0xff]
    %v902 = vld [vmem:[#allocation3 + $0x5e0] sm:$0xff]
    %v903 = vld [vmem:[#allocation3 + $0x5e8] sm:$0xff]
    %v904 = vld [vmem:[#allocation3 + $0x5f0] sm:$0xff]
    %v905 = vld [vmem:[#allocation3 + $0x5f8] sm:$0xff]
    %v906 = vld [vmem:[#allocation3 + $0x600] sm:$0xff]
    %v907 = vld [vmem:[#allocation3 + $0x608] sm:$0xff]
    %v908 = vld [vmem:[#allocation3 + $0x610] sm:$0xff]
    %v909 = vld [vmem:[#allocation3 + $0x618] sm:$0xff]
    %v910 = vld [vmem:[#allocation3 + $0x620] sm:$0xff]
    %v911 = vld [vmem:[#allocation3 + $0x628] sm:$0xff]
    %v912 = vld [vmem:[#allocation3 + $0x630] sm:$0xff]
    %v913 = vld [vmem:[#allocation3 + $0x638] sm:$0xff]
    %v914 = vld [vmem:[#allocation3 + $0x640] sm:$0xff]
    %v915 = vld [vmem:[#allocation3 + $0x648] sm:$0xff]
    %v916 = vld [vmem:[#allocation3 + $0x650] sm:$0xff]
    %v917 = vld [vmem:[#allocation3 + $0x658] sm:$0xff]
    %v918 = vld [vmem:[#allocation3 + $0x660] sm:$0xff]
    %v919 = vld [vmem:[#allocation3 + $0x668] sm:$0xff]
    %v920 = vld [vmem:[#allocation3 + $0x670] sm:$0xff]
    %v921 = vld [vmem:[#allocation3 + $0x678] sm:$0xff]
    %v922 = vld [vmem:[#allocation3 + $0x680] sm:$0xff]
    %v923 = vld [vmem:[#allocation3 + $0x688] sm:$0xff]
    %v924 = vld [vmem:[#allocation3 + $0x690] sm:$0xff]
    %v925 = vld [vmem:[#allocation3 + $0x698] sm:$0xff]
    %v926 = vld [vmem:[#allocation3 + $0x6a0] sm:$0xff]
    %v927 = vld [vmem:[#allocation3 + $0x6a8] sm:$0xff]
    %v928 = vld [vmem:[#allocation3 + $0x6b0] sm:$0xff]
    %v929 = vld [vmem:[#allocation3 + $0x6b8] sm:$0xff]
    %v930 = vld [vmem:[#allocation3 + $0x6c0] sm:$0xff]
    %v931 = vld [vmem:[#allocation3 + $0x6c8] sm:$0xff]
    %v932 = vld [vmem:[#allocation3 + $0x6d0] sm:$0xff]
    %v933 = vld [vmem:[#allocation3 + $0x6d8] sm:$0xff]
    %v934 = vld [vmem:[#allocation3 + $0x6e0] sm:$0xff]
    %v935 = vld [vmem:[#allocation3 + $0x6e8] sm:$0xff]
    %v936 = vld [vmem:[#allocation3 + $0x6f0] sm:$0xff]
    %v937 = vld [vmem:[#allocation3 + $0x6f8] sm:$0xff]
    %v938 = vld [vmem:[#allocation3 + $0x700] sm:$0xff]
    %v939 = vld [vmem:[#allocation3 + $0x708] sm:$0xff]
    %v940 = vld [vmem:[#allocation3 + $0x710] sm:$0xff]
    %v941 = vld [vmem:[#allocation3 + $0x718] sm:$0xff]
    %v942 = vld [vmem:[#allocation3 + $0x720] sm:$0xff]
    %v943 = vld [vmem:[#allocation3 + $0x728] sm:$0xff]
    %v944 = vld [vmem:[#allocation3 + $0x730] sm:$0xff]
    %v945 = vld [vmem:[#allocation3 + $0x738] sm:$0xff]
    %v946 = vld [vmem:[#allocation3 + $0x740] sm:$0xff]
    %v947 = vld [vmem:[#allocation3 + $0x748] sm:$0xff]
    %v948 = vld [vmem:[#allocation3 + $0x750] sm:$0xff]
    %v949 = vld [vmem:[#allocation3 + $0x758] sm:$0xff]
    %v950 = vld [vmem:[#allocation3 + $0x760] sm:$0xff]
    %v951 = vld [vmem:[#allocation3 + $0x768] sm:$0xff]
    %v952 = vld [vmem:[#allocation3 + $0x770] sm:$0xff]
    %v953 = vld [vmem:[#allocation3 + $0x778] sm:$0xff]
    %v954 = vld [vmem:[#allocation3 + $0x780] sm:$0xff]
    %v955 = vld [vmem:[#allocation3 + $0x788] sm:$0xff]
    %v956 = vld [vmem:[#allocation3 + $0x790] sm:$0xff]
    %v957 = vld [vmem:[#allocation3 + $0x798] sm:$0xff]
    %v958 = vld [vmem:[#allocation3 + $0x7a0] sm:$0xff]
    %v959 = vld [vmem:[#allocation3 + $0x7a8] sm:$0xff]
    %v960 = vld [vmem:[#allocation3 + $0x7b0] sm:$0xff]
    %v961 = vld [vmem:[#allocation3 + $0x7b8] sm:$0xff]
    %v962 = vld [vmem:[#allocation3 + $0x7c0] sm:$0xff]
    %v963 = vld [vmem:[#allocation3 + $0x7c8] sm:$0xff]
    %v964 = vld [vmem:[#allocation3 + $0x7d0] sm:$0xff]
    %v965 = vld [vmem:[#allocation3 + $0x7d8] sm:$0xff]
    %v966 = vld [vmem:[#allocation3 + $0x7e0] sm:$0xff]
    %v967 = vld [vmem:[#allocation3 + $0x7e8] sm:$0xff]
    %v968 = vld [vmem:[#allocation3 + $0x7f0] sm:$0xff]
    %v969 = vld [vmem:[#allocation3 + $0x7f8] sm:$0xff]
    %s970 = scalar_lea.vmem [#allocation8], 6
    %v971 = vld [vmem:[%s970] ss:$8 sm:$0xf]
    %v972 = vld [vmem:[%s970] ss:$8 sm:$0xf0]
    %v973 = vor.u32 %v971, %v972
    %v974 = vpack.c.bf16 %v706, %v706
    %v975 = vpack.c.bf16 %v707, %v707
    %v976 = vpack.c.bf16 %v708, %v708
    %v977 = vpack.c.bf16 %v709, %v709
    %v979 = vlaneseq
    %v980 = vshrl.u32 %v979, 7
    %v981 = vsub.s32 0, %v980
    %v982 = vrot.slane %v973, %v981
    %v983 = vlaneseq
    %v984 = vshrl.u32 %v983, 7
    %v985 = vsub.s32 1, %v984
    %v986 = vrot.slane %v973, %v985
    %v987 = vlaneseq
    %v988 = vshrl.u32 %v987, 7
    %v989 = vsub.s32 2, %v988
    %v990 = vrot.slane %v973, %v989
    %v991 = vlaneseq
    %v992 = vshrl.u32 %v991, 7
    %v993 = vsub.s32 3, %v992
    %v994 = vrot.slane %v973, %v993
    %v995 = vlaneseq
    %v996 = vshrl.u32 %v995, 7
    %v997 = vsub.s32 4, %v996
    %v998 = vrot.slane %v973, %v997
    %v999 = vlaneseq
    %v1000 = vshrl.u32 %v999, 7
    %v1001 = vsub.s32 5, %v1000
    %v1002 = vrot.slane %v973, %v1001
    %v1003 = vlaneseq
    %v1004 = vshrl.u32 %v1003, 7
    %v1005 = vsub.s32 6, %v1004
    %v1006 = vrot.slane %v973, %v1005
    %v1007 = vlaneseq
    %v1008 = vshrl.u32 %v1007, 7
    %v1009 = vsub.s32 7, %v1008
    %v1010 = vrot.slane %v973, %v1009
    %1019 = vmatprep.subr.bf16.mxu0 %v715
    %1020 = vmatpush1.bf16.msra.mxu0 %v714
    %1021 = vmatprep.subr.bf16.mxu0 %v723
    %1022 = vmatpush1.bf16.msra.mxu0 %v722
    %1023 = vmatprep.subr.bf16.mxu0 %v731
    %1024 = vmatpush1.bf16.msra.mxu0 %v730
    %1025 = vmatprep.subr.bf16.mxu0 %v739
    %1026 = vmatpush1.bf16.msra.mxu0 %v738
    %1027 = vmatprep.subr.bf16.mxu0 %v747
    %1028 = vmatpush1.bf16.msra.mxu0 %v746
    %1029 = vmatprep.subr.bf16.mxu0 %v755
    %1030 = vmatpush1.bf16.msra.mxu0 %v754
    %1031 = vmatprep.subr.bf16.mxu0 %v763
    %1032 = vmatpush1.bf16.msra.mxu0 %v762
    %1033 = vmatprep.subr.bf16.mxu0 %v771
    %1034 = vmatpush1.bf16.msra.mxu0 %v770
    %1035 = vmatprep.subr.bf16.mxu0 %v779
    %1036 = vmatpush1.bf16.msra.mxu0 %v778
    %1037 = vmatprep.subr.bf16.mxu0 %v787
    %1038 = vmatpush1.bf16.msra.mxu0 %v786
    %1039 = vmatprep.subr.bf16.mxu0 %v795
    %1040 = vmatpush1.bf16.msra.mxu0 %v794
    %1041 = vmatprep.subr.bf16.mxu0 %v803
    %1042 = vmatpush1.bf16.msra.mxu0 %v802
    %1043 = vmatprep.subr.bf16.mxu0 %v811
    %1044 = vmatpush1.bf16.msra.mxu0 %v810
    %1045 = vmatprep.subr.bf16.mxu0 %v819
    %1046 = vmatpush1.bf16.msra.mxu0 %v818
    %1047 = vmatprep.subr.bf16.mxu0 %v827
    %1048 = vmatpush1.bf16.msra.mxu0 %v826
    %1049 = vmatprep.subr.bf16.mxu0 %v835
    %1050 = vmatpush1.bf16.msra.mxu0 %v834
    %1051 = vmatprep.mubr.bf16.mxu0 %v975
    %1052 = vmatmul.mubr.bf16.gmra.mrb[0].mxu0 %v974
    %v1053 = vpop.f32.mrb[0].mxu0
    %v1054 = vadd.f32 %v982, %v1053
    %v1055 = vpop.f32.mrb[0].mxu0
    %v1056 = vadd.f32 %v986, %v1055
    %v1057 = vpop.f32.mrb[0].mxu0
    %v1058 = vpop.f32.mrb[0].mxu0
    %1059 = vdwg.mxu0
    %1060 = vmatprep.subr.bf16.mxu0 %v843
    %1061 = vmatpush1.bf16.msra.mxu0 %v842
    %1062 = vmatprep.subr.bf16.mxu0 %v851
    %1063 = vmatpush1.bf16.msra.mxu0 %v850
    %1064 = vmatprep.subr.bf16.mxu0 %v859
    %1065 = vmatpush1.bf16.msra.mxu0 %v858
    %1066 = vmatprep.subr.bf16.mxu0 %v867
    %1067 = vmatpush1.bf16.msra.mxu0 %v866
    %1068 = vmatprep.subr.bf16.mxu0 %v875
    %1069 = vmatpush1.bf16.msra.mxu0 %v874
    %1070 = vmatprep.subr.bf16.mxu0 %v883
    %1071 = vmatpush1.bf16.msra.mxu0 %v882
    %1072 = vmatprep.subr.bf16.mxu0 %v891
    %1073 = vmatpush1.bf16.msra.mxu0 %v890
    %1074 = vmatprep.subr.bf16.mxu0 %v899
    %1075 = vmatpush1.bf16.msra.mxu0 %v898
    %1076 = vmatprep.subr.bf16.mxu0 %v907
    %1077 = vmatpush1.bf16.msra.mxu0 %v906
    %1078 = vmatprep.subr.bf16.mxu0 %v915
    %1079 = vmatpush1.bf16.msra.mxu0 %v914
    %1080 = vmatprep.subr.bf16.mxu0 %v923
    %1081 = vmatpush1.bf16.msra.mxu0 %v922
    %1082 = vmatprep.subr.bf16.mxu0 %v931
    %1083 = vmatpush1.bf16.msra.mxu0 %v930
    %1084 = vmatprep.subr.bf16.mxu0 %v939
    %1085 = vmatpush1.bf16.msra.mxu0 %v938
    %1086 = vmatprep.subr.bf16.mxu0 %v947
    %1087 = vmatpush1.bf16.msra.mxu0 %v946
    %1088 = vmatprep.subr.bf16.mxu0 %v955
    %1089 = vmatpush1.bf16.msra.mxu0 %v954
    %1090 = vmatprep.subr.bf16.mxu0 %v963
    %1091 = vmatpush1.bf16.msra.mxu0 %v962
    %1092 = vmatprep.mubr.bf16.mxu0 %v977
    %1093 = vmatmul.mubr.bf16.gmra.mrb[0].mxu0 %v976
    %v1094 = vpop.f32.mrb[0].mxu0
    %v1095 = vadd.f32 %v1054, %v1094
    %v1096 = vpop.f32.mrb[0].mxu0
    %v1097 = vadd.f32 %v1056, %v1096
    %v1098 = vpop.f32.mrb[0].mxu0
    %v1099 = vpop.f32.mrb[0].mxu0
    %1100 = vdwg.mxu0
    %1101 = vmatprep.subr.bf16.mxu0 %v717
    %1102 = vmatpush1.bf16.msra.mxu0 %v716
    %1103 = vmatprep.subr.bf16.mxu0 %v725
    %1104 = vmatpush1.bf16.msra.mxu0 %v724
    %1105 = vmatprep.subr.bf16.mxu0 %v733
    %1106 = vmatpush1.bf16.msra.mxu0 %v732
    %1107 = vmatprep.subr.bf16.mxu0 %v741
    %1108 = vmatpush1.bf16.msra.mxu0 %v740
    %1109 = vmatprep.subr.bf16.mxu0 %v749
    %1110 = vmatpush1.bf16.msra.mxu0 %v748
    %1111 = vmatprep.subr.bf16.mxu0 %v757
    %1112 = vmatpush1.bf16.msra.mxu0 %v756
    %1113 = vmatprep.subr.bf16.mxu0 %v765
    %1114 = vmatpush1.bf16.msra.mxu0 %v764
    %1115 = vmatprep.subr.bf16.mxu0 %v773
    %1116 = vmatpush1.bf16.msra.mxu0 %v772
    %1117 = vmatprep.subr.bf16.mxu0 %v781
    %1118 = vmatpush1.bf16.msra.mxu0 %v780
    %1119 = vmatprep.subr.bf16.mxu0 %v789
    %1120 = vmatpush1.bf16.msra.mxu0 %v788
    %1121 = vmatprep.subr.bf16.mxu0 %v797
    %1122 = vmatpush1.bf16.msra.mxu0 %v796
    %1123 = vmatprep.subr.bf16.mxu0 %v805
    %1124 = vmatpush1.bf16.msra.mxu0 %v804
    %1125 = vmatprep.subr.bf16.mxu0 %v813
    %1126 = vmatpush1.bf16.msra.mxu0 %v812
    %1127 = vmatprep.subr.bf16.mxu0 %v821
    %1128 = vmatpush1.bf16.msra.mxu0 %v820
    %1129 = vmatprep.subr.bf16.mxu0 %v829
    %1130 = vmatpush1.bf16.msra.mxu0 %v828
    %1131 = vmatprep.subr.bf16.mxu0 %v837
    %1132 = vmatpush1.bf16.msra.mxu0 %v836
    %1133 = vmatprep.mubr.bf16.mxu0 %v975
    %1134 = vmatmul.mubr.bf16.gmra.mrb[0].mxu0 %v974
    %v1135 = vpop.f32.mrb[0].mxu0
    %v1136 = vadd.f32 %v990, %v1135
    %v1137 = vpop.f32.mrb[0].mxu0
    %v1138 = vadd.f32 %v994, %v1137
    %v1139 = vpop.f32.mrb[0].mxu0
    %v1140 = vpop.f32.mrb[0].mxu0
    %1141 = vdwg.mxu0
    %1142 = vmatprep.subr.bf16.mxu0 %v845
    %1143 = vmatpush1.bf16.msra.mxu0 %v844
    %1144 = vmatprep.subr.bf16.mxu0 %v853
    %1145 = vmatpush1.bf16.msra.mxu0 %v852
    %1146 = vmatprep.subr.bf16.mxu0 %v861
    %1147 = vmatpush1.bf16.msra.mxu0 %v860
    %1148 = vmatprep.subr.bf16.mxu0 %v869
    %1149 = vmatpush1.bf16.msra.mxu0 %v868
    %1150 = vmatprep.subr.bf16.mxu0 %v877
    %1151 = vmatpush1.bf16.msra.mxu0 %v876
    %1152 = vmatprep.subr.bf16.mxu0 %v885
    %1153 = vmatpush1.bf16.msra.mxu0 %v884
    %1154 = vmatprep.subr.bf16.mxu0 %v893
    %1155 = vmatpush1.bf16.msra.mxu0 %v892
    %1156 = vmatprep.subr.bf16.mxu0 %v901
    %1157 = vmatpush1.bf16.msra.mxu0 %v900
    %1158 = vmatprep.subr.bf16.mxu0 %v909
    %1159 = vmatpush1.bf16.msra.mxu0 %v908
    %1160 = vmatprep.subr.bf16.mxu0 %v917
    %1161 = vmatpush1.bf16.msra.mxu0 %v916
    %1162 = vmatprep.subr.bf16.mxu0 %v925
    %1163 = vmatpush1.bf16.msra.mxu0 %v924
    %1164 = vmatprep.subr.bf16.mxu0 %v933
    %1165 = vmatpush1.bf16.msra.mxu0 %v932
    %1166 = vmatprep.subr.bf16.mxu0 %v941
    %1167 = vmatpush1.bf16.msra.mxu0 %v940
    %1168 = vmatprep.subr.bf16.mxu0 %v949
    %1169 = vmatpush1.bf16.msra.mxu0 %v948
    %1170 = vmatprep.subr.bf16.mxu0 %v957
    %1171 = vmatpush1.bf16.msra.mxu0 %v956
    %1172 = vmatprep.subr.bf16.mxu0 %v965
    %1173 = vmatpush1.bf16.msra.mxu0 %v964
    %1174 = vmatprep.mubr.bf16.mxu0 %v977
    %1175 = vmatmul.mubr.bf16.gmra.mrb[0].mxu0 %v976
    %v1176 = vpop.f32.mrb[0].mxu0
    %v1177 = vadd.f32 %v1136, %v1176
    %v1178 = vpop.f32.mrb[0].mxu0
    %v1179 = vadd.f32 %v1138, %v1178
    %v1180 = vpop.f32.mrb[0].mxu0
    %v1181 = vpop.f32.mrb[0].mxu0
    %1182 = vdwg.mxu0
    %1183 = vmatprep.subr.bf16.mxu0 %v719
    %1184 = vmatpush1.bf16.msra.mxu0 %v718
    %1185 = vmatprep.subr.bf16.mxu0 %v727
    %1186 = vmatpush1.bf16.msra.mxu0 %v726
    %1187 = vmatprep.subr.bf16.mxu0 %v735
    %1188 = vmatpush1.bf16.msra.mxu0 %v734
    %1189 = vmatprep.subr.bf16.mxu0 %v743
    %1190 = vmatpush1.bf16.msra.mxu0 %v742
    %1191 = vmatprep.subr.bf16.mxu0 %v751
    %1192 = vmatpush1.bf16.msra.mxu0 %v750
    %1193 = vmatprep.subr.bf16.mxu0 %v759
    %1194 = vmatpush1.bf16.msra.mxu0 %v758
    %1195 = vmatprep.subr.bf16.mxu0 %v767
    %1196 = vmatpush1.bf16.msra.mxu0 %v766
    %1197 = vmatprep.subr.bf16.mxu0 %v775
    %1198 = vmatpush1.bf16.msra.mxu0 %v774
    %1199 = vmatprep.subr.bf16.mxu0 %v783
    %1200 = vmatpush1.bf16.msra.mxu0 %v782
    %1201 = vmatprep.subr.bf16.mxu0 %v791
    %1202 = vmatpush1.bf16.msra.mxu0 %v790
    %1203 = vmatprep.subr.bf16.mxu0 %v799
    %1204 = vmatpush1.bf16.msra.mxu0 %v798
    %1205 = vmatprep.subr.bf16.mxu0 %v807
    %1206 = vmatpush1.bf16.msra.mxu0 %v806
    %1207 = vmatprep.subr.bf16.mxu0 %v815
    %1208 = vmatpush1.bf16.msra.mxu0 %v814
    %1209 = vmatprep.subr.bf16.mxu0 %v823
    %1210 = vmatpush1.bf16.msra.mxu0 %v822
    %1211 = vmatprep.subr.bf16.mxu0 %v831
    %1212 = vmatpush1.bf16.msra.mxu0 %v830
    %1213 = vmatprep.subr.bf16.mxu0 %v839
    %1214 = vmatpush1.bf16.msra.mxu0 %v838
    %1215 = vmatprep.mubr.bf16.mxu0 %v975
    %1216 = vmatmul.mubr.bf16.gmra.mrb[0].mxu0 %v974
    %v1217 = vpop.f32.mrb[0].mxu0
    %v1218 = vadd.f32 %v998, %v1217
    %v1219 = vpop.f32.mrb[0].mxu0
    %v1220 = vadd.f32 %v1002, %v1219
    %v1221 = vpop.f32.mrb[0].mxu0
    %v1222 = vpop.f32.mrb[0].mxu0
    %1223 = vdwg.mxu0
    %1224 = vmatprep.subr.bf16.mxu0 %v847
    %1225 = vmatpush1.bf16.msra.mxu0 %v846
    %1226 = vmatprep.subr.bf16.mxu0 %v855
    %1227 = vmatpush1.bf16.msra.mxu0 %v854
    %1228 = vmatprep.subr.bf16.mxu0 %v863
    %1229 = vmatpush1.bf16.msra.mxu0 %v862
    %1230 = vmatprep.subr.bf16.mxu0 %v871
    %1231 = vmatpush1.bf16.msra.mxu0 %v870
    %1232 = vmatprep.subr.bf16.mxu0 %v879
    %1233 = vmatpush1.bf16.msra.mxu0 %v878
    %1234 = vmatprep.subr.bf16.mxu0 %v887
    %1235 = vmatpush1.bf16.msra.mxu0 %v886
    %1236 = vmatprep.subr.bf16.mxu0 %v895
    %1237 = vmatpush1.bf16.msra.mxu0 %v894
    %1238 = vmatprep.subr.bf16.mxu0 %v903
    %1239 = vmatpush1.bf16.msra.mxu0 %v902
    %1240 = vmatprep.subr.bf16.mxu0 %v911
    %1241 = vmatpush1.bf16.msra.mxu0 %v910
    %1242 = vmatprep.subr.bf16.mxu0 %v919
    %1243 = vmatpush1.bf16.msra.mxu0 %v918
    %1244 = vmatprep.subr.bf16.mxu0 %v927
    %1245 = vmatpush1.bf16.msra.mxu0 %v926
    %1246 = vmatprep.subr.bf16.mxu0 %v935
    %1247 = vmatpush1.bf16.msra.mxu0 %v934
    %1248 = vmatprep.subr.bf16.mxu0 %v943
    %1249 = vmatpush1.bf16.msra.mxu0 %v942
    %1250 = vmatprep.subr.bf16.mxu0 %v951
    %1251 = vmatpush1.bf16.msra.mxu0 %v950
    %1252 = vmatprep.subr.bf16.mxu0 %v959
    %1253 = vmatpush1.bf16.msra.mxu0 %v958
    %1254 = vmatprep.subr.bf16.mxu0 %v967
    %1255 = vmatpush1.bf16.msra.mxu0 %v966
    %1256 = vmatprep.mubr.bf16.mxu0 %v977
    %1257 = vmatmul.mubr.bf16.gmra.mrb[0].mxu0 %v976
    %v1258 = vpop.f32.mrb[0].mxu0
    %v1259 = vadd.f32 %v1218, %v1258
    %v1260 = vpop.f32.mrb[0].mxu0
    %v1261 = vadd.f32 %v1220, %v1260
    %v1262 = vpop.f32.mrb[0].mxu0
    %v1263 = vpop.f32.mrb[0].mxu0
    %1264 = vdwg.mxu0
    %1265 = vmatprep.subr.bf16.mxu0 %v721
    %1266 = vmatpush1.bf16.msra.mxu0 %v720
    %1267 = vmatprep.subr.bf16.mxu0 %v729
    %1268 = vmatpush1.bf16.msra.mxu0 %v728
    %1269 = vmatprep.subr.bf16.mxu0 %v737
    %1270 = vmatpush1.bf16.msra.mxu0 %v736
    %1271 = vmatprep.subr.bf16.mxu0 %v745
    %1272 = vmatpush1.bf16.msra.mxu0 %v744
    %1273 = vmatprep.subr.bf16.mxu0 %v753
    %1274 = vmatpush1.bf16.msra.mxu0 %v752
    %1275 = vmatprep.subr.bf16.mxu0 %v761
    %1276 = vmatpush1.bf16.msra.mxu0 %v760
    %1277 = vmatprep.subr.bf16.mxu0 %v769
    %1278 = vmatpush1.bf16.msra.mxu0 %v768
    %1279 = vmatprep.subr.bf16.mxu0 %v777
    %1280 = vmatpush1.bf16.msra.mxu0 %v776
    %1281 = vmatprep.subr.bf16.mxu0 %v785
    %1282 = vmatpush1.bf16.msra.mxu0 %v784
    %1283 = vmatprep.subr.bf16.mxu0 %v793
    %1284 = vmatpush1.bf16.msra.mxu0 %v792
    %1285 = vmatprep.subr.bf16.mxu0 %v801
    %1286 = vmatpush1.bf16.msra.mxu0 %v800
    %1287 = vmatprep.subr.bf16.mxu0 %v809
    %1288 = vmatpush1.bf16.msra.mxu0 %v808
    %1289 = vmatprep.subr.bf16.mxu0 %v817
    %1290 = vmatpush1.bf16.msra.mxu0 %v816
    %1291 = vmatprep.subr.bf16.mxu0 %v825
    %1292 = vmatpush1.bf16.msra.mxu0 %v824
    %1293 = vmatprep.subr.bf16.mxu0 %v833
    %1294 = vmatpush1.bf16.msra.mxu0 %v832
    %1295 = vmatprep.subr.bf16.mxu0 %v841
    %1296 = vmatpush1.bf16.msra.mxu0 %v840
    %1297 = vmatprep.mubr.bf16.mxu0 %v975
    %1298 = vmatmul.mubr.bf16.gmra.mrb[0].mxu0 %v974
    %v1299 = vpop.f32.mrb[0].mxu0
    %v1300 = vadd.f32 %v1006, %v1299
    %v1301 = vpop.f32.mrb[0].mxu0
    %v1302 = vadd.f32 %v1010, %v1301
    %v1303 = vpop.f32.mrb[0].mxu0
    %v1304 = vpop.f32.mrb[0].mxu0
    %1305 = vdwg.mxu0
    %1306 = vmatprep.subr.bf16.mxu0 %v849
    %1307 = vmatpush1.bf16.msra.mxu0 %v848
    %1308 = vmatprep.subr.bf16.mxu0 %v857
    %1309 = vmatpush1.bf16.msra.mxu0 %v856
    %1310 = vmatprep.subr.bf16.mxu0 %v865
    %1311 = vmatpush1.bf16.msra.mxu0 %v864
    %1312 = vmatprep.subr.bf16.mxu0 %v873
    %1313 = vmatpush1.bf16.msra.mxu0 %v872
    %1314 = vmatprep.subr.bf16.mxu0 %v881
    %1315 = vmatpush1.bf16.msra.mxu0 %v880
    %1316 = vmatprep.subr.bf16.mxu0 %v889
    %1317 = vmatpush1.bf16.msra.mxu0 %v888
    %1318 = vmatprep.subr.bf16.mxu0 %v897
    %1319 = vmatpush1.bf16.msra.mxu0 %v896
    %1320 = vmatprep.subr.bf16.mxu0 %v905
    %1321 = vmatpush1.bf16.msra.mxu0 %v904
    %1322 = vmatprep.subr.bf16.mxu0 %v913
    %1323 = vmatpush1.bf16.msra.mxu0 %v912
    %1324 = vmatprep.subr.bf16.mxu0 %v921
    %1325 = vmatpush1.bf16.msra.mxu0 %v920
    %1326 = vmatprep.subr.bf16.mxu0 %v929
    %1327 = vmatpush1.bf16.msra.mxu0 %v928
    %1328 = vmatprep.subr.bf16.mxu0 %v937
    %1329 = vmatpush1.bf16.msra.mxu0 %v936
    %1330 = vmatprep.subr.bf16.mxu0 %v945
    %1331 = vmatpush1.bf16.msra.mxu0 %v944
    %1332 = vmatprep.subr.bf16.mxu0 %v953
    %1333 = vmatpush1.bf16.msra.mxu0 %v952
    %1334 = vmatprep.subr.bf16.mxu0 %v961
    %1335 = vmatpush1.bf16.msra.mxu0 %v960
    %1336 = vmatprep.subr.bf16.mxu0 %v969
    %1337 = vmatpush1.bf16.msra.mxu0 %v968
    %1338 = vmatprep.mubr.bf16.mxu0 %v977
    %1339 = vmatmul.mubr.bf16.gmra.mrb[0].mxu0 %v976
    %v1340 = vpop.f32.mrb[0].mxu0
    %v1341 = vadd.f32 %v1300, %v1340
    %v1342 = vpop.f32.mrb[0].mxu0
    %v1343 = vadd.f32 %v1302, %v1342
    %v1344 = vpop.f32.mrb[0].mxu0
    %v1345 = vpop.f32.mrb[0].mxu0
    %1346 = vdwg.mxu0
    %vm1347 = vcmp.ge.f32.partialorder %v1095, 0.0
    %vm1348 = vcmp.ge.f32.partialorder %v1097, 0.0
    %vm1349 = vcmp.ge.f32.partialorder %v1177, 0.0
    %vm1350 = vcmp.ge.f32.partialorder %v1179, 0.0
    %vm1351 = vcmp.ge.f32.partialorder %v1259, 0.0
    %vm1352 = vcmp.ge.f32.partialorder %v1261, 0.0
    %vm1353 = vcmp.ge.f32.partialorder %v1341, 0.0
    %vm1354 = vcmp.ge.f32.partialorder %v1343, 0.0
    %v1355 = vmul.f32 %v1095, 0.2
    %v1356 = vmul.f32 %v1097, 0.2
    %v1357 = vmul.f32 %v1177, 0.2
    %v1358 = vmul.f32 %v1179, 0.2
    %v1359 = vmul.f32 %v1259, 0.2
    %v1360 = vmul.f32 %v1261, 0.2
    %v1361 = vmul.f32 %v1341, 0.2
    %v1362 = vmul.f32 %v1343, 0.2
    %v1363 = vsel %vm1347, %v1095, %v1355
    %v1364 = vsel %vm1348, %v1097, %v1356
    %v1365 = vsel %vm1349, %v1177, %v1357
    %v1366 = vsel %vm1350, %v1179, %v1358
    %v1367 = vsel %vm1351, %v1259, %v1359
    %v1368 = vsel %vm1352, %v1261, %v1360
    %v1369 = vsel %vm1353, %v1341, %v1361
    %v1370 = vsel %vm1354, %v1343, %v1362
    %s1371 = scalar_lea.vmem [#allocation8], 7
    %v1372 = vld [vmem:[%s1371] ss:$8 sm:$0xf]
    %v1373 = vld [vmem:[%s1371] ss:$8 sm:$0xf0]
    %v1374 = vor.u32 %v1372, %v1373
    %s1375 = scalar_lea.vmem [#allocation8], 64
    %v1376 = vld [vmem:[%s1375] ss:$8 sm:$0xf]
    %v1377 = vld [vmem:[%s1375] ss:$8 sm:$0xf0]
    %v1378 = vor.u32 %v1376, %v1377
    %v1379 = vmul.f32 %v1363, %v155
    %v1380 = vmul.f32 %v1364, %v155
    %v1381 = vmul.f32 %v1365, %v155
    %v1382 = vmul.f32 %v1366, %v155
    %v1383 = vmul.f32 %v1367, %v155
    %v1384 = vmul.f32 %v1368, %v155
    %v1385 = vmul.f32 %v1369, %v155
    %v1386 = vmul.f32 %v1370, %v155
    %v1387 = vrot.slane %v1379, 4
    %v1388 = vadd.f32 %v1379, %v1387
    %v1389 = vrot.slane %v1388, 2
    %v1390 = vadd.f32 %v1388, %v1389
    %v1391 = vrot.slane %v1390, 1
    %v1392 = vadd.f32 %v1390, %v1391
    %v1393 = vrot.slane %v1380, 4
    %v1394 = vadd.f32 %v1380, %v1393
    %v1395 = vrot.slane %v1394, 2
    %v1396 = vadd.f32 %v1394, %v1395
    %v1397 = vrot.slane %v1396, 1
    %v1398 = vadd.f32 %v1396, %v1397
    %v1399 = vrot.slane %v1381, 4
    %v1400 = vadd.f32 %v1381, %v1399
    %v1401 = vrot.slane %v1400, 2
    %v1402 = vadd.f32 %v1400, %v1401
    %v1403 = vrot.slane %v1402, 1
    %v1404 = vadd.f32 %v1402, %v1403
    %v1405 = vrot.slane %v1382, 4
    %v1406 = vadd.f32 %v1382, %v1405
    %v1407 = vrot.slane %v1406, 2
    %v1408 = vadd.f32 %v1406, %v1407
    %v1409 = vrot.slane %v1408, 1
    %v1410 = vadd.f32 %v1408, %v1409
    %v1411 = vrot.slane %v1383, 4
    %v1412 = vadd.f32 %v1383, %v1411
    %v1413 = vrot.slane %v1412, 2
    %v1414 = vadd.f32 %v1412, %v1413
    %v1415 = vrot.slane %v1414, 1
    %v1416 = vadd.f32 %v1414, %v1415
    %v1417 = vrot.slane %v1384, 4
    %v1418 = vadd.f32 %v1384, %v1417
    %v1419 = vrot.slane %v1418, 2
    %v1420 = vadd.f32 %v1418, %v1419
    %v1421 = vrot.slane %v1420, 1
    %v1422 = vadd.f32 %v1420, %v1421
    %v1423 = vrot.slane %v1385, 4
    %v1424 = vadd.f32 %v1385, %v1423
    %v1425 = vrot.slane %v1424, 2
    %v1426 = vadd.f32 %v1424, %v1425
    %v1427 = vrot.slane %v1426, 1
    %v1428 = vadd.f32 %v1426, %v1427
    %v1429 = vrot.slane %v1386, 4
    %v1430 = vadd.f32 %v1386, %v1429
    %v1431 = vrot.slane %v1430, 2
    %v1432 = vadd.f32 %v1430, %v1431
    %v1433 = vrot.slane %v1432, 1
    %v1434 = vadd.f32 %v1432, %v1433
    %v1435 = vmul.f32 %v1392, 0.25
    %v1436 = vmul.f32 %v1398, 0.25
    %v1437 = vmul.f32 %v1404, 0.25
    %v1438 = vmul.f32 %v1410, 0.25
    %v1439 = vmul.f32 %v1416, 0.25
    %v1440 = vmul.f32 %v1422, 0.25
    %v1441 = vmul.f32 %v1428, 0.25
    %v1442 = vmul.f32 %v1434, 0.25
    %v1443 = vsub.f32 %v1363, %v1435
    %v1444 = vsub.f32 %v1364, %v1436
    %v1445 = vsub.f32 %v1365, %v1437
    %v1446 = vsub.f32 %v1366, %v1438
    %v1447 = vsub.f32 %v1367, %v1439
    %v1448 = vsub.f32 %v1368, %v1440
    %v1449 = vsub.f32 %v1369, %v1441
    %v1450 = vsub.f32 %v1370, %v1442
    %v1451 = vmul.f32 %v1443, %v1443
    %v1452 = vmul.f32 %v1444, %v1444
    %v1453 = vmul.f32 %v1445, %v1445
    %v1454 = vmul.f32 %v1446, %v1446
    %v1455 = vmul.f32 %v1447, %v1447
    %v1456 = vmul.f32 %v1448, %v1448
    %v1457 = vmul.f32 %v1449, %v1449
    %v1458 = vmul.f32 %v1450, %v1450
    %v1459 = vmul.f32 %v1451, %v155
    %v1460 = vmul.f32 %v1452, %v155
    %v1461 = vmul.f32 %v1453, %v155
    %v1462 = vmul.f32 %v1454, %v155
    %v1463 = vmul.f32 %v1455, %v155
    %v1464 = vmul.f32 %v1456, %v155
    %v1465 = vmul.f32 %v1457, %v155
    %v1466 = vmul.f32 %v1458, %v155
    %v1467 = vrot.slane %v1459, 4
    %v1468 = vadd.f32 %v1459, %v1467
    %v1469 = vrot.slane %v1468, 2
    %v1470 = vadd.f32 %v1468, %v1469
    %v1471 = vrot.slane %v1470, 1
    %v1472 = vadd.f32 %v1470, %v1471
    %v1473 = vrot.slane %v1460, 4
    %v1474 = vadd.f32 %v1460, %v1473
    %v1475 = vrot.slane %v1474, 2
    %v1476 = vadd.f32 %v1474, %v1475
    %v1477 = vrot.slane %v1476, 1
    %v1478 = vadd.f32 %v1476, %v1477
    %v1479 = vrot.slane %v1461, 4
    %v1480 = vadd.f32 %v1461, %v1479
    %v1481 = vrot.slane %v1480, 2
    %v1482 = vadd.f32 %v1480, %v1481
    %v1483 = vrot.slane %v1482, 1
    %v1484 = vadd.f32 %v1482, %v1483
    %v1485 = vrot.slane %v1462, 4
    %v1486 = vadd.f32 %v1462, %v1485
    %v1487 = vrot.slane %v1486, 2
    %v1488 = vadd.f32 %v1486, %v1487
    %v1489 = vrot.slane %v1488, 1
    %v1490 = vadd.f32 %v1488, %v1489
    %v1491 = vrot.slane %v1463, 4
    %v1492 = vadd.f32 %v1463, %v1491
    %v1493 = vrot.slane %v1492, 2
    %v1494 = vadd.f32 %v1492, %v1493
    %v1495 = vrot.slane %v1494, 1
    %v1496 = vadd.f32 %v1494, %v1495
    %v1497 = vrot.slane %v1464, 4
    %v1498 = vadd.f32 %v1464, %v1497
    %v1499 = vrot.slane %v1498, 2
    %v1500 = vadd.f32 %v1498, %v1499
    %v1501 = vrot.slane %v1500, 1
    %v1502 = vadd.f32 %v1500, %v1501
    %v1503 = vrot.slane %v1465, 4
    %v1504 = vadd.f32 %v1465, %v1503
    %v1505 = vrot.slane %v1504, 2
    %v1506 = vadd.f32 %v1504, %v1505
    %v1507 = vrot.slane %v1506, 1
    %v1508 = vadd.f32 %v1506, %v1507
    %v1509 = vrot.slane %v1466, 4
    %v1510 = vadd.f32 %v1466, %v1509
    %v1511 = vrot.slane %v1510, 2
    %v1512 = vadd.f32 %v1510, %v1511
    %v1513 = vrot.slane %v1512, 1
    %v1514 = vadd.f32 %v1512, %v1513
    %v1515 = vmul.f32 %v1472, 0.25
    %v1516 = vmul.f32 %v1478, 0.25
    %v1517 = vmul.f32 %v1484, 0.25
    %v1518 = vmul.f32 %v1490, 0.25
    %v1519 = vmul.f32 %v1496, 0.25
    %v1520 = vmul.f32 %v1502, 0.25
    %v1521 = vmul.f32 %v1508, 0.25
    %v1522 = vmul.f32 %v1514, 0.25
    %v1523 = vadd.f32 %v1515, 1e-05
    %v1524 = vadd.f32 %v1516, 1e-05
    %v1525 = vadd.f32 %v1517, 1e-05
    %v1526 = vadd.f32 %v1518, 1e-05
    %v1527 = vadd.f32 %v1519, 1e-05
    %v1528 = vadd.f32 %v1520, 1e-05
    %v1529 = vadd.f32 %v1521, 1e-05
    %v1530 = vadd.f32 %v1522, 1e-05
    %v1531 = vrsqrt.pop %v1523
    %v1532 = vrsqrt.pop %v1524
    %v1533 = vrsqrt.pop %v1525
    %v1534 = vrsqrt.pop %v1526
    %v1535 = vrsqrt.pop %v1527
    %v1536 = vrsqrt.pop %v1528
    %v1537 = vrsqrt.pop %v1529
    %v1538 = vrsqrt.pop %v1530
    %v1539 = vmul.f32 %v1443, %v1531
    %v1540 = vmul.f32 %v1444, %v1532
    %v1541 = vmul.f32 %v1445, %v1533
    %v1542 = vmul.f32 %v1446, %v1534
    %v1543 = vmul.f32 %v1447, %v1535
    %v1544 = vmul.f32 %v1448, %v1536
    %v1545 = vmul.f32 %v1449, %v1537
    %v1546 = vmul.f32 %v1450, %v1538
    %v1548 = vlaneseq
    %v1549 = vshrl.u32 %v1548, 7
    %v1550 = vsub.s32 0, %v1549
    %v1551 = vrot.slane %v1374, %v1550
    %v1552 = vlaneseq
    %v1553 = vshrl.u32 %v1552, 7
    %v1554 = vsub.s32 1, %v1553
    %v1555 = vrot.slane %v1374, %v1554
    %v1556 = vlaneseq
    %v1557 = vshrl.u32 %v1556, 7
    %v1558 = vsub.s32 2, %v1557
    %v1559 = vrot.slane %v1374, %v1558
    %v1560 = vlaneseq
    %v1561 = vshrl.u32 %v1560, 7
    %v1562 = vsub.s32 3, %v1561
    %v1563 = vrot.slane %v1374, %v1562
    %v1564 = vlaneseq
    %v1565 = vshrl.u32 %v1564, 7
    %v1566 = vsub.s32 4, %v1565
    %v1567 = vrot.slane %v1374, %v1566
    %v1568 = vlaneseq
    %v1569 = vshrl.u32 %v1568, 7
    %v1570 = vsub.s32 5, %v1569
    %v1571 = vrot.slane %v1374, %v1570
    %v1572 = vlaneseq
    %v1573 = vshrl.u32 %v1572, 7
    %v1574 = vsub.s32 6, %v1573
    %v1575 = vrot.slane %v1374, %v1574
    %v1576 = vlaneseq
    %v1577 = vshrl.u32 %v1576, 7
    %v1578 = vsub.s32 7, %v1577
    %v1579 = vrot.slane %v1374, %v1578
    %v1588 = vmul.f32 %v1539, %v1551
    %v1589 = vmul.f32 %v1540, %v1555
    %v1590 = vmul.f32 %v1541, %v1559
    %v1591 = vmul.f32 %v1542, %v1563
    %v1592 = vmul.f32 %v1543, %v1567
    %v1593 = vmul.f32 %v1544, %v1571
    %v1594 = vmul.f32 %v1545, %v1575
    %v1595 = vmul.f32 %v1546, %v1579
    %v1597 = vlaneseq
    %v1598 = vshrl.u32 %v1597, 7
    %v1599 = vsub.s32 0, %v1598
    %v1600 = vrot.slane %v1378, %v1599
    %v1601 = vlaneseq
    %v1602 = vshrl.u32 %v1601, 7
    %v1603 = vsub.s32 1, %v1602
    %v1604 = vrot.slane %v1378, %v1603
    %v1605 = vlaneseq
    %v1606 = vshrl.u32 %v1605, 7
    %v1607 = vsub.s32 2, %v1606
    %v1608 = vrot.slane %v1378, %v1607
    %v1609 = vlaneseq
    %v1610 = vshrl.u32 %v1609, 7
    %v1611 = vsub.s32 3, %v1610
    %v1612 = vrot.slane %v1378, %v1611
    %v1613 = vlaneseq
    %v1614 = vshrl.u32 %v1613, 7
    %v1615 = vsub.s32 4, %v1614
    %v1616 = vrot.slane %v1378, %v1615
    %v1617 = vlaneseq
    %v1618 = vshrl.u32 %v1617, 7
    %v1619 = vsub.s32 5, %v1618
    %v1620 = vrot.slane %v1378, %v1619
    %v1621 = vlaneseq
    %v1622 = vshrl.u32 %v1621, 7
    %v1623 = vsub.s32 6, %v1622
    %v1624 = vrot.slane %v1378, %v1623
    %v1625 = vlaneseq
    %v1626 = vshrl.u32 %v1625, 7
    %v1627 = vsub.s32 7, %v1626
    %v1628 = vrot.slane %v1378, %v1627
    %v1637 = vadd.f32 %v1588, %v1600
    %v1638 = vadd.f32 %v1589, %v1604
    %v1639 = vadd.f32 %v1590, %v1608
    %v1640 = vadd.f32 %v1591, %v1612
    %v1641 = vadd.f32 %v1592, %v1616
    %v1642 = vadd.f32 %v1593, %v1620
    %v1643 = vadd.f32 %v1594, %v1624
    %v1644 = vadd.f32 %v1595, %v1628
    %s1645 = smul.u32 4, 128
    %s1646 = smul.u32 %s1645, 7
    %s1647 = sshll.u32 %s1646, 4
    %1648 = dma.done %s116, %s1647
    %v1649 = vld [vmem:[#allocation4] sm:$0xff]
    %v1650 = vld [vmem:[#allocation4 + $0x8] sm:$0xff]
    %v1651 = vld [vmem:[#allocation4 + $0x10] sm:$0xff]
    %v1652 = vld [vmem:[#allocation4 + $0x18] sm:$0xff]
    %v1653 = vld [vmem:[#allocation4 + $0x20] sm:$0xff]
    %v1654 = vld [vmem:[#allocation4 + $0x28] sm:$0xff]
    %v1655 = vld [vmem:[#allocation4 + $0x30] sm:$0xff]
    %v1656 = vld [vmem:[#allocation4 + $0x38] sm:$0xff]
    %v1657 = vld [vmem:[#allocation4 + $0x40] sm:$0xff]
    %v1658 = vld [vmem:[#allocation4 + $0x48] sm:$0xff]
    %v1659 = vld [vmem:[#allocation4 + $0x50] sm:$0xff]
    %v1660 = vld [vmem:[#allocation4 + $0x58] sm:$0xff]
    %v1661 = vld [vmem:[#allocation4 + $0x60] sm:$0xff]
    %v1662 = vld [vmem:[#allocation4 + $0x68] sm:$0xff]
    %v1663 = vld [vmem:[#allocation4 + $0x70] sm:$0xff]
    %v1664 = vld [vmem:[#allocation4 + $0x78] sm:$0xff]
    %v1665 = vld [vmem:[#allocation4 + $0x80] sm:$0xff]
    %v1666 = vld [vmem:[#allocation4 + $0x88] sm:$0xff]
    %v1667 = vld [vmem:[#allocation4 + $0x90] sm:$0xff]
    %v1668 = vld [vmem:[#allocation4 + $0x98] sm:$0xff]
    %v1669 = vld [vmem:[#allocation4 + $0xa0] sm:$0xff]
    %v1670 = vld [vmem:[#allocation4 + $0xa8] sm:$0xff]
    %v1671 = vld [vmem:[#allocation4 + $0xb0] sm:$0xff]
    %v1672 = vld [vmem:[#allocation4 + $0xb8] sm:$0xff]
    %v1673 = vld [vmem:[#allocation4 + $0xc0] sm:$0xff]
    %v1674 = vld [vmem:[#allocation4 + $0xc8] sm:$0xff]
    %v1675 = vld [vmem:[#allocation4 + $0xd0] sm:$0xff]
    %v1676 = vld [vmem:[#allocation4 + $0xd8] sm:$0xff]
    %v1677 = vld [vmem:[#allocation4 + $0xe0] sm:$0xff]
    %v1678 = vld [vmem:[#allocation4 + $0xe8] sm:$0xff]
    %v1679 = vld [vmem:[#allocation4 + $0xf0] sm:$0xff]
    %v1680 = vld [vmem:[#allocation4 + $0xf8] sm:$0xff]
    %v1681 = vld [vmem:[#allocation4 + $0x100] sm:$0xff]
    %v1682 = vld [vmem:[#allocation4 + $0x108] sm:$0xff]
    %v1683 = vld [vmem:[#allocation4 + $0x110] sm:$0xff]
    %v1684 = vld [vmem:[#allocation4 + $0x118] sm:$0xff]
    %v1685 = vld [vmem:[#allocation4 + $0x120] sm:$0xff]
    %v1686 = vld [vmem:[#allocation4 + $0x128] sm:$0xff]
    %v1687 = vld [vmem:[#allocation4 + $0x130] sm:$0xff]
    %v1688 = vld [vmem:[#allocation4 + $0x138] sm:$0xff]
    %v1689 = vld [vmem:[#allocation4 + $0x140] sm:$0xff]
    %v1690 = vld [vmem:[#allocation4 + $0x148] sm:$0xff]
    %v1691 = vld [vmem:[#allocation4 + $0x150] sm:$0xff]
    %v1692 = vld [vmem:[#allocation4 + $0x158] sm:$0xff]
    %v1693 = vld [vmem:[#allocation4 + $0x160] sm:$0xff]
    %v1694 = vld [vmem:[#allocation4 + $0x168] sm:$0xff]
    %v1695 = vld [vmem:[#allocation4 + $0x170] sm:$0xff]
    %v1696 = vld [vmem:[#allocation4 + $0x178] sm:$0xff]
    %v1697 = vld [vmem:[#allocation4 + $0x180] sm:$0xff]
    %v1698 = vld [vmem:[#allocation4 + $0x188] sm:$0xff]
    %v1699 = vld [vmem:[#allocation4 + $0x190] sm:$0xff]
    %v1700 = vld [vmem:[#allocation4 + $0x198] sm:$0xff]
    %v1701 = vld [vmem:[#allocation4 + $0x1a0] sm:$0xff]
    %v1702 = vld [vmem:[#allocation4 + $0x1a8] sm:$0xff]
    %v1703 = vld [vmem:[#allocation4 + $0x1b0] sm:$0xff]
    %v1704 = vld [vmem:[#allocation4 + $0x1b8] sm:$0xff]
    %v1705 = vld [vmem:[#allocation4 + $0x1c0] sm:$0xff]
    %v1706 = vld [vmem:[#allocation4 + $0x1c8] sm:$0xff]
    %v1707 = vld [vmem:[#allocation4 + $0x1d0] sm:$0xff]
    %v1708 = vld [vmem:[#allocation4 + $0x1d8] sm:$0xff]
    %v1709 = vld [vmem:[#allocation4 + $0x1e0] sm:$0xff]
    %v1710 = vld [vmem:[#allocation4 + $0x1e8] sm:$0xff]
    %v1711 = vld [vmem:[#allocation4 + $0x1f0] sm:$0xff]
    %v1712 = vld [vmem:[#allocation4 + $0x1f8] sm:$0xff]
    %v1713 = vld [vmem:[#allocation4 + $0x200] sm:$0xff]
    %v1714 = vld [vmem:[#allocation4 + $0x208] sm:$0xff]
    %v1715 = vld [vmem:[#allocation4 + $0x210] sm:$0xff]
    %v1716 = vld [vmem:[#allocation4 + $0x218] sm:$0xff]
    %v1717 = vld [vmem:[#allocation4 + $0x220] sm:$0xff]
    %v1718 = vld [vmem:[#allocation4 + $0x228] sm:$0xff]
    %v1719 = vld [vmem:[#allocation4 + $0x230] sm:$0xff]
    %v1720 = vld [vmem:[#allocation4 + $0x238] sm:$0xff]
    %v1721 = vld [vmem:[#allocation4 + $0x240] sm:$0xff]
    %v1722 = vld [vmem:[#allocation4 + $0x248] sm:$0xff]
    %v1723 = vld [vmem:[#allocation4 + $0x250] sm:$0xff]
    %v1724 = vld [vmem:[#allocation4 + $0x258] sm:$0xff]
    %v1725 = vld [vmem:[#allocation4 + $0x260] sm:$0xff]
    %v1726 = vld [vmem:[#allocation4 + $0x268] sm:$0xff]
    %v1727 = vld [vmem:[#allocation4 + $0x270] sm:$0xff]
    %v1728 = vld [vmem:[#allocation4 + $0x278] sm:$0xff]
    %v1729 = vld [vmem:[#allocation4 + $0x280] sm:$0xff]
    %v1730 = vld [vmem:[#allocation4 + $0x288] sm:$0xff]
    %v1731 = vld [vmem:[#allocation4 + $0x290] sm:$0xff]
    %v1732 = vld [vmem:[#allocation4 + $0x298] sm:$0xff]
    %v1733 = vld [vmem:[#allocation4 + $0x2a0] sm:$0xff]
    %v1734 = vld [vmem:[#allocation4 + $0x2a8] sm:$0xff]
    %v1735 = vld [vmem:[#allocation4 + $0x2b0] sm:$0xff]
    %v1736 = vld [vmem:[#allocation4 + $0x2b8] sm:$0xff]
    %v1737 = vld [vmem:[#allocation4 + $0x2c0] sm:$0xff]
    %v1738 = vld [vmem:[#allocation4 + $0x2c8] sm:$0xff]
    %v1739 = vld [vmem:[#allocation4 + $0x2d0] sm:$0xff]
    %v1740 = vld [vmem:[#allocation4 + $0x2d8] sm:$0xff]
    %v1741 = vld [vmem:[#allocation4 + $0x2e0] sm:$0xff]
    %v1742 = vld [vmem:[#allocation4 + $0x2e8] sm:$0xff]
    %v1743 = vld [vmem:[#allocation4 + $0x2f0] sm:$0xff]
    %v1744 = vld [vmem:[#allocation4 + $0x2f8] sm:$0xff]
    %v1745 = vld [vmem:[#allocation4 + $0x300] sm:$0xff]
    %v1746 = vld [vmem:[#allocation4 + $0x308] sm:$0xff]
    %v1747 = vld [vmem:[#allocation4 + $0x310] sm:$0xff]
    %v1748 = vld [vmem:[#allocation4 + $0x318] sm:$0xff]
    %v1749 = vld [vmem:[#allocation4 + $0x320] sm:$0xff]
    %v1750 = vld [vmem:[#allocation4 + $0x328] sm:$0xff]
    %v1751 = vld [vmem:[#allocation4 + $0x330] sm:$0xff]
    %v1752 = vld [vmem:[#allocation4 + $0x338] sm:$0xff]
    %v1753 = vld [vmem:[#allocation4 + $0x340] sm:$0xff]
    %v1754 = vld [vmem:[#allocation4 + $0x348] sm:$0xff]
    %v1755 = vld [vmem:[#allocation4 + $0x350] sm:$0xff]
    %v1756 = vld [vmem:[#allocation4 + $0x358] sm:$0xff]
    %v1757 = vld [vmem:[#allocation4 + $0x360] sm:$0xff]
    %v1758 = vld [vmem:[#allocation4 + $0x368] sm:$0xff]
    %v1759 = vld [vmem:[#allocation4 + $0x370] sm:$0xff]
    %v1760 = vld [vmem:[#allocation4 + $0x378] sm:$0xff]
    %v1761 = vld [vmem:[#allocation4 + $0x380] sm:$0xff]
    %v1762 = vld [vmem:[#allocation4 + $0x388] sm:$0xff]
    %v1763 = vld [vmem:[#allocation4 + $0x390] sm:$0xff]
    %v1764 = vld [vmem:[#allocation4 + $0x398] sm:$0xff]
    %v1765 = vld [vmem:[#allocation4 + $0x3a0] sm:$0xff]
    %v1766 = vld [vmem:[#allocation4 + $0x3a8] sm:$0xff]
    %v1767 = vld [vmem:[#allocation4 + $0x3b0] sm:$0xff]
    %v1768 = vld [vmem:[#allocation4 + $0x3b8] sm:$0xff]
    %v1769 = vld [vmem:[#allocation4 + $0x3c0] sm:$0xff]
    %v1770 = vld [vmem:[#allocation4 + $0x3c8] sm:$0xff]
    %v1771 = vld [vmem:[#allocation4 + $0x3d0] sm:$0xff]
    %v1772 = vld [vmem:[#allocation4 + $0x3d8] sm:$0xff]
    %v1773 = vld [vmem:[#allocation4 + $0x3e0] sm:$0xff]
    %v1774 = vld [vmem:[#allocation4 + $0x3e8] sm:$0xff]
    %v1775 = vld [vmem:[#allocation4 + $0x3f0] sm:$0xff]
    %v1776 = vld [vmem:[#allocation4 + $0x3f8] sm:$0xff]
    %v1777 = vld [vmem:[#allocation4 + $0x400] sm:$0xff]
    %v1778 = vld [vmem:[#allocation4 + $0x408] sm:$0xff]
    %v1779 = vld [vmem:[#allocation4 + $0x410] sm:$0xff]
    %v1780 = vld [vmem:[#allocation4 + $0x418] sm:$0xff]
    %v1781 = vld [vmem:[#allocation4 + $0x420] sm:$0xff]
    %v1782 = vld [vmem:[#allocation4 + $0x428] sm:$0xff]
    %v1783 = vld [vmem:[#allocation4 + $0x430] sm:$0xff]
    %v1784 = vld [vmem:[#allocation4 + $0x438] sm:$0xff]
    %v1785 = vld [vmem:[#allocation4 + $0x440] sm:$0xff]
    %v1786 = vld [vmem:[#allocation4 + $0x448] sm:$0xff]
    %v1787 = vld [vmem:[#allocation4 + $0x450] sm:$0xff]
    %v1788 = vld [vmem:[#allocation4 + $0x458] sm:$0xff]
    %v1789 = vld [vmem:[#allocation4 + $0x460] sm:$0xff]
    %v1790 = vld [vmem:[#allocation4 + $0x468] sm:$0xff]
    %v1791 = vld [vmem:[#allocation4 + $0x470] sm:$0xff]
    %v1792 = vld [vmem:[#allocation4 + $0x478] sm:$0xff]
    %v1793 = vld [vmem:[#allocation4 + $0x480] sm:$0xff]
    %v1794 = vld [vmem:[#allocation4 + $0x488] sm:$0xff]
    %v1795 = vld [vmem:[#allocation4 + $0x490] sm:$0xff]
    %v1796 = vld [vmem:[#allocation4 + $0x498] sm:$0xff]
    %v1797 = vld [vmem:[#allocation4 + $0x4a0] sm:$0xff]
    %v1798 = vld [vmem:[#allocation4 + $0x4a8] sm:$0xff]
    %v1799 = vld [vmem:[#allocation4 + $0x4b0] sm:$0xff]
    %v1800 = vld [vmem:[#allocation4 + $0x4b8] sm:$0xff]
    %v1801 = vld [vmem:[#allocation4 + $0x4c0] sm:$0xff]
    %v1802 = vld [vmem:[#allocation4 + $0x4c8] sm:$0xff]
    %v1803 = vld [vmem:[#allocation4 + $0x4d0] sm:$0xff]
    %v1804 = vld [vmem:[#allocation4 + $0x4d8] sm:$0xff]
    %v1805 = vld [vmem:[#allocation4 + $0x4e0] sm:$0xff]
    %v1806 = vld [vmem:[#allocation4 + $0x4e8] sm:$0xff]
    %v1807 = vld [vmem:[#allocation4 + $0x4f0] sm:$0xff]
    %v1808 = vld [vmem:[#allocation4 + $0x4f8] sm:$0xff]
    %v1809 = vld [vmem:[#allocation4 + $0x500] sm:$0xff]
    %v1810 = vld [vmem:[#allocation4 + $0x508] sm:$0xff]
    %v1811 = vld [vmem:[#allocation4 + $0x510] sm:$0xff]
    %v1812 = vld [vmem:[#allocation4 + $0x518] sm:$0xff]
    %v1813 = vld [vmem:[#allocation4 + $0x520] sm:$0xff]
    %v1814 = vld [vmem:[#allocation4 + $0x528] sm:$0xff]
    %v1815 = vld [vmem:[#allocation4 + $0x530] sm:$0xff]
    %v1816 = vld [vmem:[#allocation4 + $0x538] sm:$0xff]
    %v1817 = vld [vmem:[#allocation4 + $0x540] sm:$0xff]
    %v1818 = vld [vmem:[#allocation4 + $0x548] sm:$0xff]
    %v1819 = vld [vmem:[#allocation4 + $0x550] sm:$0xff]
    %v1820 = vld [vmem:[#allocation4 + $0x558] sm:$0xff]
    %v1821 = vld [vmem:[#allocation4 + $0x560] sm:$0xff]
    %v1822 = vld [vmem:[#allocation4 + $0x568] sm:$0xff]
    %v1823 = vld [vmem:[#allocation4 + $0x570] sm:$0xff]
    %v1824 = vld [vmem:[#allocation4 + $0x578] sm:$0xff]
    %v1825 = vld [vmem:[#allocation4 + $0x580] sm:$0xff]
    %v1826 = vld [vmem:[#allocation4 + $0x588] sm:$0xff]
    %v1827 = vld [vmem:[#allocation4 + $0x590] sm:$0xff]
    %v1828 = vld [vmem:[#allocation4 + $0x598] sm:$0xff]
    %v1829 = vld [vmem:[#allocation4 + $0x5a0] sm:$0xff]
    %v1830 = vld [vmem:[#allocation4 + $0x5a8] sm:$0xff]
    %v1831 = vld [vmem:[#allocation4 + $0x5b0] sm:$0xff]
    %v1832 = vld [vmem:[#allocation4 + $0x5b8] sm:$0xff]
    %v1833 = vld [vmem:[#allocation4 + $0x5c0] sm:$0xff]
    %v1834 = vld [vmem:[#allocation4 + $0x5c8] sm:$0xff]
    %v1835 = vld [vmem:[#allocation4 + $0x5d0] sm:$0xff]
    %v1836 = vld [vmem:[#allocation4 + $0x5d8] sm:$0xff]
    %v1837 = vld [vmem:[#allocation4 + $0x5e0] sm:$0xff]
    %v1838 = vld [vmem:[#allocation4 + $0x5e8] sm:$0xff]
    %v1839 = vld [vmem:[#allocation4 + $0x5f0] sm:$0xff]
    %v1840 = vld [vmem:[#allocation4 + $0x5f8] sm:$0xff]
    %v1841 = vld [vmem:[#allocation4 + $0x600] sm:$0xff]
    %v1842 = vld [vmem:[#allocation4 + $0x608] sm:$0xff]
    %v1843 = vld [vmem:[#allocation4 + $0x610] sm:$0xff]
    %v1844 = vld [vmem:[#allocation4 + $0x618] sm:$0xff]
    %v1845 = vld [vmem:[#allocation4 + $0x620] sm:$0xff]
    %v1846 = vld [vmem:[#allocation4 + $0x628] sm:$0xff]
    %v1847 = vld [vmem:[#allocation4 + $0x630] sm:$0xff]
    %v1848 = vld [vmem:[#allocation4 + $0x638] sm:$0xff]
    %v1849 = vld [vmem:[#allocation4 + $0x640] sm:$0xff]
    %v1850 = vld [vmem:[#allocation4 + $0x648] sm:$0xff]
    %v1851 = vld [vmem:[#allocation4 + $0x650] sm:$0xff]
    %v1852 = vld [vmem:[#allocation4 + $0x658] sm:$0xff]
    %v1853 = vld [vmem:[#allocation4 + $0x660] sm:$0xff]
    %v1854 = vld [vmem:[#allocation4 + $0x668] sm:$0xff]
    %v1855 = vld [vmem:[#allocation4 + $0x670] sm:$0xff]
    %v1856 = vld [vmem:[#allocation4 + $0x678] sm:$0xff]
    %v1857 = vld [vmem:[#allocation4 + $0x680] sm:$0xff]
    %v1858 = vld [vmem:[#allocation4 + $0x688] sm:$0xff]
    %v1859 = vld [vmem:[#allocation4 + $0x690] sm:$0xff]
    %v1860 = vld [vmem:[#allocation4 + $0x698] sm:$0xff]
    %v1861 = vld [vmem:[#allocation4 + $0x6a0] sm:$0xff]
    %v1862 = vld [vmem:[#allocation4 + $0x6a8] sm:$0xff]
    %v1863 = vld [vmem:[#allocation4 + $0x6b0] sm:$0xff]
    %v1864 = vld [vmem:[#allocation4 + $0x6b8] sm:$0xff]
    %v1865 = vld [vmem:[#allocation4 + $0x6c0] sm:$0xff]
    %v1866 = vld [vmem:[#allocation4 + $0x6c8] sm:$0xff]
    %v1867 = vld [vmem:[#allocation4 + $0x6d0] sm:$0xff]
    %v1868 = vld [vmem:[#allocation4 + $0x6d8] sm:$0xff]
    %v1869 = vld [vmem:[#allocation4 + $0x6e0] sm:$0xff]
    %v1870 = vld [vmem:[#allocation4 + $0x6e8] sm:$0xff]
    %v1871 = vld [vmem:[#allocation4 + $0x6f0] sm:$0xff]
    %v1872 = vld [vmem:[#allocation4 + $0x6f8] sm:$0xff]
    %v1873 = vld [vmem:[#allocation4 + $0x700] sm:$0xff]
    %v1874 = vld [vmem:[#allocation4 + $0x708] sm:$0xff]
    %v1875 = vld [vmem:[#allocation4 + $0x710] sm:$0xff]
    %v1876 = vld [vmem:[#allocation4 + $0x718] sm:$0xff]
    %v1877 = vld [vmem:[#allocation4 + $0x720] sm:$0xff]
    %v1878 = vld [vmem:[#allocation4 + $0x728] sm:$0xff]
    %v1879 = vld [vmem:[#allocation4 + $0x730] sm:$0xff]
    %v1880 = vld [vmem:[#allocation4 + $0x738] sm:$0xff]
    %v1881 = vld [vmem:[#allocation4 + $0x740] sm:$0xff]
    %v1882 = vld [vmem:[#allocation4 + $0x748] sm:$0xff]
    %v1883 = vld [vmem:[#allocation4 + $0x750] sm:$0xff]
    %v1884 = vld [vmem:[#allocation4 + $0x758] sm:$0xff]
    %v1885 = vld [vmem:[#allocation4 + $0x760] sm:$0xff]
    %v1886 = vld [vmem:[#allocation4 + $0x768] sm:$0xff]
    %v1887 = vld [vmem:[#allocation4 + $0x770] sm:$0xff]
    %v1888 = vld [vmem:[#allocation4 + $0x778] sm:$0xff]
    %v1889 = vld [vmem:[#allocation4 + $0x780] sm:$0xff]
    %v1890 = vld [vmem:[#allocation4 + $0x788] sm:$0xff]
    %v1891 = vld [vmem:[#allocation4 + $0x790] sm:$0xff]
    %v1892 = vld [vmem:[#allocation4 + $0x798] sm:$0xff]
    %v1893 = vld [vmem:[#allocation4 + $0x7a0] sm:$0xff]
    %v1894 = vld [vmem:[#allocation4 + $0x7a8] sm:$0xff]
    %v1895 = vld [vmem:[#allocation4 + $0x7b0] sm:$0xff]
    %v1896 = vld [vmem:[#allocation4 + $0x7b8] sm:$0xff]
    %v1897 = vld [vmem:[#allocation4 + $0x7c0] sm:$0xff]
    %v1898 = vld [vmem:[#allocation4 + $0x7c8] sm:$0xff]
    %v1899 = vld [vmem:[#allocation4 + $0x7d0] sm:$0xff]
    %v1900 = vld [vmem:[#allocation4 + $0x7d8] sm:$0xff]
    %v1901 = vld [vmem:[#allocation4 + $0x7e0] sm:$0xff]
    %v1902 = vld [vmem:[#allocation4 + $0x7e8] sm:$0xff]
    %v1903 = vld [vmem:[#allocation4 + $0x7f0] sm:$0xff]
    %v1904 = vld [vmem:[#allocation4 + $0x7f8] sm:$0xff]
    %v1905 = vld [vmem:[#allocation4 + $0x800] sm:$0xff]
    %v1906 = vld [vmem:[#allocation4 + $0x808] sm:$0xff]
    %v1907 = vld [vmem:[#allocation4 + $0x810] sm:$0xff]
    %v1908 = vld [vmem:[#allocation4 + $0x818] sm:$0xff]
    %v1909 = vld [vmem:[#allocation4 + $0x820] sm:$0xff]
    %v1910 = vld [vmem:[#allocation4 + $0x828] sm:$0xff]
    %v1911 = vld [vmem:[#allocation4 + $0x830] sm:$0xff]
    %v1912 = vld [vmem:[#allocation4 + $0x838] sm:$0xff]
    %v1913 = vld [vmem:[#allocation4 + $0x840] sm:$0xff]
    %v1914 = vld [vmem:[#allocation4 + $0x848] sm:$0xff]
    %v1915 = vld [vmem:[#allocation4 + $0x850] sm:$0xff]
    %v1916 = vld [vmem:[#allocation4 + $0x858] sm:$0xff]
    %v1917 = vld [vmem:[#allocation4 + $0x860] sm:$0xff]
    %v1918 = vld [vmem:[#allocation4 + $0x868] sm:$0xff]
    %v1919 = vld [vmem:[#allocation4 + $0x870] sm:$0xff]
    %v1920 = vld [vmem:[#allocation4 + $0x878] sm:$0xff]
    %v1921 = vld [vmem:[#allocation4 + $0x880] sm:$0xff]
    %v1922 = vld [vmem:[#allocation4 + $0x888] sm:$0xff]
    %v1923 = vld [vmem:[#allocation4 + $0x890] sm:$0xff]
    %v1924 = vld [vmem:[#allocation4 + $0x898] sm:$0xff]
    %v1925 = vld [vmem:[#allocation4 + $0x8a0] sm:$0xff]
    %v1926 = vld [vmem:[#allocation4 + $0x8a8] sm:$0xff]
    %v1927 = vld [vmem:[#allocation4 + $0x8b0] sm:$0xff]
    %v1928 = vld [vmem:[#allocation4 + $0x8b8] sm:$0xff]
    %v1929 = vld [vmem:[#allocation4 + $0x8c0] sm:$0xff]
    %v1930 = vld [vmem:[#allocation4 + $0x8c8] sm:$0xff]
    %v1931 = vld [vmem:[#allocation4 + $0x8d0] sm:$0xff]
    %v1932 = vld [vmem:[#allocation4 + $0x8d8] sm:$0xff]
    %v1933 = vld [vmem:[#allocation4 + $0x8e0] sm:$0xff]
    %v1934 = vld [vmem:[#allocation4 + $0x8e8] sm:$0xff]
    %v1935 = vld [vmem:[#allocation4 + $0x8f0] sm:$0xff]
    %v1936 = vld [vmem:[#allocation4 + $0x8f8] sm:$0xff]
    %v1937 = vld [vmem:[#allocation4 + $0x900] sm:$0xff]
    %v1938 = vld [vmem:[#allocation4 + $0x908] sm:$0xff]
    %v1939 = vld [vmem:[#allocation4 + $0x910] sm:$0xff]
    %v1940 = vld [vmem:[#allocation4 + $0x918] sm:$0xff]
    %v1941 = vld [vmem:[#allocation4 + $0x920] sm:$0xff]
    %v1942 = vld [vmem:[#allocation4 + $0x928] sm:$0xff]
    %v1943 = vld [vmem:[#allocation4 + $0x930] sm:$0xff]
    %v1944 = vld [vmem:[#allocation4 + $0x938] sm:$0xff]
    %v1945 = vld [vmem:[#allocation4 + $0x940] sm:$0xff]
    %v1946 = vld [vmem:[#allocation4 + $0x948] sm:$0xff]
    %v1947 = vld [vmem:[#allocation4 + $0x950] sm:$0xff]
    %v1948 = vld [vmem:[#allocation4 + $0x958] sm:$0xff]
    %v1949 = vld [vmem:[#allocation4 + $0x960] sm:$0xff]
    %v1950 = vld [vmem:[#allocation4 + $0x968] sm:$0xff]
    %v1951 = vld [vmem:[#allocation4 + $0x970] sm:$0xff]
    %v1952 = vld [vmem:[#allocation4 + $0x978] sm:$0xff]
    %v1953 = vld [vmem:[#allocation4 + $0x980] sm:$0xff]
    %v1954 = vld [vmem:[#allocation4 + $0x988] sm:$0xff]
    %v1955 = vld [vmem:[#allocation4 + $0x990] sm:$0xff]
    %v1956 = vld [vmem:[#allocation4 + $0x998] sm:$0xff]
    %v1957 = vld [vmem:[#allocation4 + $0x9a0] sm:$0xff]
    %v1958 = vld [vmem:[#allocation4 + $0x9a8] sm:$0xff]
    %v1959 = vld [vmem:[#allocation4 + $0x9b0] sm:$0xff]
    %v1960 = vld [vmem:[#allocation4 + $0x9b8] sm:$0xff]
    %v1961 = vld [vmem:[#allocation4 + $0x9c0] sm:$0xff]
    %v1962 = vld [vmem:[#allocation4 + $0x9c8] sm:$0xff]
    %v1963 = vld [vmem:[#allocation4 + $0x9d0] sm:$0xff]
    %v1964 = vld [vmem:[#allocation4 + $0x9d8] sm:$0xff]
    %v1965 = vld [vmem:[#allocation4 + $0x9e0] sm:$0xff]
    %v1966 = vld [vmem:[#allocation4 + $0x9e8] sm:$0xff]
    %v1967 = vld [vmem:[#allocation4 + $0x9f0] sm:$0xff]
    %v1968 = vld [vmem:[#allocation4 + $0x9f8] sm:$0xff]
    %v1969 = vld [vmem:[#allocation4 + $0xa00] sm:$0xff]
    %v1970 = vld [vmem:[#allocation4 + $0xa08] sm:$0xff]
    %v1971 = vld [vmem:[#allocation4 + $0xa10] sm:$0xff]
    %v1972 = vld [vmem:[#allocation4 + $0xa18] sm:$0xff]
    %v1973 = vld [vmem:[#allocation4 + $0xa20] sm:$0xff]
    %v1974 = vld [vmem:[#allocation4 + $0xa28] sm:$0xff]
    %v1975 = vld [vmem:[#allocation4 + $0xa30] sm:$0xff]
    %v1976 = vld [vmem:[#allocation4 + $0xa38] sm:$0xff]
    %v1977 = vld [vmem:[#allocation4 + $0xa40] sm:$0xff]
    %v1978 = vld [vmem:[#allocation4 + $0xa48] sm:$0xff]
    %v1979 = vld [vmem:[#allocation4 + $0xa50] sm:$0xff]
    %v1980 = vld [vmem:[#allocation4 + $0xa58] sm:$0xff]
    %v1981 = vld [vmem:[#allocation4 + $0xa60] sm:$0xff]
    %v1982 = vld [vmem:[#allocation4 + $0xa68] sm:$0xff]
    %v1983 = vld [vmem:[#allocation4 + $0xa70] sm:$0xff]
    %v1984 = vld [vmem:[#allocation4 + $0xa78] sm:$0xff]
    %v1985 = vld [vmem:[#allocation4 + $0xa80] sm:$0xff]
    %v1986 = vld [vmem:[#allocation4 + $0xa88] sm:$0xff]
    %v1987 = vld [vmem:[#allocation4 + $0xa90] sm:$0xff]
    %v1988 = vld [vmem:[#allocation4 + $0xa98] sm:$0xff]
    %v1989 = vld [vmem:[#allocation4 + $0xaa0] sm:$0xff]
    %v1990 = vld [vmem:[#allocation4 + $0xaa8] sm:$0xff]
    %v1991 = vld [vmem:[#allocation4 + $0xab0] sm:$0xff]
    %v1992 = vld [vmem:[#allocation4 + $0xab8] sm:$0xff]
    %v1993 = vld [vmem:[#allocation4 + $0xac0] sm:$0xff]
    %v1994 = vld [vmem:[#allocation4 + $0xac8] sm:$0xff]
    %v1995 = vld [vmem:[#allocation4 + $0xad0] sm:$0xff]
    %v1996 = vld [vmem:[#allocation4 + $0xad8] sm:$0xff]
    %v1997 = vld [vmem:[#allocation4 + $0xae0] sm:$0xff]
    %v1998 = vld [vmem:[#allocation4 + $0xae8] sm:$0xff]
    %v1999 = vld [vmem:[#allocation4 + $0xaf0] sm:$0xff]
    %v2000 = vld [vmem:[#allocation4 + $0xaf8] sm:$0xff]
    %v2001 = vld [vmem:[#allocation4 + $0xb00] sm:$0xff]
    %v2002 = vld [vmem:[#allocation4 + $0xb08] sm:$0xff]
    %v2003 = vld [vmem:[#allocation4 + $0xb10] sm:$0xff]
    %v2004 = vld [vmem:[#allocation4 + $0xb18] sm:$0xff]
    %v2005 = vld [vmem:[#allocation4 + $0xb20] sm:$0xff]
    %v2006 = vld [vmem:[#allocation4 + $0xb28] sm:$0xff]
    %v2007 = vld [vmem:[#allocation4 + $0xb30] sm:$0xff]
    %v2008 = vld [vmem:[#allocation4 + $0xb38] sm:$0xff]
    %v2009 = vld [vmem:[#allocation4 + $0xb40] sm:$0xff]
    %v2010 = vld [vmem:[#allocation4 + $0xb48] sm:$0xff]
    %v2011 = vld [vmem:[#allocation4 + $0xb50] sm:$0xff]
    %v2012 = vld [vmem:[#allocation4 + $0xb58] sm:$0xff]
    %v2013 = vld [vmem:[#allocation4 + $0xb60] sm:$0xff]
    %v2014 = vld [vmem:[#allocation4 + $0xb68] sm:$0xff]
    %v2015 = vld [vmem:[#allocation4 + $0xb70] sm:$0xff]
    %v2016 = vld [vmem:[#allocation4 + $0xb78] sm:$0xff]
    %v2017 = vld [vmem:[#allocation4 + $0xb80] sm:$0xff]
    %v2018 = vld [vmem:[#allocation4 + $0xb88] sm:$0xff]
    %v2019 = vld [vmem:[#allocation4 + $0xb90] sm:$0xff]
    %v2020 = vld [vmem:[#allocation4 + $0xb98] sm:$0xff]
    %v2021 = vld [vmem:[#allocation4 + $0xba0] sm:$0xff]
    %v2022 = vld [vmem:[#allocation4 + $0xba8] sm:$0xff]
    %v2023 = vld [vmem:[#allocation4 + $0xbb0] sm:$0xff]
    %v2024 = vld [vmem:[#allocation4 + $0xbb8] sm:$0xff]
    %v2025 = vld [vmem:[#allocation4 + $0xbc0] sm:$0xff]
    %v2026 = vld [vmem:[#allocation4 + $0xbc8] sm:$0xff]
    %v2027 = vld [vmem:[#allocation4 + $0xbd0] sm:$0xff]
    %v2028 = vld [vmem:[#allocation4 + $0xbd8] sm:$0xff]
    %v2029 = vld [vmem:[#allocation4 + $0xbe0] sm:$0xff]
    %v2030 = vld [vmem:[#allocation4 + $0xbe8] sm:$0xff]
    %v2031 = vld [vmem:[#allocation4 + $0xbf0] sm:$0xff]
    %v2032 = vld [vmem:[#allocation4 + $0xbf8] sm:$0xff]
    %v2033 = vld [vmem:[#allocation4 + $0xc00] sm:$0xff]
    %v2034 = vld [vmem:[#allocation4 + $0xc08] sm:$0xff]
    %v2035 = vld [vmem:[#allocation4 + $0xc10] sm:$0xff]
    %v2036 = vld [vmem:[#allocation4 + $0xc18] sm:$0xff]
    %v2037 = vld [vmem:[#allocation4 + $0xc20] sm:$0xff]
    %v2038 = vld [vmem:[#allocation4 + $0xc28] sm:$0xff]
    %v2039 = vld [vmem:[#allocation4 + $0xc30] sm:$0xff]
    %v2040 = vld [vmem:[#allocation4 + $0xc38] sm:$0xff]
    %v2041 = vld [vmem:[#allocation4 + $0xc40] sm:$0xff]
    %v2042 = vld [vmem:[#allocation4 + $0xc48] sm:$0xff]
    %v2043 = vld [vmem:[#allocation4 + $0xc50] sm:$0xff]
    %v2044 = vld [vmem:[#allocation4 + $0xc58] sm:$0xff]
    %v2045 = vld [vmem:[#allocation4 + $0xc60] sm:$0xff]
    %v2046 = vld [vmem:[#allocation4 + $0xc68] sm:$0xff]
    %v2047 = vld [vmem:[#allocation4 + $0xc70] sm:$0xff]
    %v2048 = vld [vmem:[#allocation4 + $0xc78] sm:$0xff]
    %v2049 = vld [vmem:[#allocation4 + $0xc80] sm:$0xff]
    %v2050 = vld [vmem:[#allocation4 + $0xc88] sm:$0xff]
    %v2051 = vld [vmem:[#allocation4 + $0xc90] sm:$0xff]
    %v2052 = vld [vmem:[#allocation4 + $0xc98] sm:$0xff]
    %v2053 = vld [vmem:[#allocation4 + $0xca0] sm:$0xff]
    %v2054 = vld [vmem:[#allocation4 + $0xca8] sm:$0xff]
    %v2055 = vld [vmem:[#allocation4 + $0xcb0] sm:$0xff]
    %v2056 = vld [vmem:[#allocation4 + $0xcb8] sm:$0xff]
    %v2057 = vld [vmem:[#allocation4 + $0xcc0] sm:$0xff]
    %v2058 = vld [vmem:[#allocation4 + $0xcc8] sm:$0xff]
    %v2059 = vld [vmem:[#allocation4 + $0xcd0] sm:$0xff]
    %v2060 = vld [vmem:[#allocation4 + $0xcd8] sm:$0xff]
    %v2061 = vld [vmem:[#allocation4 + $0xce0] sm:$0xff]
    %v2062 = vld [vmem:[#allocation4 + $0xce8] sm:$0xff]
    %v2063 = vld [vmem:[#allocation4 + $0xcf0] sm:$0xff]
    %v2064 = vld [vmem:[#allocation4 + $0xcf8] sm:$0xff]
    %v2065 = vld [vmem:[#allocation4 + $0xd00] sm:$0xff]
    %v2066 = vld [vmem:[#allocation4 + $0xd08] sm:$0xff]
    %v2067 = vld [vmem:[#allocation4 + $0xd10] sm:$0xff]
    %v2068 = vld [vmem:[#allocation4 + $0xd18] sm:$0xff]
    %v2069 = vld [vmem:[#allocation4 + $0xd20] sm:$0xff]
    %v2070 = vld [vmem:[#allocation4 + $0xd28] sm:$0xff]
    %v2071 = vld [vmem:[#allocation4 + $0xd30] sm:$0xff]
    %v2072 = vld [vmem:[#allocation4 + $0xd38] sm:$0xff]
    %v2073 = vld [vmem:[#allocation4 + $0xd40] sm:$0xff]
    %v2074 = vld [vmem:[#allocation4 + $0xd48] sm:$0xff]
    %v2075 = vld [vmem:[#allocation4 + $0xd50] sm:$0xff]
    %v2076 = vld [vmem:[#allocation4 + $0xd58] sm:$0xff]
    %v2077 = vld [vmem:[#allocation4 + $0xd60] sm:$0xff]
    %v2078 = vld [vmem:[#allocation4 + $0xd68] sm:$0xff]
    %v2079 = vld [vmem:[#allocation4 + $0xd70] sm:$0xff]
    %v2080 = vld [vmem:[#allocation4 + $0xd78] sm:$0xff]
    %v2081 = vld [vmem:[#allocation4 + $0xd80] sm:$0xff]
    %v2082 = vld [vmem:[#allocation4 + $0xd88] sm:$0xff]
    %v2083 = vld [vmem:[#allocation4 + $0xd90] sm:$0xff]
    %v2084 = vld [vmem:[#allocation4 + $0xd98] sm:$0xff]
    %v2085 = vld [vmem:[#allocation4 + $0xda0] sm:$0xff]
    %v2086 = vld [vmem:[#allocation4 + $0xda8] sm:$0xff]
    %v2087 = vld [vmem:[#allocation4 + $0xdb0] sm:$0xff]
    %v2088 = vld [vmem:[#allocation4 + $0xdb8] sm:$0xff]
    %v2089 = vld [vmem:[#allocation4 + $0xdc0] sm:$0xff]
    %v2090 = vld [vmem:[#allocation4 + $0xdc8] sm:$0xff]
    %v2091 = vld [vmem:[#allocation4 + $0xdd0] sm:$0xff]
    %v2092 = vld [vmem:[#allocation4 + $0xdd8] sm:$0xff]
    %v2093 = vld [vmem:[#allocation4 + $0xde0] sm:$0xff]
    %v2094 = vld [vmem:[#allocation4 + $0xde8] sm:$0xff]
    %v2095 = vld [vmem:[#allocation4 + $0xdf0] sm:$0xff]
    %v2096 = vld [vmem:[#allocation4 + $0xdf8] sm:$0xff]
    %s2097 = scalar_lea.vmem [#allocation8], 65
    %v2098 = vld [vmem:[%s2097] ss:$8 sm:$0xf]
    %v2099 = vld [vmem:[%s2097] ss:$8 sm:$0xf0]
    %v2100 = vor.u32 %v2098, %v2099
    %v2101 = vpack.c.bf16 %v1637, %v1637
    %v2102 = vpack.c.bf16 %v1638, %v1638
    %v2103 = vpack.c.bf16 %v1639, %v1639
    %v2104 = vpack.c.bf16 %v1640, %v1640
    %v2105 = vpack.c.bf16 %v1641, %v1641
    %v2106 = vpack.c.bf16 %v1642, %v1642
    %v2107 = vpack.c.bf16 %v1643, %v1643
    %v2108 = vpack.c.bf16 %v1644, %v1644
    %v2110 = vlaneseq
    %v2111 = vshrl.u32 %v2110, 7
    %v2112 = vsub.s32 0, %v2111
    %v2113 = vrot.slane %v2100, %v2112
    %v2114 = vlaneseq
    %v2115 = vshrl.u32 %v2114, 7
    %v2116 = vsub.s32 1, %v2115
    %v2117 = vrot.slane %v2100, %v2116
    %v2118 = vlaneseq
    %v2119 = vshrl.u32 %v2118, 7
    %v2120 = vsub.s32 2, %v2119
    %v2121 = vrot.slane %v2100, %v2120
    %v2122 = vlaneseq
    %v2123 = vshrl.u32 %v2122, 7
    %v2124 = vsub.s32 3, %v2123
    %v2125 = vrot.slane %v2100, %v2124
    %v2126 = vlaneseq
    %v2127 = vshrl.u32 %v2126, 7
    %v2128 = vsub.s32 4, %v2127
    %v2129 = vrot.slane %v2100, %v2128
    %v2130 = vlaneseq
    %v2131 = vshrl.u32 %v2130, 7
    %v2132 = vsub.s32 5, %v2131
    %v2133 = vrot.slane %v2100, %v2132
    %v2134 = vlaneseq
    %v2135 = vshrl.u32 %v2134, 7
    %v2136 = vsub.s32 6, %v2135
    %v2137 = vrot.slane %v2100, %v2136
    %2145 = vmatprep.subr.bf16.mxu0 %v1650
    %2146 = vmatpush1.bf16.msra.mxu0 %v1649
    %2147 = vmatprep.subr.bf16.mxu0 %v1657
    %2148 = vmatpush1.bf16.msra.mxu0 %v1656
    %2149 = vmatprep.subr.bf16.mxu0 %v1664
    %2150 = vmatpush1.bf16.msra.mxu0 %v1663
    %2151 = vmatprep.subr.bf16.mxu0 %v1671
    %2152 = vmatpush1.bf16.msra.mxu0 %v1670
    %2153 = vmatprep.subr.bf16.mxu0 %v1678
    %2154 = vmatpush1.bf16.msra.mxu0 %v1677
    %2155 = vmatprep.subr.bf16.mxu0 %v1685
    %2156 = vmatpush1.bf16.msra.mxu0 %v1684
    %2157 = vmatprep.subr.bf16.mxu0 %v1692
    %2158 = vmatpush1.bf16.msra.mxu0 %v1691
    %2159 = vmatprep.subr.bf16.mxu0 %v1699
    %2160 = vmatpush1.bf16.msra.mxu0 %v1698
    %2161 = vmatprep.subr.bf16.mxu0 %v1706
    %2162 = vmatpush1.bf16.msra.mxu0 %v1705
    %2163 = vmatprep.subr.bf16.mxu0 %v1713
    %2164 = vmatpush1.bf16.msra.mxu0 %v1712
    %2165 = vmatprep.subr.bf16.mxu0 %v1720
    %2166 = vmatpush1.bf16.msra.mxu0 %v1719
    %2167 = vmatprep.subr.bf16.mxu0 %v1727
    %2168 = vmatpush1.bf16.msra.mxu0 %v1726
    %2169 = vmatprep.subr.bf16.mxu0 %v1734
    %2170 = vmatpush1.bf16.msra.mxu0 %v1733
    %2171 = vmatprep.subr.bf16.mxu0 %v1741
    %2172 = vmatpush1.bf16.msra.mxu0 %v1740
    %2173 = vmatprep.subr.bf16.mxu0 %v1748
    %2174 = vmatpush1.bf16.msra.mxu0 %v1747
    %2175 = vmatprep.subr.bf16.mxu0 %v1755
    %2176 = vmatpush1.bf16.msra.mxu0 %v1754
    %2177 = vmatprep.mubr.bf16.mxu0 %v2102
    %2178 = vmatmul.mubr.bf16.gmra.mrb[0].mxu0 %v2101
    %v2179 = vpop.f32.mrb[0].mxu0
    %v2180 = vadd.f32 %v2113, %v2179
    %v2181 = vpop.f32.mrb[0].mxu0
    %v2182 = vadd.f32 %v2117, %v2181
    %v2183 = vpop.f32.mrb[0].mxu0
    %v2184 = vpop.f32.mrb[0].mxu0
    %2185 = vdwg.mxu0
    %2186 = vmatprep.subr.bf16.mxu0 %v1762
    %2187 = vmatpush1.bf16.msra.mxu0 %v1761
    %2188 = vmatprep.subr.bf16.mxu0 %v1769
    %2189 = vmatpush1.bf16.msra.mxu0 %v1768
    %2190 = vmatprep.subr.bf16.mxu0 %v1776
    %2191 = vmatpush1.bf16.msra.mxu0 %v1775
    %2192 = vmatprep.subr.bf16.mxu0 %v1783
    %2193 = vmatpush1.bf16.msra.mxu0 %v1782
    %2194 = vmatprep.subr.bf16.mxu0 %v1790
    %2195 = vmatpush1.bf16.msra.mxu0 %v1789
    %2196 = vmatprep.subr.bf16.mxu0 %v1797
    %2197 = vmatpush1.bf16.msra.mxu0 %v1796
    %2198 = vmatprep.subr.bf16.mxu0 %v1804
    %2199 = vmatpush1.bf16.msra.mxu0 %v1803
    %2200 = vmatprep.subr.bf16.mxu0 %v1811
    %2201 = vmatpush1.bf16.msra.mxu0 %v1810
    %2202 = vmatprep.subr.bf16.mxu0 %v1818
    %2203 = vmatpush1.bf16.msra.mxu0 %v1817
    %2204 = vmatprep.subr.bf16.mxu0 %v1825
    %2205 = vmatpush1.bf16.msra.mxu0 %v1824
    %2206 = vmatprep.subr.bf16.mxu0 %v1832
    %2207 = vmatpush1.bf16.msra.mxu0 %v1831
    %2208 = vmatprep.subr.bf16.mxu0 %v1839
    %2209 = vmatpush1.bf16.msra.mxu0 %v1838
    %2210 = vmatprep.subr.bf16.mxu0 %v1846
    %2211 = vmatpush1.bf16.msra.mxu0 %v1845
    %2212 = vmatprep.subr.bf16.mxu0 %v1853
    %2213 = vmatpush1.bf16.msra.mxu0 %v1852
    %2214 = vmatprep.subr.bf16.mxu0 %v1860
    %2215 = vmatpush1.bf16.msra.mxu0 %v1859
    %2216 = vmatprep.subr.bf16.mxu0 %v1867
    %2217 = vmatpush1.bf16.msra.mxu0 %v1866
    %2218 = vmatprep.mubr.bf16.mxu0 %v2104
    %2219 = vmatmul.mubr.bf16.gmra.mrb[0].mxu0 %v2103
    %v2220 = vpop.f32.mrb[0].mxu0
    %v2221 = vadd.f32 %v2180, %v2220
    %v2222 = vpop.f32.mrb[0].mxu0
    %v2223 = vadd.f32 %v2182, %v2222
    %v2224 = vpop.f32.mrb[0].mxu0
    %v2225 = vpop.f32.mrb[0].mxu0
    %2226 = vdwg.mxu0
    %2227 = vmatprep.subr.bf16.mxu0 %v1874
    %2228 = vmatpush1.bf16.msra.mxu0 %v1873
    %2229 = vmatprep.subr.bf16.mxu0 %v1881
    %2230 = vmatpush1.bf16.msra.mxu0 %v1880
    %2231 = vmatprep.subr.bf16.mxu0 %v1888
    %2232 = vmatpush1.bf16.msra.mxu0 %v1887
    %2233 = vmatprep.subr.bf16.mxu0 %v1895
    %2234 = vmatpush1.bf16.msra.mxu0 %v1894
    %2235 = vmatprep.subr.bf16.mxu0 %v1902
    %2236 = vmatpush1.bf16.msra.mxu0 %v1901
    %2237 = vmatprep.subr.bf16.mxu0 %v1909
    %2238 = vmatpush1.bf16.msra.mxu0 %v1908
    %2239 = vmatprep.subr.bf16.mxu0 %v1916
    %2240 = vmatpush1.bf16.msra.mxu0 %v1915
    %2241 = vmatprep.subr.bf16.mxu0 %v1923
    %2242 = vmatpush1.bf16.msra.mxu0 %v1922
    %2243 = vmatprep.subr.bf16.mxu0 %v1930
    %2244 = vmatpush1.bf16.msra.mxu0 %v1929
    %2245 = vmatprep.subr.bf16.mxu0 %v1937
    %2246 = vmatpush1.bf16.msra.mxu0 %v1936
    %2247 = vmatprep.subr.bf16.mxu0 %v1944
    %2248 = vmatpush1.bf16.msra.mxu0 %v1943
    %2249 = vmatprep.subr.bf16.mxu0 %v1951
    %2250 = vmatpush1.bf16.msra.mxu0 %v1950
    %2251 = vmatprep.subr.bf16.mxu0 %v1958
    %2252 = vmatpush1.bf16.msra.mxu0 %v1957
    %2253 = vmatprep.subr.bf16.mxu0 %v1965
    %2254 = vmatpush1.bf16.msra.mxu0 %v1964
    %2255 = vmatprep.subr.bf16.mxu0 %v1972
    %2256 = vmatpush1.bf16.msra.mxu0 %v1971
    %2257 = vmatprep.subr.bf16.mxu0 %v1979
    %2258 = vmatpush1.bf16.msra.mxu0 %v1978
    %2259 = vmatprep.mubr.bf16.mxu0 %v2106
    %2260 = vmatmul.mubr.bf16.gmra.mrb[0].mxu0 %v2105
    %v2261 = vpop.f32.mrb[0].mxu0
    %v2262 = vadd.f32 %v2221, %v2261
    %v2263 = vpop.f32.mrb[0].mxu0
    %v2264 = vadd.f32 %v2223, %v2263
    %v2265 = vpop.f32.mrb[0].mxu0
    %v2266 = vpop.f32.mrb[0].mxu0
    %2267 = vdwg.mxu0
    %2268 = vmatprep.subr.bf16.mxu0 %v1986
    %2269 = vmatpush1.bf16.msra.mxu0 %v1985
    %2270 = vmatprep.subr.bf16.mxu0 %v1993
    %2271 = vmatpush1.bf16.msra.mxu0 %v1992
    %2272 = vmatprep.subr.bf16.mxu0 %v2000
    %2273 = vmatpush1.bf16.msra.mxu0 %v1999
    %2274 = vmatprep.subr.bf16.mxu0 %v2007
    %2275 = vmatpush1.bf16.msra.mxu0 %v2006
    %2276 = vmatprep.subr.bf16.mxu0 %v2014
    %2277 = vmatpush1.bf16.msra.mxu0 %v2013
    %2278 = vmatprep.subr.bf16.mxu0 %v2021
    %2279 = vmatpush1.bf16.msra.mxu0 %v2020
    %2280 = vmatprep.subr.bf16.mxu0 %v2028
    %2281 = vmatpush1.bf16.msra.mxu0 %v2027
    %2282 = vmatprep.subr.bf16.mxu0 %v2035
    %2283 = vmatpush1.bf16.msra.mxu0 %v2034
    %2284 = vmatprep.subr.bf16.mxu0 %v2042
    %2285 = vmatpush1.bf16.msra.mxu0 %v2041
    %2286 = vmatprep.subr.bf16.mxu0 %v2049
    %2287 = vmatpush1.bf16.msra.mxu0 %v2048
    %2288 = vmatprep.subr.bf16.mxu0 %v2056
    %2289 = vmatpush1.bf16.msra.mxu0 %v2055
    %2290 = vmatprep.subr.bf16.mxu0 %v2063
    %2291 = vmatpush1.bf16.msra.mxu0 %v2062
    %2292 = vmatprep.subr.bf16.mxu0 %v2070
    %2293 = vmatpush1.bf16.msra.mxu0 %v2069
    %2294 = vmatprep.subr.bf16.mxu0 %v2077
    %2295 = vmatpush1.bf16.msra.mxu0 %v2076
    %2296 = vmatprep.subr.bf16.mxu0 %v2084
    %2297 = vmatpush1.bf16.msra.mxu0 %v2083
    %2298 = vmatprep.subr.bf16.mxu0 %v2091
    %2299 = vmatpush1.bf16.msra.mxu0 %v2090
    %2300 = vmatprep.mubr.bf16.mxu0 %v2108
    %2301 = vmatmul.mubr.bf16.gmra.mrb[0].mxu0 %v2107
    %v2302 = vpop.f32.mrb[0].mxu0
    %v2303 = vadd.f32 %v2262, %v2302
    %v2304 = vpop.f32.mrb[0].mxu0
    %v2305 = vadd.f32 %v2264, %v2304
    %v2306 = vpop.f32.mrb[0].mxu0
    %v2307 = vpop.f32.mrb[0].mxu0
    %2308 = vdwg.mxu0
    %2309 = vmatprep.subr.bf16.mxu0 %v1652
    %2310 = vmatpush1.bf16.msra.mxu0 %v1651
    %2311 = vmatprep.subr.bf16.mxu0 %v1659
    %2312 = vmatpush1.bf16.msra.mxu0 %v1658
    %2313 = vmatprep.subr.bf16.mxu0 %v1666
    %2314 = vmatpush1.bf16.msra.mxu0 %v1665
    %2315 = vmatprep.subr.bf16.mxu0 %v1673
    %2316 = vmatpush1.bf16.msra.mxu0 %v1672
    %2317 = vmatprep.subr.bf16.mxu0 %v1680
    %2318 = vmatpush1.bf16.msra.mxu0 %v1679
    %2319 = vmatprep.subr.bf16.mxu0 %v1687
    %2320 = vmatpush1.bf16.msra.mxu0 %v1686
    %2321 = vmatprep.subr.bf16.mxu0 %v1694
    %2322 = vmatpush1.bf16.msra.mxu0 %v1693
    %2323 = vmatprep.subr.bf16.mxu0 %v1701
    %2324 = vmatpush1.bf16.msra.mxu0 %v1700
    %2325 = vmatprep.subr.bf16.mxu0 %v1708
    %2326 = vmatpush1.bf16.msra.mxu0 %v1707
    %2327 = vmatprep.subr.bf16.mxu0 %v1715
    %2328 = vmatpush1.bf16.msra.mxu0 %v1714
    %2329 = vmatprep.subr.bf16.mxu0 %v1722
    %2330 = vmatpush1.bf16.msra.mxu0 %v1721
    %2331 = vmatprep.subr.bf16.mxu0 %v1729
    %2332 = vmatpush1.bf16.msra.mxu0 %v1728
    %2333 = vmatprep.subr.bf16.mxu0 %v1736
    %2334 = vmatpush1.bf16.msra.mxu0 %v1735
    %2335 = vmatprep.subr.bf16.mxu0 %v1743
    %2336 = vmatpush1.bf16.msra.mxu0 %v1742
    %2337 = vmatprep.subr.bf16.mxu0 %v1750
    %2338 = vmatpush1.bf16.msra.mxu0 %v1749
    %2339 = vmatprep.subr.bf16.mxu0 %v1757
    %2340 = vmatpush1.bf16.msra.mxu0 %v1756
    %2341 = vmatprep.mubr.bf16.mxu0 %v2102
    %2342 = vmatmul.mubr.bf16.gmra.mrb[0].mxu0 %v2101
    %v2343 = vpop.f32.mrb[0].mxu0
    %v2344 = vadd.f32 %v2121, %v2343
    %v2345 = vpop.f32.mrb[0].mxu0
    %v2346 = vadd.f32 %v2125, %v2345
    %v2347 = vpop.f32.mrb[0].mxu0
    %v2348 = vpop.f32.mrb[0].mxu0
    %2349 = vdwg.mxu0
    %2350 = vmatprep.subr.bf16.mxu0 %v1764
    %2351 = vmatpush1.bf16.msra.mxu0 %v1763
    %2352 = vmatprep.subr.bf16.mxu0 %v1771
    %2353 = vmatpush1.bf16.msra.mxu0 %v1770
    %2354 = vmatprep.subr.bf16.mxu0 %v1778
    %2355 = vmatpush1.bf16.msra.mxu0 %v1777
    %2356 = vmatprep.subr.bf16.mxu0 %v1785
    %2357 = vmatpush1.bf16.msra.mxu0 %v1784
    %2358 = vmatprep.subr.bf16.mxu0 %v1792
    %2359 = vmatpush1.bf16.msra.mxu0 %v1791
    %2360 = vmatprep.subr.bf16.mxu0 %v1799
    %2361 = vmatpush1.bf16.msra.mxu0 %v1798
    %2362 = vmatprep.subr.bf16.mxu0 %v1806
    %2363 = vmatpush1.bf16.msra.mxu0 %v1805
    %2364 = vmatprep.subr.bf16.mxu0 %v1813
    %2365 = vmatpush1.bf16.msra.mxu0 %v1812
    %2366 = vmatprep.subr.bf16.mxu0 %v1820
    %2367 = vmatpush1.bf16.msra.mxu0 %v1819
    %2368 = vmatprep.subr.bf16.mxu0 %v1827
    %2369 = vmatpush1.bf16.msra.mxu0 %v1826
    %2370 = vmatprep.subr.bf16.mxu0 %v1834
    %2371 = vmatpush1.bf16.msra.mxu0 %v1833
    %2372 = vmatprep.subr.bf16.mxu0 %v1841
    %2373 = vmatpush1.bf16.msra.mxu0 %v1840
    %2374 = vmatprep.subr.bf16.mxu0 %v1848
    %2375 = vmatpush1.bf16.msra.mxu0 %v1847
    %2376 = vmatprep.subr.bf16.mxu0 %v1855
    %2377 = vmatpush1.bf16.msra.mxu0 %v1854
    %2378 = vmatprep.subr.bf16.mxu0 %v1862
    %2379 = vmatpush1.bf16.msra.mxu0 %v1861
    %2380 = vmatprep.subr.bf16.mxu0 %v1869
    %2381 = vmatpush1.bf16.msra.mxu0 %v1868
    %2382 = vmatprep.mubr.bf16.mxu0 %v2104
    %2383 = vmatmul.mubr.bf16.gmra.mrb[0].mxu0 %v2103
    %v2384 = vpop.f32.mrb[0].mxu0
    %v2385 = vadd.f32 %v2344, %v2384
    %v2386 = vpop.f32.mrb[0].mxu0
    %v2387 = vadd.f32 %v2346, %v2386
    %v2388 = vpop.f32.mrb[0].mxu0
    %v2389 = vpop.f32.mrb[0].mxu0
    %2390 = vdwg.mxu0
    %2391 = vmatprep.subr.bf16.mxu0 %v1876
    %2392 = vmatpush1.bf16.msra.mxu0 %v1875
    %2393 = vmatprep.subr.bf16.mxu0 %v1883
    %2394 = vmatpush1.bf16.msra.mxu0 %v1882
    %2395 = vmatprep.subr.bf16.mxu0 %v1890
    %2396 = vmatpush1.bf16.msra.mxu0 %v1889
    %2397 = vmatprep.subr.bf16.mxu0 %v1897
    %2398 = vmatpush1.bf16.msra.mxu0 %v1896
    %2399 = vmatprep.subr.bf16.mxu0 %v1904
    %2400 = vmatpush1.bf16.msra.mxu0 %v1903
    %2401 = vmatprep.subr.bf16.mxu0 %v1911
    %2402 = vmatpush1.bf16.msra.mxu0 %v1910
    %2403 = vmatprep.subr.bf16.mxu0 %v1918
    %2404 = vmatpush1.bf16.msra.mxu0 %v1917
    %2405 = vmatprep.subr.bf16.mxu0 %v1925
    %2406 = vmatpush1.bf16.msra.mxu0 %v1924
    %2407 = vmatprep.subr.bf16.mxu0 %v1932
    %2408 = vmatpush1.bf16.msra.mxu0 %v1931
    %2409 = vmatprep.subr.bf16.mxu0 %v1939
    %2410 = vmatpush1.bf16.msra.mxu0 %v1938
    %2411 = vmatprep.subr.bf16.mxu0 %v1946
    %2412 = vmatpush1.bf16.msra.mxu0 %v1945
    %2413 = vmatprep.subr.bf16.mxu0 %v1953
    %2414 = vmatpush1.bf16.msra.mxu0 %v1952
    %2415 = vmatprep.subr.bf16.mxu0 %v1960
    %2416 = vmatpush1.bf16.msra.mxu0 %v1959
    %2417 = vmatprep.subr.bf16.mxu0 %v1967
    %2418 = vmatpush1.bf16.msra.mxu0 %v1966
    %2419 = vmatprep.subr.bf16.mxu0 %v1974
    %2420 = vmatpush1.bf16.msra.mxu0 %v1973
    %2421 = vmatprep.subr.bf16.mxu0 %v1981
    %2422 = vmatpush1.bf16.msra.mxu0 %v1980
    %2423 = vmatprep.mubr.bf16.mxu0 %v2106
    %2424 = vmatmul.mubr.bf16.gmra.mrb[0].mxu0 %v2105
    %v2425 = vpop.f32.mrb[0].mxu0
    %v2426 = vadd.f32 %v2385, %v2425
    %v2427 = vpop.f32.mrb[0].mxu0
    %v2428 = vadd.f32 %v2387, %v2427
    %v2429 = vpop.f32.mrb[0].mxu0
    %v2430 = vpop.f32.mrb[0].mxu0
    %2431 = vdwg.mxu0
    %2432 = vmatprep.subr.bf16.mxu0 %v1988
    %2433 = vmatpush1.bf16.msra.mxu0 %v1987
    %2434 = vmatprep.subr.bf16.mxu0 %v1995
    %2435 = vmatpush1.bf16.msra.mxu0 %v1994
    %2436 = vmatprep.subr.bf16.mxu0 %v2002
    %2437 = vmatpush1.bf16.msra.mxu0 %v2001
    %2438 = vmatprep.subr.bf16.mxu0 %v2009
    %2439 = vmatpush1.bf16.msra.mxu0 %v2008
    %2440 = vmatprep.subr.bf16.mxu0 %v2016
    %2441 = vmatpush1.bf16.msra.mxu0 %v2015
    %2442 = vmatprep.subr.bf16.mxu0 %v2023
    %2443 = vmatpush1.bf16.msra.mxu0 %v2022
    %2444 = vmatprep.subr.bf16.mxu0 %v2030
    %2445 = vmatpush1.bf16.msra.mxu0 %v2029
    %2446 = vmatprep.subr.bf16.mxu0 %v2037
    %2447 = vmatpush1.bf16.msra.mxu0 %v2036
    %2448 = vmatprep.subr.bf16.mxu0 %v2044
    %2449 = vmatpush1.bf16.msra.mxu0 %v2043
    %2450 = vmatprep.subr.bf16.mxu0 %v2051
    %2451 = vmatpush1.bf16.msra.mxu0 %v2050
    %2452 = vmatprep.subr.bf16.mxu0 %v2058
    %2453 = vmatpush1.bf16.msra.mxu0 %v2057
    %2454 = vmatprep.subr.bf16.mxu0 %v2065
    %2455 = vmatpush1.bf16.msra.mxu0 %v2064
    %2456 = vmatprep.subr.bf16.mxu0 %v2072
    %2457 = vmatpush1.bf16.msra.mxu0 %v2071
    %2458 = vmatprep.subr.bf16.mxu0 %v2079
    %2459 = vmatpush1.bf16.msra.mxu0 %v2078
    %2460 = vmatprep.subr.bf16.mxu0 %v2086
    %2461 = vmatpush1.bf16.msra.mxu0 %v2085
    %2462 = vmatprep.subr.bf16.mxu0 %v2093
    %2463 = vmatpush1.bf16.msra.mxu0 %v2092
    %2464 = vmatprep.mubr.bf16.mxu0 %v2108
    %2465 = vmatmul.mubr.bf16.gmra.mrb[0].mxu0 %v2107
    %v2466 = vpop.f32.mrb[0].mxu0
    %v2467 = vadd.f32 %v2426, %v2466
    %v2468 = vpop.f32.mrb[0].mxu0
    %v2469 = vadd.f32 %v2428, %v2468
    %v2470 = vpop.f32.mrb[0].mxu0
    %v2471 = vpop.f32.mrb[0].mxu0
    %2472 = vdwg.mxu0
    %2473 = vmatprep.subr.bf16.mxu0 %v1654
    %2474 = vmatpush1.bf16.msra.mxu0 %v1653
    %2475 = vmatprep.subr.bf16.mxu0 %v1661
    %2476 = vmatpush1.bf16.msra.mxu0 %v1660
    %2477 = vmatprep.subr.bf16.mxu0 %v1668
    %2478 = vmatpush1.bf16.msra.mxu0 %v1667
    %2479 = vmatprep.subr.bf16.mxu0 %v1675
    %2480 = vmatpush1.bf16.msra.mxu0 %v1674
    %2481 = vmatprep.subr.bf16.mxu0 %v1682
    %2482 = vmatpush1.bf16.msra.mxu0 %v1681
    %2483 = vmatprep.subr.bf16.mxu0 %v1689
    %2484 = vmatpush1.bf16.msra.mxu0 %v1688
    %2485 = vmatprep.subr.bf16.mxu0 %v1696
    %2486 = vmatpush1.bf16.msra.mxu0 %v1695
    %2487 = vmatprep.subr.bf16.mxu0 %v1703
    %2488 = vmatpush1.bf16.msra.mxu0 %v1702
    %2489 = vmatprep.subr.bf16.mxu0 %v1710
    %2490 = vmatpush1.bf16.msra.mxu0 %v1709
    %2491 = vmatprep.subr.bf16.mxu0 %v1717
    %2492 = vmatpush1.bf16.msra.mxu0 %v1716
    %2493 = vmatprep.subr.bf16.mxu0 %v1724
    %2494 = vmatpush1.bf16.msra.mxu0 %v1723
    %2495 = vmatprep.subr.bf16.mxu0 %v1731
    %2496 = vmatpush1.bf16.msra.mxu0 %v1730
    %2497 = vmatprep.subr.bf16.mxu0 %v1738
    %2498 = vmatpush1.bf16.msra.mxu0 %v1737
    %2499 = vmatprep.subr.bf16.mxu0 %v1745
    %2500 = vmatpush1.bf16.msra.mxu0 %v1744
    %2501 = vmatprep.subr.bf16.mxu0 %v1752
    %2502 = vmatpush1.bf16.msra.mxu0 %v1751
    %2503 = vmatprep.subr.bf16.mxu0 %v1759
    %2504 = vmatpush1.bf16.msra.mxu0 %v1758
    %2505 = vmatprep.mubr.bf16.mxu0 %v2102
    %2506 = vmatmul.mubr.bf16.gmra.mrb[0].mxu0 %v2101
    %v2507 = vpop.f32.mrb[0].mxu0
    %v2508 = vadd.f32 %v2129, %v2507
    %v2509 = vpop.f32.mrb[0].mxu0
    %v2510 = vadd.f32 %v2133, %v2509
    %v2511 = vpop.f32.mrb[0].mxu0
    %v2512 = vpop.f32.mrb[0].mxu0
    %2513 = vdwg.mxu0
    %2514 = vmatprep.subr.bf16.mxu0 %v1766
    %2515 = vmatpush1.bf16.msra.mxu0 %v1765
    %2516 = vmatprep.subr.bf16.mxu0 %v1773
    %2517 = vmatpush1.bf16.msra.mxu0 %v1772
    %2518 = vmatprep.subr.bf16.mxu0 %v1780
    %2519 = vmatpush1.bf16.msra.mxu0 %v1779
    %2520 = vmatprep.subr.bf16.mxu0 %v1787
    %2521 = vmatpush1.bf16.msra.mxu0 %v1786
    %2522 = vmatprep.subr.bf16.mxu0 %v1794
    %2523 = vmatpush1.bf16.msra.mxu0 %v1793
    %2524 = vmatprep.subr.bf16.mxu0 %v1801
    %2525 = vmatpush1.bf16.msra.mxu0 %v1800
    %2526 = vmatprep.subr.bf16.mxu0 %v1808
    %2527 = vmatpush1.bf16.msra.mxu0 %v1807
    %2528 = vmatprep.subr.bf16.mxu0 %v1815
    %2529 = vmatpush1.bf16.msra.mxu0 %v1814
    %2530 = vmatprep.subr.bf16.mxu0 %v1822
    %2531 = vmatpush1.bf16.msra.mxu0 %v1821
    %2532 = vmatprep.subr.bf16.mxu0 %v1829
    %2533 = vmatpush1.bf16.msra.mxu0 %v1828
    %2534 = vmatprep.subr.bf16.mxu0 %v1836
    %2535 = vmatpush1.bf16.msra.mxu0 %v1835
    %2536 = vmatprep.subr.bf16.mxu0 %v1843
    %2537 = vmatpush1.bf16.msra.mxu0 %v1842
    %2538 = vmatprep.subr.bf16.mxu0 %v1850
    %2539 = vmatpush1.bf16.msra.mxu0 %v1849
    %2540 = vmatprep.subr.bf16.mxu0 %v1857
    %2541 = vmatpush1.bf16.msra.mxu0 %v1856
    %2542 = vmatprep.subr.bf16.mxu0 %v1864
    %2543 = vmatpush1.bf16.msra.mxu0 %v1863
    %2544 = vmatprep.subr.bf16.mxu0 %v1871
    %2545 = vmatpush1.bf16.msra.mxu0 %v1870
    %2546 = vmatprep.mubr.bf16.mxu0 %v2104
    %2547 = vmatmul.mubr.bf16.gmra.mrb[0].mxu0 %v2103
    %v2548 = vpop.f32.mrb[0].mxu0
    %v2549 = vadd.f32 %v2508, %v2548
    %v2550 = vpop.f32.mrb[0].mxu0
    %v2551 = vadd.f32 %v2510, %v2550
    %v2552 = vpop.f32.mrb[0].mxu0
    %v2553 = vpop.f32.mrb[0].mxu0
    %2554 = vdwg.mxu0
    %2555 = vmatprep.subr.bf16.mxu0 %v1878
    %2556 = vmatpush1.bf16.msra.mxu0 %v1877
    %2557 = vmatprep.subr.bf16.mxu0 %v1885
    %2558 = vmatpush1.bf16.msra.mxu0 %v1884
    %2559 = vmatprep.subr.bf16.mxu0 %v1892
    %2560 = vmatpush1.bf16.msra.mxu0 %v1891
    %2561 = vmatprep.subr.bf16.mxu0 %v1899
    %2562 = vmatpush1.bf16.msra.mxu0 %v1898
    %2563 = vmatprep.subr.bf16.mxu0 %v1906
    %2564 = vmatpush1.bf16.msra.mxu0 %v1905
    %2565 = vmatprep.subr.bf16.mxu0 %v1913
    %2566 = vmatpush1.bf16.msra.mxu0 %v1912
    %2567 = vmatprep.subr.bf16.mxu0 %v1920
    %2568 = vmatpush1.bf16.msra.mxu0 %v1919
    %2569 = vmatprep.subr.bf16.mxu0 %v1927
    %2570 = vmatpush1.bf16.msra.mxu0 %v1926
    %2571 = vmatprep.subr.bf16.mxu0 %v1934
    %2572 = vmatpush1.bf16.msra.mxu0 %v1933
    %2573 = vmatprep.subr.bf16.mxu0 %v1941
    %2574 = vmatpush1.bf16.msra.mxu0 %v1940
    %2575 = vmatprep.subr.bf16.mxu0 %v1948
    %2576 = vmatpush1.bf16.msra.mxu0 %v1947
    %2577 = vmatprep.subr.bf16.mxu0 %v1955
    %2578 = vmatpush1.bf16.msra.mxu0 %v1954
    %2579 = vmatprep.subr.bf16.mxu0 %v1962
    %2580 = vmatpush1.bf16.msra.mxu0 %v1961
    %2581 = vmatprep.subr.bf16.mxu0 %v1969
    %2582 = vmatpush1.bf16.msra.mxu0 %v1968
    %2583 = vmatprep.subr.bf16.mxu0 %v1976
    %2584 = vmatpush1.bf16.msra.mxu0 %v1975
    %2585 = vmatprep.subr.bf16.mxu0 %v1983
    %2586 = vmatpush1.bf16.msra.mxu0 %v1982
    %2587 = vmatprep.mubr.bf16.mxu0 %v2106
    %2588 = vmatmul.mubr.bf16.gmra.mrb[0].mxu0 %v2105
    %v2589 = vpop.f32.mrb[0].mxu0
    %v2590 = vadd.f32 %v2549, %v2589
    %v2591 = vpop.f32.mrb[0].mxu0
    %v2592 = vadd.f32 %v2551, %v2591
    %v2593 = vpop.f32.mrb[0].mxu0
    %v2594 = vpop.f32.mrb[0].mxu0
    %2595 = vdwg.mxu0
    %2596 = vmatprep.subr.bf16.mxu0 %v1990
    %2597 = vmatpush1.bf16.msra.mxu0 %v1989
    %2598 = vmatprep.subr.bf16.mxu0 %v1997
    %2599 = vmatpush1.bf16.msra.mxu0 %v1996
    %2600 = vmatprep.subr.bf16.mxu0 %v2004
    %2601 = vmatpush1.bf16.msra.mxu0 %v2003
    %2602 = vmatprep.subr.bf16.mxu0 %v2011
    %2603 = vmatpush1.bf16.msra.mxu0 %v2010
    %2604 = vmatprep.subr.bf16.mxu0 %v2018
    %2605 = vmatpush1.bf16.msra.mxu0 %v2017
    %2606 = vmatprep.subr.bf16.mxu0 %v2025
    %2607 = vmatpush1.bf16.msra.mxu0 %v2024
    %2608 = vmatprep.subr.bf16.mxu0 %v2032
    %2609 = vmatpush1.bf16.msra.mxu0 %v2031
    %2610 = vmatprep.subr.bf16.mxu0 %v2039
    %2611 = vmatpush1.bf16.msra.mxu0 %v2038
    %2612 = vmatprep.subr.bf16.mxu0 %v2046
    %2613 = vmatpush1.bf16.msra.mxu0 %v2045
    %2614 = vmatprep.subr.bf16.mxu0 %v2053
    %2615 = vmatpush1.bf16.msra.mxu0 %v2052
    %2616 = vmatprep.subr.bf16.mxu0 %v2060
    %2617 = vmatpush1.bf16.msra.mxu0 %v2059
    %2618 = vmatprep.subr.bf16.mxu0 %v2067
    %2619 = vmatpush1.bf16.msra.mxu0 %v2066
    %2620 = vmatprep.subr.bf16.mxu0 %v2074
    %2621 = vmatpush1.bf16.msra.mxu0 %v2073
    %2622 = vmatprep.subr.bf16.mxu0 %v2081
    %2623 = vmatpush1.bf16.msra.mxu0 %v2080
    %2624 = vmatprep.subr.bf16.mxu0 %v2088
    %2625 = vmatpush1.bf16.msra.mxu0 %v2087
    %2626 = vmatprep.subr.bf16.mxu0 %v2095
    %2627 = vmatpush1.bf16.msra.mxu0 %v2094
    %2628 = vmatprep.mubr.bf16.mxu0 %v2108
    %2629 = vmatmul.mubr.bf16.gmra.mrb[0].mxu0 %v2107
    %v2630 = vpop.f32.mrb[0].mxu0
    %v2631 = vadd.f32 %v2590, %v2630
    %v2632 = vpop.f32.mrb[0].mxu0
    %v2633 = vadd.f32 %v2592, %v2632
    %v2634 = vpop.f32.mrb[0].mxu0
    %v2635 = vpop.f32.mrb[0].mxu0
    %2636 = vdwg.mxu0
    %2637 = vmatprep.subr.bf16.mxu0 0
    %2638 = vmatpush1.bf16.msra.mxu0 %v1655
    %2639 = vmatprep.subr.bf16.mxu0 0
    %2640 = vmatpush1.bf16.msra.mxu0 %v1662
    %2641 = vmatprep.subr.bf16.mxu0 0
    %2642 = vmatpush1.bf16.msra.mxu0 %v1669
    %2643 = vmatprep.subr.bf16.mxu0 0
    %2644 = vmatpush1.bf16.msra.mxu0 %v1676
    %2645 = vmatprep.subr.bf16.mxu0 0
    %2646 = vmatpush1.bf16.msra.mxu0 %v1683
    %2647 = vmatprep.subr.bf16.mxu0 0
    %2648 = vmatpush1.bf16.msra.mxu0 %v1690
    %2649 = vmatprep.subr.bf16.mxu0 0
    %2650 = vmatpush1.bf16.msra.mxu0 %v1697
    %2651 = vmatprep.subr.bf16.mxu0 0
    %2652 = vmatpush1.bf16.msra.mxu0 %v1704
    %2653 = vmatprep.subr.bf16.mxu0 0
    %2654 = vmatpush1.bf16.msra.mxu0 %v1711
    %2655 = vmatprep.subr.bf16.mxu0 0
    %2656 = vmatpush1.bf16.msra.mxu0 %v1718
    %2657 = vmatprep.subr.bf16.mxu0 0
    %2658 = vmatpush1.bf16.msra.mxu0 %v1725
    %2659 = vmatprep.subr.bf16.mxu0 0
    %2660 = vmatpush1.bf16.msra.mxu0 %v1732
    %2661 = vmatprep.subr.bf16.mxu0 0
    %2662 = vmatpush1.bf16.msra.mxu0 %v1739
    %2663 = vmatprep.subr.bf16.mxu0 0
    %2664 = vmatpush1.bf16.msra.mxu0 %v1746
    %2665 = vmatprep.subr.bf16.mxu0 0
    %2666 = vmatpush1.bf16.msra.mxu0 %v1753
    %2667 = vmatprep.subr.bf16.mxu0 0
    %2668 = vmatpush1.bf16.msra.mxu0 %v1760
    %2669 = vmatprep.mubr.bf16.mxu0 %v2102
    %2670 = vmatmul.mubr.bf16.gmra.mrb[0].mxu0 %v2101
    %v2671 = vpop.f32.mrb[0].mxu0
    %v2672 = vadd.f32 %v2137, %v2671
    %v2673 = vpop.f32.mrb[0].mxu0
    %v2674 = vpop.f32.mrb[0].mxu0
    %v2675 = vpop.f32.mrb[0].mxu0
    %2676 = vdwg.mxu0
    %2677 = vmatprep.subr.bf16.mxu0 0
    %2678 = vmatpush1.bf16.msra.mxu0 %v1767
    %2679 = vmatprep.subr.bf16.mxu0 0
    %2680 = vmatpush1.bf16.msra.mxu0 %v1774
    %2681 = vmatprep.subr.bf16.mxu0 0
    %2682 = vmatpush1.bf16.msra.mxu0 %v1781
    %2683 = vmatprep.subr.bf16.mxu0 0
    %2684 = vmatpush1.bf16.msra.mxu0 %v1788
    %2685 = vmatprep.subr.bf16.mxu0 0
    %2686 = vmatpush1.bf16.msra.mxu0 %v1795
    %2687 = vmatprep.subr.bf16.mxu0 0
    %2688 = vmatpush1.bf16.msra.mxu0 %v1802
    %2689 = vmatprep.subr.bf16.mxu0 0
    %2690 = vmatpush1.bf16.msra.mxu0 %v1809
    %2691 = vmatprep.subr.bf16.mxu0 0
    %2692 = vmatpush1.bf16.msra.mxu0 %v1816
    %2693 = vmatprep.subr.bf16.mxu0 0
    %2694 = vmatpush1.bf16.msra.mxu0 %v1823
    %2695 = vmatprep.subr.bf16.mxu0 0
    %2696 = vmatpush1.bf16.msra.mxu0 %v1830
    %2697 = vmatprep.subr.bf16.mxu0 0
    %2698 = vmatpush1.bf16.msra.mxu0 %v1837
    %2699 = vmatprep.subr.bf16.mxu0 0
    %2700 = vmatpush1.bf16.msra.mxu0 %v1844
    %2701 = vmatprep.subr.bf16.mxu0 0
    %2702 = vmatpush1.bf16.msra.mxu0 %v1851
    %2703 = vmatprep.subr.bf16.mxu0 0
    %2704 = vmatpush1.bf16.msra.mxu0 %v1858
    %2705 = vmatprep.subr.bf16.mxu0 0
    %2706 = vmatpush1.bf16.msra.mxu0 %v1865
    %2707 = vmatprep.subr.bf16.mxu0 0
    %2708 = vmatpush1.bf16.msra.mxu0 %v1872
    %2709 = vmatprep.mubr.bf16.mxu0 %v2104
    %2710 = vmatmul.mubr.bf16.gmra.mrb[0].mxu0 %v2103
    %v2711 = vpop.f32.mrb[0].mxu0
    %v2712 = vadd.f32 %v2672, %v2711
    %v2713 = vpop.f32.mrb[0].mxu0
    %v2714 = vpop.f32.mrb[0].mxu0
    %v2715 = vpop.f32.mrb[0].mxu0
    %2716 = vdwg.mxu0
    %2717 = vmatprep.subr.bf16.mxu0 0
    %2718 = vmatpush1.bf16.msra.mxu0 %v1879
    %2719 = vmatprep.subr.bf16.mxu0 0
    %2720 = vmatpush1.bf16.msra.mxu0 %v1886
    %2721 = vmatprep.subr.bf16.mxu0 0
    %2722 = vmatpush1.bf16.msra.mxu0 %v1893
    %2723 = vmatprep.subr.bf16.mxu0 0
    %2724 = vmatpush1.bf16.msra.mxu0 %v1900
    %2725 = vmatprep.subr.bf16.mxu0 0
    %2726 = vmatpush1.bf16.msra.mxu0 %v1907
    %2727 = vmatprep.subr.bf16.mxu0 0
    %2728 = vmatpush1.bf16.msra.mxu0 %v1914
    %2729 = vmatprep.subr.bf16.mxu0 0
    %2730 = vmatpush1.bf16.msra.mxu0 %v1921
    %2731 = vmatprep.subr.bf16.mxu0 0
    %2732 = vmatpush1.bf16.msra.mxu0 %v1928
    %2733 = vmatprep.subr.bf16.mxu0 0
    %2734 = vmatpush1.bf16.msra.mxu0 %v1935
    %2735 = vmatprep.subr.bf16.mxu0 0
    %2736 = vmatpush1.bf16.msra.mxu0 %v1942
    %2737 = vmatprep.subr.bf16.mxu0 0
    %2738 = vmatpush1.bf16.msra.mxu0 %v1949
    %2739 = vmatprep.subr.bf16.mxu0 0
    %2740 = vmatpush1.bf16.msra.mxu0 %v1956
    %2741 = vmatprep.subr.bf16.mxu0 0
    %2742 = vmatpush1.bf16.msra.mxu0 %v1963
    %2743 = vmatprep.subr.bf16.mxu0 0
    %2744 = vmatpush1.bf16.msra.mxu0 %v1970
    %2745 = vmatprep.subr.bf16.mxu0 0
    %2746 = vmatpush1.bf16.msra.mxu0 %v1977
    %2747 = vmatprep.subr.bf16.mxu0 0
    %2748 = vmatpush1.bf16.msra.mxu0 %v1984
    %2749 = vmatprep.mubr.bf16.mxu0 %v2106
    %2750 = vmatmul.mubr.bf16.gmra.mrb[0].mxu0 %v2105
    %v2751 = vpop.f32.mrb[0].mxu0
    %v2752 = vadd.f32 %v2712, %v2751
    %v2753 = vpop.f32.mrb[0].mxu0
    %v2754 = vpop.f32.mrb[0].mxu0
    %v2755 = vpop.f32.mrb[0].mxu0
    %2756 = vdwg.mxu0
    %2757 = vmatprep.subr.bf16.mxu0 0
    %2758 = vmatpush1.bf16.msra.mxu0 %v1991
    %2759 = vmatprep.subr.bf16.mxu0 0
    %2760 = vmatpush1.bf16.msra.mxu0 %v1998
    %2761 = vmatprep.subr.bf16.mxu0 0
    %2762 = vmatpush1.bf16.msra.mxu0 %v2005
    %2763 = vmatprep.subr.bf16.mxu0 0
    %2764 = vmatpush1.bf16.msra.mxu0 %v2012
    %2765 = vmatprep.subr.bf16.mxu0 0
    %2766 = vmatpush1.bf16.msra.mxu0 %v2019
    %2767 = vmatprep.subr.bf16.mxu0 0
    %2768 = vmatpush1.bf16.msra.mxu0 %v2026
    %2769 = vmatprep.subr.bf16.mxu0 0
    %2770 = vmatpush1.bf16.msra.mxu0 %v2033
    %2771 = vmatprep.subr.bf16.mxu0 0
    %2772 = vmatpush1.bf16.msra.mxu0 %v2040
    %2773 = vmatprep.subr.bf16.mxu0 0
    %2774 = vmatpush1.bf16.msra.mxu0 %v2047
    %2775 = vmatprep.subr.bf16.mxu0 0
    %2776 = vmatpush1.bf16.msra.mxu0 %v2054
    %2777 = vmatprep.subr.bf16.mxu0 0
    %2778 = vmatpush1.bf16.msra.mxu0 %v2061
    %2779 = vmatprep.subr.bf16.mxu0 0
    %2780 = vmatpush1.bf16.msra.mxu0 %v2068
    %2781 = vmatprep.subr.bf16.mxu0 0
    %2782 = vmatpush1.bf16.msra.mxu0 %v2075
    %2783 = vmatprep.subr.bf16.mxu0 0
    %2784 = vmatpush1.bf16.msra.mxu0 %v2082
    %2785 = vmatprep.subr.bf16.mxu0 0
    %2786 = vmatpush1.bf16.msra.mxu0 %v2089
    %2787 = vmatprep.subr.bf16.mxu0 0
    %2788 = vmatpush1.bf16.msra.mxu0 %v2096
    %2789 = vmatprep.mubr.bf16.mxu0 %v2108
    %2790 = vmatmul.mubr.bf16.gmra.mrb[0].mxu0 %v2107
    %v2791 = vpop.f32.mrb[0].mxu0
    %v2792 = vadd.f32 %v2752, %v2791
    %v2793 = vpop.f32.mrb[0].mxu0
    %v2794 = vpop.f32.mrb[0].mxu0
    %v2795 = vpop.f32.mrb[0].mxu0
    %2796 = vdwg.mxu0
    %v2797 = vtanh.pop %v2303
    %v2798 = vtanh.pop %v2305
    %v2799 = vtanh.pop %v2467
    %v2800 = vtanh.pop %v2469
    %v2801 = vtanh.pop %v2631
    %v2802 = vtanh.pop %v2633
    %v2803 = vtanh.pop %v2792
    %2804 = vst [vmem:[%s6] sm:$0xff] %v2797
    %2805 = vst [vmem:[%s6 + $0x8] sm:$0xff] %v2798
    %2806 = vst [vmem:[%s6 + $0x10] sm:$0xff] %v2799
    %2807 = vst [vmem:[%s6 + $0x18] sm:$0xff] %v2800
    %2808 = vst [vmem:[%s6 + $0x20] sm:$0xff] %v2801
    %2809 = vst [vmem:[%s6 + $0x28] sm:$0xff] %v2802
    %2810 = vst [vmem:[%s6 + $0x30] sm:$0xff] %v2803
    // Predicated region
    $region22: #{generator_forward.1} parent=1 // pred_check
      _
    $region23: #{generator_forward.1} parent=1 // pred_check_branch
      %2812 = sbr.rel (0) target = $region25
    $region24: #{generator_forward.1} parent=1 // pred_region
      _
    $region25: #{generator_forward.1} parent=1 // pred_fallthru
      _
    // Predicated region
    $region26: #{generator_forward.1} parent=1 // pred_check
      _
    $region27: #{generator_forward.1} parent=1 // pred_check_branch
      %2814 = sbr.rel (0) target = $region29
    $region28: #{generator_forward.1} parent=1 // pred_region
      _
    $region29: #{generator_forward.1} parent=1 // pred_fallthru
      _
    %2815 = vsyncpa [#allocation7], 1
    %2816 = vsyncpa [#allocation9], 1
  %2817 = vsyncmov [#allocation5]
  %s2818 = vpop.sfrf %2817
  %p2819 = scmp.eq.s32.totalorder %s2818, 0
  %p2820 = pneg %p2819
  %2822 = shalt.err (%p2820)
  %s2823 = scalar_lea.sflag [#allocation5], 1
  %2824 = vsyncmov %s2823
  %s2825 = vpop.sfrf %2824
  %p2826 = scmp.eq.s32.totalorder %s2825, 0
  %p2827 = pneg %p2826
  %2829 = shalt.err (%p2827)
  %s2830 = scalar_lea.sflag [#allocation5], 2
  %2831 = vsyncmov %s2830
  %s2832 = vpop.sfrf %2831
  %p2833 = scmp.eq.s32.totalorder %s2832, 0
  %p2834 = pneg %p2833
  %2836 = shalt.err (%p2834)

</llo_original>
